<compile_context>
chip_gen: v7x
topology: tpu7x:2x2x1
jax: 0.10.0
libtpu: 0.0.40
codegen_flags: <defaults>
</compile_context>

<pallas_src>
import functools
import math

import jax
import jax.numpy as jnp
from jax.experimental import pallas as pl
from jax.experimental.pallas import tpu as pltpu


def _round_up(v, m):
    return ((v + m - 1) // m) * m


def _num_tensorcores():
    """2 on v7x-class parts (two TensorCores share the 'parallel' grid axis)."""
    try:
        kind = jax.devices()[0].device_kind.lower()
    except Exception:
        return 1
    return 2 if ("v7" in kind or "7x" in kind) else 1


def _vmem_limit_bytes():
    """Explicit scoped-VMEM limit: raise v5e/v6e defaults, stay below v7x physical."""
    try:
        kind = jax.devices()[0].device_kind.lower()
    except Exception:
        return None
    for old in ("v2", "v3"):
        if old in kind:
            return None          # tiny-VMEM generations: keep the compiler default
    return 48 << 20              # < 64 MiB (v7x physical), > 16/32 MiB scoped defaults


# ---------------------------------------------------------------------------
# Pallas kernel: one grid step processes a block of BW windows (BW*N token rows).
# ---------------------------------------------------------------------------
def _window_attention_kernel(
    x_ref,      # (rows, C)     bf16 token rows for BW windows
    wqkv_ref,   # (C, 3C)       fused QKV weights (Q cols pre-scaled), bf16
    bqkv_ref,   # (1, 3C)       fused QKV bias (Q part pre-scaled), f32
    wproj_ref,  # (C, Cp)       output projection, cols zero-padded to Cp, bf16
    bproj_ref,  # (1, Cp)       output projection bias (zero-padded), f32
    bias_ref,   # (nH, N, N)    relative position bias per head, f32
    o_ref,      # (rows, Cp)    output token rows (lane-dense)
    qkv_sc,     # (rows, 3C)    f32 VMEM scratch: fused QKV activations
    oh_sc,      # (rows, C)     f32 VMEM scratch: per-head attention outputs
    *,
    num_heads,
    head_dim,
    n_tok,
    block_windows,
):
    rows = block_windows * n_tok
    c = num_heads * head_dim

    # Fused QKV projection: one full-lane-width (rows, C) @ (C, 3C) MXU matmul,
    # f32 accumulation, bias added in f32, result parked in a VMEM scratch.
    qkv_sc[...] = (
        jnp.dot(x_ref[...], wqkv_ref[...], preferred_element_type=jnp.float32)
        + bqkv_ref[...]
    )

    def head_body(h, carry):
        if isinstance(h, int):                       # statically unrolled path
            qo = h * head_dim
            ko = c + h * head_dim
            vo = 2 * c + h * head_dim
        else:                                        # fori_loop path (traced h)
            qo = pl.multiple_of(h * head_dim, head_dim)
            ko = pl.multiple_of(c + h * head_dim, head_dim)
            vo = pl.multiple_of(2 * c + h * head_dim, head_dim)

        q = qkv_sc[:, pl.ds(qo, head_dim)].reshape(block_windows, n_tok, head_dim)
        k = qkv_sc[:, pl.ds(ko, head_dim)].reshape(block_windows, n_tok, head_dim)
        v = qkv_sc[:, pl.ds(vo, head_dim)].reshape(block_windows, n_tok, head_dim)

        # attention logits (softmax scale already folded into Q) + rel-pos bias
        attn = jnp.einsum("bqd,bkd->bqk",
                          q.astype(jnp.bfloat16), k.astype(jnp.bfloat16),
                          preferred_element_type=jnp.float32)        # (BW, N, N)
        attn = attn + bias_ref[h]                                    # bcast over BW

        # numerically stable softmax, all f32 (VPU / EUP)
        attn = attn - jnp.max(attn, axis=-1, keepdims=True)
        attn = jnp.exp(attn)
        attn = attn * pl.reciprocal(jnp.sum(attn, axis=-1, keepdims=True),
                                    approx=True)

        oh = jnp.einsum("bqk,bkd->bqd",
                        attn.astype(jnp.bfloat16), v.astype(jnp.bfloat16),
                        preferred_element_type=jnp.float32)          # (BW, N, hd)

        # Stash this head's output at its channel offset; the single fused
        # output-projection matmul below is identical to concat(heads) @ Wproj.
        oh_sc[:, pl.ds(qo, head_dim)] = oh.reshape(rows, head_dim)
        return carry

    if num_heads >= 8:
        jax.lax.fori_loop(0, num_heads, head_body, jnp.int32(0), unroll=2)
    else:
        for h in range(num_heads):
            head_body(h, 0)

    # Fused output projection: one full-depth (K = C) matmul, lane-dense store.
    y = jnp.dot(oh_sc[...].astype(jnp.bfloat16), wproj_ref[...],
                preferred_element_type=jnp.float32)
    o_ref[...] = (y + bproj_ref[...]).astype(o_ref.dtype)


# ---------------------------------------------------------------------------
# Block-size heuristic with explicit VMEM accounting.
# ---------------------------------------------------------------------------
def _pick_block_windows(b_total, n_tok, c, c_pad, num_heads, out_itemsize,
                        vmem_budget=24 << 20):
    lane_c = _round_up(c, 128)
    lane_3c = _round_up(3 * c, 128)
    lane_n = _round_up(n_tok, 128)
    lane_cp = _round_up(c_pad, 128)

    # Grid-invariant residents (single-buffered whole-array VMEM operands).
    fixed = (c * lane_3c * 2                    # wqkv, bf16
             + c * lane_cp * 2                  # wproj, bf16
             + 8 * (lane_3c + lane_cp) * 4      # biases, f32 (sublane-padded)
             + num_heads * n_tok * lane_n * 4)  # rel-pos bias, f32

    # Per-window bytes per grid step (narrow dims lane-padded to 128).
    per_win = n_tok * (
        lane_c * 2 * 2                 # bf16 x block, double-buffered
        + lane_cp * out_itemsize * 2   # output block, double-buffered
        + lane_3c * 4                  # fused-QKV f32 scratch
        + lane_c * 4                   # per-head-output f32 scratch
        + 128 * (2 * 3 + 4 + 2)        # q/k/v bf16 + oh f32/bf16 temps (hd padded)
        + lane_n * 4 * 2               # attention logits + exp, f32
        + (lane_c + lane_cp) * 2       # bf16 operands of the two big matmuls
        + lane_cp * 4                  # f32 projected output before the store
    )

    avail = max(vmem_budget - fixed, per_win)
    bw = max(1, min(int(avail // per_win), 512, b_total))

    # bf16 x block: rows_block must be a multiple of 16 (f32 out block: 8).
    step = 16 // math.gcd(n_tok, 16)

    if _num_tensorcores() >= 2 and b_total > step:
        # v7x: both TensorCores share the 'parallel' grid axis -> keep the number
        # of grid steps even so neither core idles on a tail step.
        nb = -(-b_total // bw)
        if nb % 2:
            nb += 1
        bw = min(bw, -(-b_total // nb))

    bw = max(step, (bw // step) * step)
    return int(bw)


# ---------------------------------------------------------------------------
# One-time parameter preparation (weight fusion, scale fold, bias gather).
# ---------------------------------------------------------------------------
def prepare_params(params, window_size, num_heads):
    wqkv = params["wqkv"].astype(jnp.float32)      # (C, 3C), cols = [Q | K | V]
    bqkv = params["bqkv"].astype(jnp.float32)      # (3C,)
    wproj = params["wproj"].astype(jnp.float32)    # (C, C)
    bproj = params["bproj"].astype(jnp.float32)    # (C,)
    C = wqkv.shape[0]
    hd = C // num_heads
    scale = hd ** (-0.5)
    N = window_size[0] * window_size[1]
    c_pad = _round_up(C, 128)                      # lane-dense output width

    # Fold the softmax scale into the Q columns / bias (q @ k.T * scale).
    wqkv = wqkv.at[:, :C].multiply(scale)
    bqkv = bqkv.at[:C].multiply(scale)

    # Zero-pad the output-projection columns so the kernel writes a lane-dense
    # (rows, c_pad) slab (no masked partial stores when C < 128).
    wproj_p = jnp.zeros((C, c_pad), jnp.float32).at[:, :C].set(wproj)
    bproj_p = jnp.zeros((1, c_pad), jnp.float32).at[0, :C].set(bproj)

    # Relative-position-bias gather done once here, not per forward call.
    rel_index = _relative_position_index(window_size)                  # (N, N)
    bias = params["rel_pos_bias_table"][rel_index.reshape(-1)]
    bias = bias.reshape(N, N, num_heads).transpose(2, 0, 1)            # (nH, N, N)

    return {
        "wqkv": wqkv.astype(jnp.bfloat16),
        "bqkv": bqkv.reshape(1, 3 * C).astype(jnp.float32),
        "wproj": wproj_p.astype(jnp.bfloat16),
        "bproj": bproj_p.astype(jnp.float32),
        "bias": bias.astype(jnp.float32),
        "num_heads": num_heads,
        "head_dim": hd,
        "n_tok": N,
        "c_pad": int(c_pad),
    }


# ---------------------------------------------------------------------------
# Wrapper
# ---------------------------------------------------------------------------
def window_attention_pallas(x, prepared, block_windows=None):
    """x: (B_, N, C).  prepared: output of prepare_params()."""
    B_, N, C = x.shape
    num_heads = prepared["num_heads"]
    head_dim = prepared["head_dim"]
    c_pad = prepared["c_pad"]
    assert N == prepared["n_tok"] and C == num_heads * head_dim

    out_dtype = x.dtype
    bw = block_windows if block_windows is not None else _pick_block_windows(
        B_, N, C, c_pad, num_heads, jnp.dtype(out_dtype).itemsize)
    pad_w = (-B_) % bw
    num_blocks = (B_ + pad_w) // bw
    rows_block = bw * N
    total_rows = num_blocks * rows_block

    # Flatten windows into token rows; bf16 activation I/O; pad to whole blocks.
    x2 = x.reshape(B_ * N, C).astype(jnp.bfloat16)
    if pad_w:
        x2 = jnp.pad(x2, ((0, pad_w * N), (0, 0)))

    kernel = functools.partial(
        _window_attention_kernel,
        num_heads=num_heads,
        head_dim=head_dim,
        n_tok=N,
        block_windows=bw,
    )

    # Grid-invariant operands: whole array resident in VMEM, single-buffered.
    vmem_whole = pl.BlockSpec(memory_space=pltpu.MemorySpace.VMEM)

    cp_kwargs = dict(dimension_semantics=("parallel",))
    limit = _vmem_limit_bytes()
    if limit is not None:
        cp_kwargs["vmem_limit_bytes"] = limit

    out2 = pl.pallas_call(
        kernel,
        out_shape=jax.ShapeDtypeStruct((total_rows, c_pad), out_dtype),
        grid_spec=pltpu.PrefetchScalarGridSpec(
            num_scalar_prefetch=0,
            grid=(num_blocks,),
            in_specs=[
                pl.BlockSpec((rows_block, C), lambda i: (i, 0)),   # x rows (bf16)
                vmem_whole,                                        # wqkv
                vmem_whole,                                        # bqkv
                vmem_whole,                                        # wproj (padded)
                vmem_whole,                                        # bproj (padded)
                vmem_whole,                                        # rel-pos bias
            ],
            out_specs=pl.BlockSpec((rows_block, c_pad), lambda i: (i, 0)),
            scratch_shapes=[
                pltpu.VMEM((rows_block, 3 * C), jnp.float32),      # fused QKV
                pltpu.VMEM((rows_block, C), jnp.float32),          # per-head outs
            ],
        ),
        compiler_params=pltpu.CompilerParams(**cp_kwargs),
    )(
        x2,
        prepared["wqkv"], prepared["bqkv"],
        prepared["wproj"], prepared["bproj"],
        prepared["bias"],
    )

    return out2[: B_ * N, :C].reshape(B_, N, C)


# ---------------------------------------------------------------------------
# Parameter init + relative position index (mirrors the PyTorch __init__)
# ---------------------------------------------------------------------------
def _relative_position_index(window_size):
    wh, ww = window_size
    coords_h = jnp.arange(wh)
    coords_w = jnp.arange(ww)
    coords = jnp.stack(jnp.meshgrid(coords_h, coords_w, indexing="ij"))  # (2, wh, ww)
    coords_flat = coords.reshape(2, -1)                                  # (2, N)
    rel = coords_flat[:, :, None] - coords_flat[:, None, :]              # (2, N, N)
    rel = rel.transpose(1, 2, 0)                                         # (N, N, 2)
    rel = rel.at[:, :, 0].add(wh - 1)
    rel = rel.at[:, :, 1].add(ww - 1)
    rel = rel.at[:, :, 0].multiply(2 * ww - 1)
    return rel.sum(-1)                                                   # (N, N)


def init_params(key, dim, window_size, num_heads):
    wh, ww = window_size
    k1, k2, k3, k4, k5 = jax.random.split(key, 5)
    table_len = (2 * wh - 1) * (2 * ww - 1)
    return {
        # trunc_normal std=0.02 ~ approximated with normal*0.02
        "rel_pos_bias_table": 0.02 * jax.random.normal(k1, (table_len, num_heads), jnp.float32),
        "wqkv": 0.05 * jax.random.normal(k2, (dim, 3 * dim), jnp.float32),
        "bqkv": 0.05 * jax.random.normal(k3, (3 * dim,), jnp.float32),
        "wproj": 0.05 * jax.random.normal(k4, (dim, dim), jnp.float32),
        "bproj": 0.05 * jax.random.normal(k5, (dim,), jnp.float32),
    }


# ---------------------------------------------------------------------------
# Pure-JAX reference (same math as the PyTorch forward, mask=None, f32)
# ---------------------------------------------------------------------------
def window_attention_ref(x, params, window_size, num_heads):
    B_, N, C = x.shape
    hd = C // num_heads
    scale = hd ** (-0.5)
    qkv = x @ params["wqkv"] + params["bqkv"]                     # (B_, N, 3C)
    qkv = qkv.reshape(B_, N, 3, num_heads, hd).transpose(2, 0, 3, 1, 4)
    q, k, v = qkv[0], qkv[1], qkv[2]                              # (B_, nH, N, hd)
    attn = jnp.einsum("bhnd,bhmd->bhnm", q, k) * scale
    rel_index = _relative_position_index(window_size)
    bias = params["rel_pos_bias_table"][rel_index.reshape(-1)].reshape(N, N, num_heads)
    bias = bias.transpose(2, 0, 1)                                # (nH, N, N)
    attn = attn + bias[None]
    attn = jax.nn.softmax(attn, axis=-1)
    out = jnp.einsum("bhnm,bhmd->bhnd", attn, v)                  # (B_, nH, N, hd)
    out = out.transpose(0, 2, 1, 3).reshape(B_, N, C)
    return out @ params["wproj"] + params["bproj"]


# ---------------------------------------------------------------------------
if __name__ == "__main__":
    dim = 32
    window_size = (4, 4)       # N = 16
    num_heads = 4
    B_ = 8                     # number of windows

    N = window_size[0] * window_size[1]
    key = jax.random.PRNGKey(0)
    kx, kp = jax.random.split(key)
    x = jax.random.normal(kx, (B_, N, dim), jnp.float32)
    params = init_params(kp, dim, window_size, num_heads)

    prepared = prepare_params(params, window_size, num_heads)     # one-time prep
    out = window_attention_pallas(x, prepared)
    out = jax.block_until_ready(out)

    ref = window_attention_ref(x, params, window_size, num_heads)
    assert out.shape == (B_, N, dim)
    # bf16 matmul operands + approx reciprocal -> loosened tolerance vs f32 reference
    assert jnp.allclose(out, ref, atol=2e-2, rtol=2e-2), "mismatch vs JAX reference"

    print("KERNEL_OK")
</pallas_src>

<mosaic_0001>
module attributes {stable_mosaic.version = 11 : i64} {
  func.func @_window_attention_kernel(%arg0: i32, %arg1: memref<128x32xbf16, #tpu.memory_space<vmem>>, %arg2: memref<32x96xbf16, #tpu.memory_space<vmem>>, %arg3: memref<1x96xf32, #tpu.memory_space<vmem>>, %arg4: memref<32x128xbf16, #tpu.memory_space<vmem>>, %arg5: memref<1x128xf32, #tpu.memory_space<vmem>>, %arg6: memref<4x16x16xf32, #tpu.memory_space<vmem>>, %arg7: memref<128x128xf32, #tpu.memory_space<vmem>>, %arg8: memref<128x96xf32, #tpu.memory_space<vmem>>, %arg9: memref<128x32xf32, #tpu.memory_space<vmem>>) attributes {dimension_semantics = [#tpu.dimension_semantics<parallel>], iteration_bounds = array<i64: 1>, scalar_prefetch = 0 : i64, scratch_operands = 2 : i64, tpu.core_type = #tpu.core_type<tc>, window_params = [{transform_indices = @transform_0, window_bounds = array<i64: 128, 32>}, {pipeline_mode = #tpu.pipeline_mode<synchronous>, transform_indices = @transform_1, window_bounds = array<i64: 32, 96>}, {pipeline_mode = #tpu.pipeline_mode<synchronous>, transform_indices = @transform_2, window_bounds = array<i64: 1, 96>}, {pipeline_mode = #tpu.pipeline_mode<synchronous>, transform_indices = @transform_3, window_bounds = array<i64: 32, 128>}, {pipeline_mode = #tpu.pipeline_mode<synchronous>, transform_indices = @transform_4, window_bounds = array<i64: 1, 128>}, {pipeline_mode = #tpu.pipeline_mode<synchronous>, transform_indices = @transform_5, window_bounds = array<i64: 4, 16, 16>}, {transform_indices = @transform_6, window_bounds = array<i64: 128, 128>}]} {
    %c0 = arith.constant 0 : index
    %c0_0 = arith.constant 0 : index
    %0 = vector.load %arg1[%c0, %c0_0] : memref<128x32xbf16, #tpu.memory_space<vmem>>, vector<128x32xbf16>
    %c0_1 = arith.constant 0 : index
    %c0_2 = arith.constant 0 : index
    %1 = vector.load %arg2[%c0_1, %c0_2] : memref<32x96xbf16, #tpu.memory_space<vmem>>, vector<32x96xbf16>
    %cst = arith.constant dense<0.000000e+00> : vector<128x96xf32>
    %2 = tpu.matmul %0, %1, %cst {dimension_numbers = #tpu.dot_dimension_numbers<[1], [0], [0], [1], [0, 0, 1, 1], [], []>} : vector<128x32xbf16>, vector<32x96xbf16>, vector<128x96xf32> -> vector<128x96xf32>
    %c0_3 = arith.constant 0 : index
    %c0_4 = arith.constant 0 : index
    %3 = vector.load %arg3[%c0_3, %c0_4] : memref<1x96xf32, #tpu.memory_space<vmem>>, vector<1x96xf32>
    %4 = vector.broadcast %3 : vector<1x96xf32> to vector<128x96xf32>
    %5 = arith.addf %2, %4 : vector<128x96xf32>
    %c0_5 = arith.constant 0 : index
    %c0_6 = arith.constant 0 : index
    %6 = vector.load %arg8[%c0_5, %c0_6] : memref<128x96xf32, #tpu.memory_space<vmem>>, vector<128x96xf32>
    tpu.vector_store %arg8[%c0_5, %c0_6], %5 {strides = array<i32>} : memref<128x96xf32, #tpu.memory_space<vmem>>, vector<128x96xf32>,
    %c0_7 = arith.constant 0 : index
    %c0_8 = arith.constant 0 : index
    %7 = vector.load %arg8[%c0_7, %c0_8] : memref<128x96xf32, #tpu.memory_space<vmem>>, vector<128x8xf32>
    %8 = vector.shape_cast %7 : vector<128x8xf32> to vector<8x16x8xf32>
    %c0_9 = arith.constant 0 : index
    %c32 = arith.constant 32 : index
    %9 = vector.load %arg8[%c0_9, %c32] : memref<128x96xf32, #tpu.memory_space<vmem>>, vector<128x8xf32>
    %10 = vector.shape_cast %9 : vector<128x8xf32> to vector<8x16x8xf32>
    %c0_10 = arith.constant 0 : index
    %c64 = arith.constant 64 : index
    %11 = vector.load %arg8[%c0_10, %c64] : memref<128x96xf32, #tpu.memory_space<vmem>>, vector<128x8xf32>
    %12 = vector.shape_cast %11 : vector<128x8xf32> to vector<8x16x8xf32>
    %13 = arith.truncf %8 : vector<8x16x8xf32> to vector<8x16x8xbf16>
    %14 = arith.truncf %10 : vector<8x16x8xf32> to vector<8x16x8xbf16>
    "tpu.trace_start"() <{level = 10 : i32, message = "bqd,bkd->bqk"}> : () -> ()
    %cst_11 = arith.constant dense<0.000000e+00> : vector<8x16x16xf32>
    %15 = tpu.matmul %13, %14, %cst_11 {dimension_numbers = #tpu.dot_dimension_numbers<[2], [2], [1], [1], [0, 0, 0, 1, 1, 1], [0], [0]>} : vector<8x16x8xbf16>, vector<8x16x8xbf16>, vector<8x16x16xf32> -> vector<8x16x16xf32>
    "tpu.trace_stop"() : () -> ()
    %c0_12 = arith.constant 0 : index
    %c0_13 = arith.constant 0 : index
    %c0_14 = arith.constant 0 : index
    %16 = vector.load %arg6[%c0_12, %c0_13, %c0_14] : memref<4x16x16xf32, #tpu.memory_space<vmem>>, vector<1x16x16xf32>
    %17 = vector.shape_cast %16 : vector<1x16x16xf32> to vector<16x16xf32>
    %18 = vector.shape_cast %17 : vector<16x16xf32> to vector<1x16x16xf32>
    %19 = vector.broadcast %18 : vector<1x16x16xf32> to vector<8x16x16xf32>
    %20 = arith.addf %15, %19 : vector<8x16x16xf32>
    %cst_15 = arith.constant dense<0xFF800000> : vector<8x16xf32>
    %21 = vector.multi_reduction <maximumf>, %20, %cst_15 [2] : vector<8x16x16xf32> to vector<8x16xf32>
    %22 = vector.shape_cast %21 : vector<8x16xf32> to vector<8x16x1xf32>
    %23 = vector.broadcast %22 : vector<8x16x1xf32> to vector<8x16x16xf32>
    %24 = arith.subf %20, %23 : vector<8x16x16xf32>
    %25 = math.exp %24 : vector<8x16x16xf32>
    %cst_16 = arith.constant dense<0.000000e+00> : vector<8x16xf32>
    %26 = vector.multi_reduction <add>, %25, %cst_16 [2] : vector<8x16x16xf32> to vector<8x16xf32>
    %27 = vector.shape_cast %26 : vector<8x16xf32> to vector<8x16x1xf32>
    %28 = tpu.reciprocal %27 {approx = true} : vector<8x16x1xf32> -> vector<8x16x1xf32>
    %29 = vector.broadcast %28 : vector<8x16x1xf32> to vector<8x16x16xf32>
    %30 = arith.mulf %25, %29 : vector<8x16x16xf32>
    %31 = arith.truncf %30 : vector<8x16x16xf32> to vector<8x16x16xbf16>
    %32 = arith.truncf %12 : vector<8x16x8xf32> to vector<8x16x8xbf16>
    "tpu.trace_start"() <{level = 10 : i32, message = "bqk,bkd->bqd"}> : () -> ()
    %cst_17 = arith.constant dense<0.000000e+00> : vector<8x16x8xf32>
    %33 = tpu.matmul %31, %32, %cst_17 {dimension_numbers = #tpu.dot_dimension_numbers<[2], [1], [1], [2], [0, 0, 0, 1, 1, 2], [0], [0]>} : vector<8x16x16xbf16>, vector<8x16x8xbf16>, vector<8x16x8xf32> -> vector<8x16x8xf32>
    "tpu.trace_stop"() : () -> ()
    %34 = vector.shape_cast %33 : vector<8x16x8xf32> to vector<128x8xf32>
    %c0_18 = arith.constant 0 : index
    %c0_19 = arith.constant 0 : index
    %35 = vector.load %arg9[%c0_18, %c0_19] : memref<128x32xf32, #tpu.memory_space<vmem>>, vector<128x8xf32>
    tpu.vector_store %arg9[%c0_18, %c0_19], %34 {strides = array<i32>} : memref<128x32xf32, #tpu.memory_space<vmem>>, vector<128x8xf32>,
    %c0_20 = arith.constant 0 : index
    %c8 = arith.constant 8 : index
    %36 = vector.load %arg8[%c0_20, %c8] : memref<128x96xf32, #tpu.memory_space<vmem>>, vector<128x8xf32>
    %37 = vector.shape_cast %36 : vector<128x8xf32> to vector<8x16x8xf32>
    %c0_21 = arith.constant 0 : index
    %c40 = arith.constant 40 : index
    %38 = vector.load %arg8[%c0_21, %c40] : memref<128x96xf32, #tpu.memory_space<vmem>>, vector<128x8xf32>
    %39 = vector.shape_cast %38 : vector<128x8xf32> to vector<8x16x8xf32>
    %c0_22 = arith.constant 0 : index
    %c72 = arith.constant 72 : index
    %40 = vector.load %arg8[%c0_22, %c72] : memref<128x96xf32, #tpu.memory_space<vmem>>, vector<128x8xf32>
    %41 = vector.shape_cast %40 : vector<128x8xf32> to vector<8x16x8xf32>
    %42 = arith.truncf %37 : vector<8x16x8xf32> to vector<8x16x8xbf16>
    %43 = arith.truncf %39 : vector<8x16x8xf32> to vector<8x16x8xbf16>
    "tpu.trace_start"() <{level = 10 : i32, message = "bqd,bkd->bqk"}> : () -> ()
    %cst_23 = arith.constant dense<0.000000e+00> : vector<8x16x16xf32>
    %44 = tpu.matmul %42, %43, %cst_23 {dimension_numbers = #tpu.dot_dimension_numbers<[2], [2], [1], [1], [0, 0, 0, 1, 1, 1], [0], [0]>} : vector<8x16x8xbf16>, vector<8x16x8xbf16>, vector<8x16x16xf32> -> vector<8x16x16xf32>
    "tpu.trace_stop"() : () -> ()
    %c1 = arith.constant 1 : index
    %c0_24 = arith.constant 0 : index
    %c0_25 = arith.constant 0 : index
    %45 = vector.load %arg6[%c1, %c0_24, %c0_25] : memref<4x16x16xf32, #tpu.memory_space<vmem>>, vector<1x16x16xf32>
    %46 = vector.shape_cast %45 : vector<1x16x16xf32> to vector<16x16xf32>
    %47 = vector.shape_cast %46 : vector<16x16xf32> to vector<1x16x16xf32>
    %48 = vector.broadcast %47 : vector<1x16x16xf32> to vector<8x16x16xf32>
    %49 = arith.addf %44, %48 : vector<8x16x16xf32>
    %cst_26 = arith.constant dense<0xFF800000> : vector<8x16xf32>
    %50 = vector.multi_reduction <maximumf>, %49, %cst_26 [2] : vector<8x16x16xf32> to vector<8x16xf32>
    %51 = vector.shape_cast %50 : vector<8x16xf32> to vector<8x16x1xf32>
    %52 = vector.broadcast %51 : vector<8x16x1xf32> to vector<8x16x16xf32>
    %53 = arith.subf %49, %52 : vector<8x16x16xf32>
    %54 = math.exp %53 : vector<8x16x16xf32>
    %cst_27 = arith.constant dense<0.000000e+00> : vector<8x16xf32>
    %55 = vector.multi_reduction <add>, %54, %cst_27 [2] : vector<8x16x16xf32> to vector<8x16xf32>
    %56 = vector.shape_cast %55 : vector<8x16xf32> to vector<8x16x1xf32>
    %57 = tpu.reciprocal %56 {approx = true} : vector<8x16x1xf32> -> vector<8x16x1xf32>
    %58 = vector.broadcast %57 : vector<8x16x1xf32> to vector<8x16x16xf32>
    %59 = arith.mulf %54, %58 : vector<8x16x16xf32>
    %60 = arith.truncf %59 : vector<8x16x16xf32> to vector<8x16x16xbf16>
    %61 = arith.truncf %41 : vector<8x16x8xf32> to vector<8x16x8xbf16>
    "tpu.trace_start"() <{level = 10 : i32, message = "bqk,bkd->bqd"}> : () -> ()
    %cst_28 = arith.constant dense<0.000000e+00> : vector<8x16x8xf32>
    %62 = tpu.matmul %60, %61, %cst_28 {dimension_numbers = #tpu.dot_dimension_numbers<[2], [1], [1], [2], [0, 0, 0, 1, 1, 2], [0], [0]>} : vector<8x16x16xbf16>, vector<8x16x8xbf16>, vector<8x16x8xf32> -> vector<8x16x8xf32>
    "tpu.trace_stop"() : () -> ()
    %63 = vector.shape_cast %62 : vector<8x16x8xf32> to vector<128x8xf32>
    %c0_29 = arith.constant 0 : index
    %c8_30 = arith.constant 8 : index
    %64 = vector.load %arg9[%c0_29, %c8_30] : memref<128x32xf32, #tpu.memory_space<vmem>>, vector<128x8xf32>
    tpu.vector_store %arg9[%c0_29, %c8_30], %63 {strides = array<i32>} : memref<128x32xf32, #tpu.memory_space<vmem>>, vector<128x8xf32>,
    %c0_31 = arith.constant 0 : index
    %c16 = arith.constant 16 : index
    %65 = vector.load %arg8[%c0_31, %c16] : memref<128x96xf32, #tpu.memory_space<vmem>>, vector<128x8xf32>
    %66 = vector.shape_cast %65 : vector<128x8xf32> to vector<8x16x8xf32>
    %c0_32 = arith.constant 0 : index
    %c48 = arith.constant 48 : index
    %67 = vector.load %arg8[%c0_32, %c48] : memref<128x96xf32, #tpu.memory_space<vmem>>, vector<128x8xf32>
    %68 = vector.shape_cast %67 : vector<128x8xf32> to vector<8x16x8xf32>
    %c0_33 = arith.constant 0 : index
    %c80 = arith.constant 80 : index
    %69 = vector.load %arg8[%c0_33, %c80] : memref<128x96xf32, #tpu.memory_space<vmem>>, vector<128x8xf32>
    %70 = vector.shape_cast %69 : vector<128x8xf32> to vector<8x16x8xf32>
    %71 = arith.truncf %66 : vector<8x16x8xf32> to vector<8x16x8xbf16>
    %72 = arith.truncf %68 : vector<8x16x8xf32> to vector<8x16x8xbf16>
    "tpu.trace_start"() <{level = 10 : i32, message = "bqd,bkd->bqk"}> : () -> ()
    %cst_34 = arith.constant dense<0.000000e+00> : vector<8x16x16xf32>
    %73 = tpu.matmul %71, %72, %cst_34 {dimension_numbers = #tpu.dot_dimension_numbers<[2], [2], [1], [1], [0, 0, 0, 1, 1, 1], [0], [0]>} : vector<8x16x8xbf16>, vector<8x16x8xbf16>, vector<8x16x16xf32> -> vector<8x16x16xf32>
    "tpu.trace_stop"() : () -> ()
    %c2 = arith.constant 2 : index
    %c0_35 = arith.constant 0 : index
    %c0_36 = arith.constant 0 : index
    %74 = vector.load %arg6[%c2, %c0_35, %c0_36] : memref<4x16x16xf32, #tpu.memory_space<vmem>>, vector<1x16x16xf32>
    %75 = vector.shape_cast %74 : vector<1x16x16xf32> to vector<16x16xf32>
    %76 = vector.shape_cast %75 : vector<16x16xf32> to vector<1x16x16xf32>
    %77 = vector.broadcast %76 : vector<1x16x16xf32> to vector<8x16x16xf32>
    %78 = arith.addf %73, %77 : vector<8x16x16xf32>
    %cst_37 = arith.constant dense<0xFF800000> : vector<8x16xf32>
    %79 = vector.multi_reduction <maximumf>, %78, %cst_37 [2] : vector<8x16x16xf32> to vector<8x16xf32>
    %80 = vector.shape_cast %79 : vector<8x16xf32> to vector<8x16x1xf32>
    %81 = vector.broadcast %80 : vector<8x16x1xf32> to vector<8x16x16xf32>
    %82 = arith.subf %78, %81 : vector<8x16x16xf32>
    %83 = math.exp %82 : vector<8x16x16xf32>
    %cst_38 = arith.constant dense<0.000000e+00> : vector<8x16xf32>
    %84 = vector.multi_reduction <add>, %83, %cst_38 [2] : vector<8x16x16xf32> to vector<8x16xf32>
    %85 = vector.shape_cast %84 : vector<8x16xf32> to vector<8x16x1xf32>
    %86 = tpu.reciprocal %85 {approx = true} : vector<8x16x1xf32> -> vector<8x16x1xf32>
    %87 = vector.broadcast %86 : vector<8x16x1xf32> to vector<8x16x16xf32>
    %88 = arith.mulf %83, %87 : vector<8x16x16xf32>
    %89 = arith.truncf %88 : vector<8x16x16xf32> to vector<8x16x16xbf16>
    %90 = arith.truncf %70 : vector<8x16x8xf32> to vector<8x16x8xbf16>
    "tpu.trace_start"() <{level = 10 : i32, message = "bqk,bkd->bqd"}> : () -> ()
    %cst_39 = arith.constant dense<0.000000e+00> : vector<8x16x8xf32>
    %91 = tpu.matmul %89, %90, %cst_39 {dimension_numbers = #tpu.dot_dimension_numbers<[2], [1], [1], [2], [0, 0, 0, 1, 1, 2], [0], [0]>} : vector<8x16x16xbf16>, vector<8x16x8xbf16>, vector<8x16x8xf32> -> vector<8x16x8xf32>
    "tpu.trace_stop"() : () -> ()
    %92 = vector.shape_cast %91 : vector<8x16x8xf32> to vector<128x8xf32>
    %c0_40 = arith.constant 0 : index
    %c16_41 = arith.constant 16 : index
    %93 = vector.load %arg9[%c0_40, %c16_41] : memref<128x32xf32, #tpu.memory_space<vmem>>, vector<128x8xf32>
    tpu.vector_store %arg9[%c0_40, %c16_41], %92 {strides = array<i32>} : memref<128x32xf32, #tpu.memory_space<vmem>>, vector<128x8xf32>,
    %c0_42 = arith.constant 0 : index
    %c24 = arith.constant 24 : index
    %94 = vector.load %arg8[%c0_42, %c24] : memref<128x96xf32, #tpu.memory_space<vmem>>, vector<128x8xf32>
    %95 = vector.shape_cast %94 : vector<128x8xf32> to vector<8x16x8xf32>
    %c0_43 = arith.constant 0 : index
    %c56 = arith.constant 56 : index
    %96 = vector.load %arg8[%c0_43, %c56] : memref<128x96xf32, #tpu.memory_space<vmem>>, vector<128x8xf32>
    %97 = vector.shape_cast %96 : vector<128x8xf32> to vector<8x16x8xf32>
    %c0_44 = arith.constant 0 : index
    %c88 = arith.constant 88 : index
    %98 = vector.load %arg8[%c0_44, %c88] : memref<128x96xf32, #tpu.memory_space<vmem>>, vector<128x8xf32>
    %99 = vector.shape_cast %98 : vector<128x8xf32> to vector<8x16x8xf32>
    %100 = arith.truncf %95 : vector<8x16x8xf32> to vector<8x16x8xbf16>
    %101 = arith.truncf %97 : vector<8x16x8xf32> to vector<8x16x8xbf16>
    "tpu.trace_start"() <{level = 10 : i32, message = "bqd,bkd->bqk"}> : () -> ()
    %cst_45 = arith.constant dense<0.000000e+00> : vector<8x16x16xf32>
    %102 = tpu.matmul %100, %101, %cst_45 {dimension_numbers = #tpu.dot_dimension_numbers<[2], [2], [1], [1], [0, 0, 0, 1, 1, 1], [0], [0]>} : vector<8x16x8xbf16>, vector<8x16x8xbf16>, vector<8x16x16xf32> -> vector<8x16x16xf32>
    "tpu.trace_stop"() : () -> ()
    %c3 = arith.constant 3 : index
    %c0_46 = arith.constant 0 : index
    %c0_47 = arith.constant 0 : index
    %103 = vector.load %arg6[%c3, %c0_46, %c0_47] : memref<4x16x16xf32, #tpu.memory_space<vmem>>, vector<1x16x16xf32>
    %104 = vector.shape_cast %103 : vector<1x16x16xf32> to vector<16x16xf32>
    %105 = vector.shape_cast %104 : vector<16x16xf32> to vector<1x16x16xf32>
    %106 = vector.broadcast %105 : vector<1x16x16xf32> to vector<8x16x16xf32>
    %107 = arith.addf %102, %106 : vector<8x16x16xf32>
    %cst_48 = arith.constant dense<0xFF800000> : vector<8x16xf32>
    %108 = vector.multi_reduction <maximumf>, %107, %cst_48 [2] : vector<8x16x16xf32> to vector<8x16xf32>
    %109 = vector.shape_cast %108 : vector<8x16xf32> to vector<8x16x1xf32>
    %110 = vector.broadcast %109 : vector<8x16x1xf32> to vector<8x16x16xf32>
    %111 = arith.subf %107, %110 : vector<8x16x16xf32>
    %112 = math.exp %111 : vector<8x16x16xf32>
    %cst_49 = arith.constant dense<0.000000e+00> : vector<8x16xf32>
    %113 = vector.multi_reduction <add>, %112, %cst_49 [2] : vector<8x16x16xf32> to vector<8x16xf32>
    %114 = vector.shape_cast %113 : vector<8x16xf32> to vector<8x16x1xf32>
    %115 = tpu.reciprocal %114 {approx = true} : vector<8x16x1xf32> -> vector<8x16x1xf32>
    %116 = vector.broadcast %115 : vector<8x16x1xf32> to vector<8x16x16xf32>
    %117 = arith.mulf %112, %116 : vector<8x16x16xf32>
    %118 = arith.truncf %117 : vector<8x16x16xf32> to vector<8x16x16xbf16>
    %119 = arith.truncf %99 : vector<8x16x8xf32> to vector<8x16x8xbf16>
    "tpu.trace_start"() <{level = 10 : i32, message = "bqk,bkd->bqd"}> : () -> ()
    %cst_50 = arith.constant dense<0.000000e+00> : vector<8x16x8xf32>
    %120 = tpu.matmul %118, %119, %cst_50 {dimension_numbers = #tpu.dot_dimension_numbers<[2], [1], [1], [2], [0, 0, 0, 1, 1, 2], [0], [0]>} : vector<8x16x16xbf16>, vector<8x16x8xbf16>, vector<8x16x8xf32> -> vector<8x16x8xf32>
    "tpu.trace_stop"() : () -> ()
    %121 = vector.shape_cast %120 : vector<8x16x8xf32> to vector<128x8xf32>
    %c0_51 = arith.constant 0 : index
    %c24_52 = arith.constant 24 : index
    %122 = vector.load %arg9[%c0_51, %c24_52] : memref<128x32xf32, #tpu.memory_space<vmem>>, vector<128x8xf32>
    tpu.vector_store %arg9[%c0_51, %c24_52], %121 {strides = array<i32>} : memref<128x32xf32, #tpu.memory_space<vmem>>, vector<128x8xf32>,
    %c0_53 = arith.constant 0 : index
    %c0_54 = arith.constant 0 : index
    %123 = vector.load %arg9[%c0_53, %c0_54] : memref<128x32xf32, #tpu.memory_space<vmem>>, vector<128x32xf32>
    %124 = arith.truncf %123 : vector<128x32xf32> to vector<128x32xbf16>
    %c0_55 = arith.constant 0 : index
    %c0_56 = arith.constant 0 : index
    %125 = vector.load %arg4[%c0_55, %c0_56] : memref<32x128xbf16, #tpu.memory_space<vmem>>, vector<32x128xbf16>
    %cst_57 = arith.constant dense<0.000000e+00> : vector<128x128xf32>
    %126 = tpu.matmul %124, %125, %cst_57 {dimension_numbers = #tpu.dot_dimension_numbers<[1], [0], [0], [1], [0, 0, 1, 1], [], []>} : vector<128x32xbf16>, vector<32x128xbf16>, vector<128x128xf32> -> vector<128x128xf32>
    %c0_58 = arith.constant 0 : index
    %c0_59 = arith.constant 0 : index
    %127 = vector.load %arg5[%c0_58, %c0_59] : memref<1x128xf32, #tpu.memory_space<vmem>>, vector<1x128xf32>
    %128 = vector.broadcast %127 : vector<1x128xf32> to vector<128x128xf32>
    %129 = arith.addf %126, %128 : vector<128x128xf32>
    %c0_60 = arith.constant 0 : index
    %c0_61 = arith.constant 0 : index
    %130 = vector.load %arg7[%c0_60, %c0_61] : memref<128x128xf32, #tpu.memory_space<vmem>>, vector<128x128xf32>
    tpu.vector_store %arg7[%c0_60, %c0_61], %129 {strides = array<i32>} : memref<128x128xf32, #tpu.memory_space<vmem>>, vector<128x128xf32>,
    return
  }
  func.func @transform_0(%arg0: i32) -> (i32, i32) {
    %c0_i32 = arith.constant 0 : i32
    %c0_i32_0 = arith.constant 0 : i32
    return %arg0, %c0_i32 : i32, i32
  }
  func.func @transform_1(%arg0: i32) -> (i32, i32) {
    %c0_i32 = arith.constant 0 : i32
    %c0_i32_0 = arith.constant 0 : i32
    %c0_i32_1 = arith.constant 0 : i32
    return %c0_i32, %c0_i32_0 : i32, i32
  }
  func.func @transform_2(%arg0: i32) -> (i32, i32) {
    %c0_i32 = arith.constant 0 : i32
    %c0_i32_0 = arith.constant 0 : i32
    %c0_i32_1 = arith.constant 0 : i32
    return %c0_i32, %c0_i32_0 : i32, i32
  }
  func.func @transform_3(%arg0: i32) -> (i32, i32) {
    %c0_i32 = arith.constant 0 : i32
    %c0_i32_0 = arith.constant 0 : i32
    %c0_i32_1 = arith.constant 0 : i32
    return %c0_i32, %c0_i32_0 : i32, i32
  }
  func.func @transform_4(%arg0: i32) -> (i32, i32) {
    %c0_i32 = arith.constant 0 : i32
    %c0_i32_0 = arith.constant 0 : i32
    %c0_i32_1 = arith.constant 0 : i32
    return %c0_i32, %c0_i32_0 : i32, i32
  }
  func.func @transform_5(%arg0: i32) -> (i32, i32, i32) {
    %c0_i32 = arith.constant 0 : i32
    %c0_i32_0 = arith.constant 0 : i32
    %c0_i32_1 = arith.constant 0 : i32
    %c0_i32_2 = arith.constant 0 : i32
    return %c0_i32, %c0_i32_0, %c0_i32_1 : i32, i32, i32
  }
  func.func @transform_6(%arg0: i32) -> (i32, i32) {
    %c0_i32 = arith.constant 0 : i32
    %c0_i32_0 = arith.constant 0 : i32
    return %arg0, %c0_i32 : i32, i32
  }
}

</mosaic_0001>

<llo_original>
// kernel: tpu_custom_call.1
$region0: #{tpu_custom_call.1}
  #allocation0 [shape = 'u32[]', space=smem, size = 0x4, offset = 0x4, fixed_abs, tag = 'smem constant byte address 0x4 - core index']
  #allocation1 [shape = 'u32[144,128]{1,0:T(1,128)}', space=vmem, size = 0x12000, scoped, tag = 'internal scratch']
  #allocation2 [shape = 'f32[128,96]{1,0:T(8,128)}', space=vmem, size = 0x10000, scoped, tag = 'scratch operand']
  #allocation3 [shape = 'f32[128,32]{1,0:T(8,128)}', space=vmem, size = 0x10000, scoped, tag = 'scratch operand']
  %s0 = inlined_call_operand.vmem [shape: bf16[128,32], index: 0, kind: input, shape index: {}]
  %s1 = inlined_call_operand.vmem [shape: bf16[32,96], index: 1, kind: input, shape index: {}]
  %s2 = inlined_call_operand.vmem [shape: f32[1,96], index: 2, kind: input, shape index: {}]
  %s3 = inlined_call_operand.vmem [shape: bf16[32,128], index: 3, kind: input, shape index: {}]
  %s4 = inlined_call_operand.vmem [shape: f32[1,128], index: 4, kind: input, shape index: {}]
  %s5 = inlined_call_operand.vmem [shape: f32[4,16,16], index: 5, kind: input, shape index: {}]
  %s6 = inlined_call_operand.hbm [shape: f32[128,128], index: 6, kind: output, shape index: {}]
  %s7 = sld [smem:[#allocation0]]
  $region34: #{tpu_custom_call.1} parent=0
    _
  %s9 = ssub.s32 1, %s7
  %s10 = scalar_select 0, %s9, %s7
  $region1: #{tpu_custom_call.1} parent=0
    #allocation4 [shape = 'u8[65536]{0}', space=vmem, size = 0x10000, scoped, tag = 'output window, operand 0, single buffered']
    #allocation5 [shape = 's32[1]{0}', space=sflag, size = 0x4, scoped, tag = 'scoped memory for tpu_custom_call.1']
    %11 = vsyncpa [#allocation5], 0
    // Predicated region
    $region2: #{tpu_custom_call.1} parent=1 // pred_check
      _
    $region3: #{tpu_custom_call.1} parent=1 // pred_check_branch
      %13 = sbr.rel (0) target = $region5
    $region4: #{tpu_custom_call.1} parent=1 // pred_region
      _
    $region5: #{tpu_custom_call.1} parent=1 // pred_fallthru
      _
    // Predicated region
    $region6: #{tpu_custom_call.1} parent=1 // pred_check
      _
    $region7: #{tpu_custom_call.1} parent=1 // pred_check_branch
      %15 = sbr.rel (0) target = $region9
    $region8: #{tpu_custom_call.1} parent=1 // pred_region
      _
    $region9: #{tpu_custom_call.1} parent=1 // pred_fallthru
      _
    // Predicated region
    $region10: #{tpu_custom_call.1} parent=1 // pred_check
      _
    $region11: #{tpu_custom_call.1} parent=1 // pred_check_branch
      %17 = sbr.rel (0) target = $region13
    $region12: #{tpu_custom_call.1} parent=1 // pred_region
      _
    $region13: #{tpu_custom_call.1} parent=1 // pred_fallthru
      _
    // Predicated region
    $region14: #{tpu_custom_call.1} parent=1 // pred_check
      _
    $region15: #{tpu_custom_call.1} parent=1 // pred_check_branch
      %19 = sbr.rel (0) target = $region17
    $region16: #{tpu_custom_call.1} parent=1 // pred_region
      _
    $region17: #{tpu_custom_call.1} parent=1 // pred_fallthru
      _
    // Predicated region
    $region18: #{tpu_custom_call.1} parent=1 // pred_check
      _
    $region19: #{tpu_custom_call.1} parent=1 // pred_check_branch
      %21 = sbr.rel (0) target = $region21
    $region20: #{tpu_custom_call.1} parent=1 // pred_region
      _
    $region21: #{tpu_custom_call.1} parent=1 // pred_fallthru
      _
    // Predicated region
    $region22: #{tpu_custom_call.1} parent=1 // pred_check
      _
    $region23: #{tpu_custom_call.1} parent=1 // pred_check_branch
      %23 = sbr.rel (0) target = $region25
    $region24: #{tpu_custom_call.1} parent=1 // pred_region
      _
    $region25: #{tpu_custom_call.1} parent=1 // pred_fallthru
      _
    %v25 = vld [vmem:[%s0] sm:$0xf]
    %v26 = vld [vmem:[%s0 + $0x4] sm:$0xf]
    %v27 = vld [vmem:[%s0 + $0x8] sm:$0xf]
    %v28 = vld [vmem:[%s0 + $0xc] sm:$0xf]
    %v29 = vld [vmem:[%s0 + $0x10] sm:$0xf]
    %v30 = vld [vmem:[%s0 + $0x14] sm:$0xf]
    %v31 = vld [vmem:[%s0 + $0x18] sm:$0xf]
    %v32 = vld [vmem:[%s0 + $0x1c] sm:$0xf]
    %v33 = vld [vmem:[%s0 + $0x20] sm:$0xf]
    %v34 = vld [vmem:[%s0 + $0x24] sm:$0xf]
    %v35 = vld [vmem:[%s0 + $0x28] sm:$0xf]
    %v36 = vld [vmem:[%s0 + $0x2c] sm:$0xf]
    %v37 = vld [vmem:[%s0 + $0x30] sm:$0xf]
    %v38 = vld [vmem:[%s0 + $0x34] sm:$0xf]
    %v39 = vld [vmem:[%s0 + $0x38] sm:$0xf]
    %v40 = vld [vmem:[%s0 + $0x3c] sm:$0xf]
    %v41 = vld [vmem:[%s1] sm:$0xf]
    %v42 = vld [vmem:[%s1 + $0x4] sm:$0xf]
    %v43 = vld [vmem:[%s1 + $0x8] sm:$0xf]
    %v44 = vld [vmem:[%s1 + $0xc] sm:$0xf]
    %v45 = vld [vmem:[%s2] sm:$0x1]
    %v47 = vlaneseq
    %v48 = vshrl.u32 %v47, 7
    %v49 = vsub.s32 0, %v48
    %v50 = vrot.slane %v45, %v49
    %v68 = vunpack.c.l.b16 %v25
    %v69 = vunpack.c.l.b16 %v26
    %v70 = vunpack.c.l.b16 %v27
    %v71 = vunpack.c.l.b16 %v28
    %v72 = vunpack.c.l.b16 %v29
    %v73 = vunpack.c.l.b16 %v30
    %v74 = vunpack.c.l.b16 %v31
    %v75 = vunpack.c.l.b16 %v32
    %v76 = vunpack.c.l.b16 %v33
    %v77 = vunpack.c.l.b16 %v34
    %v78 = vunpack.c.l.b16 %v35
    %v79 = vunpack.c.l.b16 %v36
    %v80 = vunpack.c.l.b16 %v37
    %v81 = vunpack.c.l.b16 %v38
    %v82 = vunpack.c.l.b16 %v39
    %v83 = vunpack.c.l.b16 %v40
    %v84 = vpack.c.b16 %v69, %v68
    %v85 = vpack.c.b16 %v71, %v70
    %v86 = vpack.c.b16 %v73, %v72
    %v87 = vpack.c.b16 %v75, %v74
    %v88 = vpack.c.b16 %v77, %v76
    %v89 = vpack.c.b16 %v79, %v78
    %v90 = vpack.c.b16 %v81, %v80
    %v91 = vpack.c.b16 %v83, %v82
    %v96 = vunpack.c.l.b16 %v41
    %v97 = vunpack.c.l.b16 %v42
    %v98 = vunpack.c.l.b16 %v43
    %v99 = vunpack.c.l.b16 %v44
    %v100 = vpack.c.b16 %v97, %v96
    %v101 = vpack.c.b16 %v99, %v98
    %vm104 = vcmask 261120
    %v106 = vsel %vm104, %v84, 0
    %v109 = vsel %vm104, %v85, 0
    %v112 = vsel %vm104, %v86, 0
    %v115 = vsel %vm104, %v87, 0
    %v118 = vsel %vm104, %v88, 0
    %v121 = vsel %vm104, %v89, 0
    %v124 = vsel %vm104, %v90, 0
    %v127 = vsel %vm104, %v91, 0
    %129 = vmatprep.subr.bf16.mxu0 0
    %130 = vmatpush1.bf16.msra.mxu0 %v100
    %131 = vmatprep.subr.bf16.mxu0 0
    %132 = vmatpush1.bf16.msra.mxu0 %v101
    %133 = vmatprep.subr.bf16.mxu0 0
    %134 = vmatpush1.bf16.msra.mxu0 0
    %135 = vmatprep.subr.bf16.mxu0 0
    %136 = vmatpush1.bf16.msra.mxu0 0
    %137 = vmatprep.subr.bf16.mxu0 0
    %138 = vmatpush1.bf16.msra.mxu0 0
    %139 = vmatprep.subr.bf16.mxu0 0
    %140 = vmatpush1.bf16.msra.mxu0 0
    %141 = vmatprep.subr.bf16.mxu0 0
    %142 = vmatpush1.bf16.msra.mxu0 0
    %143 = vmatprep.subr.bf16.mxu0 0
    %144 = vmatpush1.bf16.msra.mxu0 0
    %145 = vmatprep.subr.bf16.mxu0 0
    %146 = vmatpush1.bf16.msra.mxu0 0
    %147 = vmatprep.subr.bf16.mxu0 0
    %148 = vmatpush1.bf16.msra.mxu0 0
    %149 = vmatprep.subr.bf16.mxu0 0
    %150 = vmatpush1.bf16.msra.mxu0 0
    %151 = vmatprep.subr.bf16.mxu0 0
    %152 = vmatpush1.bf16.msra.mxu0 0
    %153 = vmatprep.subr.bf16.mxu0 0
    %154 = vmatpush1.bf16.msra.mxu0 0
    %155 = vmatprep.subr.bf16.mxu0 0
    %156 = vmatpush1.bf16.msra.mxu0 0
    %157 = vmatprep.subr.bf16.mxu0 0
    %158 = vmatpush1.bf16.msra.mxu0 0
    %159 = vmatprep.subr.bf16.mxu0 0
    %160 = vmatpush1.bf16.msra.mxu0 0
    %161 = vmatprep.mubr.bf16.mxu0 0
    %162 = vmatmul.mubr.bf16.gmra.mrb[0].mxu0 %v106
    %v163 = vpop.f32.mrb[0].mxu0
    %v164 = vadd.f32 %v50, %v163
    %v165 = vpop.f32.mrb[0].mxu0
    %v166 = vpop.f32.mrb[0].mxu0
    %v167 = vadd.f32 %v50, %v166
    %v168 = vpop.f32.mrb[0].mxu0
    %169 = vmatprep.mubr.bf16.mxu0 0
    %170 = vmatmul.mubr.bf16.gmra.mrb[0].mxu0 %v109
    %v171 = vpop.f32.mrb[0].mxu0
    %v172 = vadd.f32 %v50, %v171
    %v173 = vpop.f32.mrb[0].mxu0
    %v174 = vpop.f32.mrb[0].mxu0
    %v175 = vadd.f32 %v50, %v174
    %v176 = vpop.f32.mrb[0].mxu0
    %177 = vmatprep.mubr.bf16.mxu0 0
    %178 = vmatmul.mubr.bf16.gmra.mrb[0].mxu0 %v112
    %v179 = vpop.f32.mrb[0].mxu0
    %v180 = vadd.f32 %v50, %v179
    %v181 = vpop.f32.mrb[0].mxu0
    %v182 = vpop.f32.mrb[0].mxu0
    %v183 = vadd.f32 %v50, %v182
    %v184 = vpop.f32.mrb[0].mxu0
    %185 = vmatprep.mubr.bf16.mxu0 0
    %186 = vmatmul.mubr.bf16.gmra.mrb[0].mxu0 %v115
    %v187 = vpop.f32.mrb[0].mxu0
    %v188 = vadd.f32 %v50, %v187
    %v189 = vpop.f32.mrb[0].mxu0
    %v190 = vpop.f32.mrb[0].mxu0
    %v191 = vadd.f32 %v50, %v190
    %v192 = vpop.f32.mrb[0].mxu0
    %193 = vmatprep.mubr.bf16.mxu0 0
    %194 = vmatmul.mubr.bf16.gmra.mrb[0].mxu0 %v118
    %v195 = vpop.f32.mrb[0].mxu0
    %v196 = vadd.f32 %v50, %v195
    %v197 = vpop.f32.mrb[0].mxu0
    %v198 = vpop.f32.mrb[0].mxu0
    %v199 = vadd.f32 %v50, %v198
    %v200 = vpop.f32.mrb[0].mxu0
    %201 = vmatprep.mubr.bf16.mxu0 0
    %202 = vmatmul.mubr.bf16.gmra.mrb[0].mxu0 %v121
    %v203 = vpop.f32.mrb[0].mxu0
    %v204 = vadd.f32 %v50, %v203
    %v205 = vpop.f32.mrb[0].mxu0
    %v206 = vpop.f32.mrb[0].mxu0
    %v207 = vadd.f32 %v50, %v206
    %v208 = vpop.f32.mrb[0].mxu0
    %209 = vmatprep.mubr.bf16.mxu0 0
    %210 = vmatmul.mubr.bf16.gmra.mrb[0].mxu0 %v124
    %v211 = vpop.f32.mrb[0].mxu0
    %v212 = vadd.f32 %v50, %v211
    %v213 = vpop.f32.mrb[0].mxu0
    %v214 = vpop.f32.mrb[0].mxu0
    %v215 = vadd.f32 %v50, %v214
    %v216 = vpop.f32.mrb[0].mxu0
    %217 = vmatprep.mubr.bf16.mxu0 0
    %218 = vmatmul.mubr.bf16.gmra.mrb[0].mxu0 %v127
    %v219 = vpop.f32.mrb[0].mxu0
    %v220 = vadd.f32 %v50, %v219
    %v221 = vpop.f32.mrb[0].mxu0
    %v222 = vpop.f32.mrb[0].mxu0
    %v223 = vadd.f32 %v50, %v222
    %v224 = vpop.f32.mrb[0].mxu0
    %225 = vdwg.mxu0
    %vm226 = vcmask 785408
    %227 = vst.msk [vmem:[#allocation2] sm:$0xff] %vm226, %v164
    %228 = vst.msk [vmem:[#allocation2 + $0x8] sm:$0xff] %vm226, %v167
    %229 = vst.msk [vmem:[#allocation2 + $0x10] sm:$0xff] %vm226, %v172
    %230 = vst.msk [vmem:[#allocation2 + $0x18] sm:$0xff] %vm226, %v175
    %231 = vst.msk [vmem:[#allocation2 + $0x20] sm:$0xff] %vm226, %v180
    %232 = vst.msk [vmem:[#allocation2 + $0x28] sm:$0xff] %vm226, %v183
    %233 = vst.msk [vmem:[#allocation2 + $0x30] sm:$0xff] %vm226, %v188
    %234 = vst.msk [vmem:[#allocation2 + $0x38] sm:$0xff] %vm226, %v191
    %235 = vst.msk [vmem:[#allocation2 + $0x40] sm:$0xff] %vm226, %v196
    %236 = vst.msk [vmem:[#allocation2 + $0x48] sm:$0xff] %vm226, %v199
    %237 = vst.msk [vmem:[#allocation2 + $0x50] sm:$0xff] %vm226, %v204
    %238 = vst.msk [vmem:[#allocation2 + $0x58] sm:$0xff] %vm226, %v207
    %239 = vst.msk [vmem:[#allocation2 + $0x60] sm:$0xff] %vm226, %v212
    %240 = vst.msk [vmem:[#allocation2 + $0x68] sm:$0xff] %vm226, %v215
    %241 = vst.msk [vmem:[#allocation2 + $0x70] sm:$0xff] %vm226, %v220
    %242 = vst.msk [vmem:[#allocation2 + $0x78] sm:$0xff] %vm226, %v223
    %v243 = vld [vmem:[#allocation2] sm:$0xff]
    %v244 = vld [vmem:[#allocation2 + $0x8] sm:$0xff]
    %v245 = vld [vmem:[#allocation2 + $0x10] sm:$0xff]
    %v246 = vld [vmem:[#allocation2 + $0x18] sm:$0xff]
    %v247 = vld [vmem:[#allocation2 + $0x20] sm:$0xff]
    %v248 = vld [vmem:[#allocation2 + $0x28] sm:$0xff]
    %v249 = vld [vmem:[#allocation2 + $0x30] sm:$0xff]
    %v250 = vld [vmem:[#allocation2 + $0x38] sm:$0xff]
    %v251 = vld [vmem:[#allocation2 + $0x40] sm:$0xff]
    %v252 = vld [vmem:[#allocation2 + $0x48] sm:$0xff]
    %v253 = vld [vmem:[#allocation2 + $0x50] sm:$0xff]
    %v254 = vld [vmem:[#allocation2 + $0x58] sm:$0xff]
    %v255 = vld [vmem:[#allocation2 + $0x60] sm:$0xff]
    %v256 = vld [vmem:[#allocation2 + $0x68] sm:$0xff]
    %v257 = vld [vmem:[#allocation2 + $0x70] sm:$0xff]
    %v258 = vld [vmem:[#allocation2 + $0x78] sm:$0xff]
    %v259 = vpack.c.bf16 %v244, %v243
    %v260 = vpack.c.bf16 %v246, %v245
    %v261 = vpack.c.bf16 %v248, %v247
    %v262 = vpack.c.bf16 %v250, %v249
    %v263 = vpack.c.bf16 %v252, %v251
    %v264 = vpack.c.bf16 %v254, %v253
    %v265 = vpack.c.bf16 %v256, %v255
    %v266 = vpack.c.bf16 %v258, %v257
    %v267 = vld [vmem:[%s5] sm:$0xff]
    %v268 = vld [vmem:[%s5 + $0x8] sm:$0xff]
    %270 = vrot.lane.b32.xlu0 %v259, 96
    %v271 = vpop.permute.xlu0 %270
    %vm272 = vcmask 64512
    %v274 = vsel %vm272, %v259, 0
    %v277 = vsel %vm272, %v271, 0
    %279 = vmatprep.subr.bf16.mxu0 0
    %280 = vmatpush1.bf16.xpose.msra.mxu0 %v277
    %281 = vmatprep.subr.bf16.mxu0 0
    %282 = vmatpush1.bf16.xpose.msra.mxu0 0
    %283 = vmatprep.subr.bf16.mxu0 0
    %284 = vmatpush1.bf16.xpose.msra.mxu0 0
    %285 = vmatprep.subr.bf16.mxu0 0
    %286 = vmatpush1.bf16.xpose.msra.mxu0 0
    %287 = vmatprep.subr.bf16.mxu0 0
    %288 = vmatpush1.bf16.xpose.msra.mxu0 0
    %289 = vmatprep.subr.bf16.mxu0 0
    %290 = vmatpush1.bf16.xpose.msra.mxu0 0
    %291 = vmatprep.subr.bf16.mxu0 0
    %292 = vmatpush1.bf16.xpose.msra.mxu0 0
    %293 = vmatprep.subr.bf16.mxu0 0
    %294 = vmatpush1.bf16.xpose.msra.mxu0 0
    %295 = vmatprep.subr.bf16.mxu0 0
    %296 = vmatpush1.bf16.xpose.msra.mxu0 0
    %297 = vmatprep.subr.bf16.mxu0 0
    %298 = vmatpush1.bf16.xpose.msra.mxu0 0
    %299 = vmatprep.subr.bf16.mxu0 0
    %300 = vmatpush1.bf16.xpose.msra.mxu0 0
    %301 = vmatprep.subr.bf16.mxu0 0
    %302 = vmatpush1.bf16.xpose.msra.mxu0 0
    %303 = vmatprep.subr.bf16.mxu0 0
    %304 = vmatpush1.bf16.xpose.msra.mxu0 0
    %305 = vmatprep.subr.bf16.mxu0 0
    %306 = vmatpush1.bf16.xpose.msra.mxu0 0
    %307 = vmatprep.subr.bf16.mxu0 0
    %308 = vmatpush1.bf16.xpose.msra.mxu0 0
    %309 = vmatprep.subr.bf16.mxu0 0
    %310 = vmatpush1.bf16.xpose.msra.mxu0 0
    %311 = vmatprep.mubr.bf16.mxu0 0
    %312 = vmatmul.mubr.bf16.gmra.mrb[0].mxu0 %v274
    %v313 = vpop.f32.mrb[0].mxu0
    %v314 = vadd.f32 %v267, %v313
    %v315 = vpop.f32.mrb[0].mxu0
    %v316 = vpop.f32.mrb[0].mxu0
    %v317 = vadd.f32 %v268, %v316
    %v318 = vpop.f32.mrb[0].mxu0
    %319 = vdwg.mxu0
    %321 = vrot.lane.b32.xlu0 %v260, 96
    %v322 = vpop.permute.xlu0 %321
    %v324 = vsel %vm272, %v260, 0
    %v327 = vsel %vm272, %v322, 0
    %329 = vmatprep.subr.bf16.mxu0 0
    %330 = vmatpush1.bf16.xpose.msra.mxu0 %v327
    %331 = vmatprep.subr.bf16.mxu0 0
    %332 = vmatpush1.bf16.xpose.msra.mxu0 0
    %333 = vmatprep.subr.bf16.mxu0 0
    %334 = vmatpush1.bf16.xpose.msra.mxu0 0
    %335 = vmatprep.subr.bf16.mxu0 0
    %336 = vmatpush1.bf16.xpose.msra.mxu0 0
    %337 = vmatprep.subr.bf16.mxu0 0
    %338 = vmatpush1.bf16.xpose.msra.mxu0 0
    %339 = vmatprep.subr.bf16.mxu0 0
    %340 = vmatpush1.bf16.xpose.msra.mxu0 0
    %341 = vmatprep.subr.bf16.mxu0 0
    %342 = vmatpush1.bf16.xpose.msra.mxu0 0
    %343 = vmatprep.subr.bf16.mxu0 0
    %344 = vmatpush1.bf16.xpose.msra.mxu0 0
    %345 = vmatprep.subr.bf16.mxu0 0
    %346 = vmatpush1.bf16.xpose.msra.mxu0 0
    %347 = vmatprep.subr.bf16.mxu0 0
    %348 = vmatpush1.bf16.xpose.msra.mxu0 0
    %349 = vmatprep.subr.bf16.mxu0 0
    %350 = vmatpush1.bf16.xpose.msra.mxu0 0
    %351 = vmatprep.subr.bf16.mxu0 0
    %352 = vmatpush1.bf16.xpose.msra.mxu0 0
    %353 = vmatprep.subr.bf16.mxu0 0
    %354 = vmatpush1.bf16.xpose.msra.mxu0 0
    %355 = vmatprep.subr.bf16.mxu0 0
    %356 = vmatpush1.bf16.xpose.msra.mxu0 0
    %357 = vmatprep.subr.bf16.mxu0 0
    %358 = vmatpush1.bf16.xpose.msra.mxu0 0
    %359 = vmatprep.subr.bf16.mxu0 0
    %360 = vmatpush1.bf16.xpose.msra.mxu0 0
    %361 = vmatprep.mubr.bf16.mxu0 0
    %362 = vmatmul.mubr.bf16.gmra.mrb[0].mxu0 %v324
    %v363 = vpop.f32.mrb[0].mxu0
    %v364 = vadd.f32 %v267, %v363
    %v365 = vpop.f32.mrb[0].mxu0
    %v366 = vpop.f32.mrb[0].mxu0
    %v367 = vadd.f32 %v268, %v366
    %v368 = vpop.f32.mrb[0].mxu0
    %369 = vdwg.mxu0
    %371 = vrot.lane.b32.xlu0 %v261, 96
    %v372 = vpop.permute.xlu0 %371
    %v374 = vsel %vm272, %v261, 0
    %v377 = vsel %vm272, %v372, 0
    %379 = vmatprep.subr.bf16.mxu0 0
    %380 = vmatpush1.bf16.xpose.msra.mxu0 %v377
    %381 = vmatprep.subr.bf16.mxu0 0
    %382 = vmatpush1.bf16.xpose.msra.mxu0 0
    %383 = vmatprep.subr.bf16.mxu0 0
    %384 = vmatpush1.bf16.xpose.msra.mxu0 0
    %385 = vmatprep.subr.bf16.mxu0 0
    %386 = vmatpush1.bf16.xpose.msra.mxu0 0
    %387 = vmatprep.subr.bf16.mxu0 0
    %388 = vmatpush1.bf16.xpose.msra.mxu0 0
    %389 = vmatprep.subr.bf16.mxu0 0
    %390 = vmatpush1.bf16.xpose.msra.mxu0 0
    %391 = vmatprep.subr.bf16.mxu0 0
    %392 = vmatpush1.bf16.xpose.msra.mxu0 0
    %393 = vmatprep.subr.bf16.mxu0 0
    %394 = vmatpush1.bf16.xpose.msra.mxu0 0
    %395 = vmatprep.subr.bf16.mxu0 0
    %396 = vmatpush1.bf16.xpose.msra.mxu0 0
    %397 = vmatprep.subr.bf16.mxu0 0
    %398 = vmatpush1.bf16.xpose.msra.mxu0 0
    %399 = vmatprep.subr.bf16.mxu0 0
    %400 = vmatpush1.bf16.xpose.msra.mxu0 0
    %401 = vmatprep.subr.bf16.mxu0 0
    %402 = vmatpush1.bf16.xpose.msra.mxu0 0
    %403 = vmatprep.subr.bf16.mxu0 0
    %404 = vmatpush1.bf16.xpose.msra.mxu0 0
    %405 = vmatprep.subr.bf16.mxu0 0
    %406 = vmatpush1.bf16.xpose.msra.mxu0 0
    %407 = vmatprep.subr.bf16.mxu0 0
    %408 = vmatpush1.bf16.xpose.msra.mxu0 0
    %409 = vmatprep.subr.bf16.mxu0 0
    %410 = vmatpush1.bf16.xpose.msra.mxu0 0
    %411 = vmatprep.mubr.bf16.mxu0 0
    %412 = vmatmul.mubr.bf16.gmra.mrb[0].mxu0 %v374
    %v413 = vpop.f32.mrb[0].mxu0
    %v414 = vadd.f32 %v267, %v413
    %v415 = vpop.f32.mrb[0].mxu0
    %v416 = vpop.f32.mrb[0].mxu0
    %v417 = vadd.f32 %v268, %v416
    %v418 = vpop.f32.mrb[0].mxu0
    %419 = vdwg.mxu0
    %421 = vrot.lane.b32.xlu0 %v262, 96
    %v422 = vpop.permute.xlu0 %421
    %v424 = vsel %vm272, %v262, 0
    %v427 = vsel %vm272, %v422, 0
    %429 = vmatprep.subr.bf16.mxu0 0
    %430 = vmatpush1.bf16.xpose.msra.mxu0 %v427
    %431 = vmatprep.subr.bf16.mxu0 0
    %432 = vmatpush1.bf16.xpose.msra.mxu0 0
    %433 = vmatprep.subr.bf16.mxu0 0
    %434 = vmatpush1.bf16.xpose.msra.mxu0 0
    %435 = vmatprep.subr.bf16.mxu0 0
    %436 = vmatpush1.bf16.xpose.msra.mxu0 0
    %437 = vmatprep.subr.bf16.mxu0 0
    %438 = vmatpush1.bf16.xpose.msra.mxu0 0
    %439 = vmatprep.subr.bf16.mxu0 0
    %440 = vmatpush1.bf16.xpose.msra.mxu0 0
    %441 = vmatprep.subr.bf16.mxu0 0
    %442 = vmatpush1.bf16.xpose.msra.mxu0 0
    %443 = vmatprep.subr.bf16.mxu0 0
    %444 = vmatpush1.bf16.xpose.msra.mxu0 0
    %445 = vmatprep.subr.bf16.mxu0 0
    %446 = vmatpush1.bf16.xpose.msra.mxu0 0
    %447 = vmatprep.subr.bf16.mxu0 0
    %448 = vmatpush1.bf16.xpose.msra.mxu0 0
    %449 = vmatprep.subr.bf16.mxu0 0
    %450 = vmatpush1.bf16.xpose.msra.mxu0 0
    %451 = vmatprep.subr.bf16.mxu0 0
    %452 = vmatpush1.bf16.xpose.msra.mxu0 0
    %453 = vmatprep.subr.bf16.mxu0 0
    %454 = vmatpush1.bf16.xpose.msra.mxu0 0
    %455 = vmatprep.subr.bf16.mxu0 0
    %456 = vmatpush1.bf16.xpose.msra.mxu0 0
    %457 = vmatprep.subr.bf16.mxu0 0
    %458 = vmatpush1.bf16.xpose.msra.mxu0 0
    %459 = vmatprep.subr.bf16.mxu0 0
    %460 = vmatpush1.bf16.xpose.msra.mxu0 0
    %461 = vmatprep.mubr.bf16.mxu0 0
    %462 = vmatmul.mubr.bf16.gmra.mrb[0].mxu0 %v424
    %v463 = vpop.f32.mrb[0].mxu0
    %v464 = vadd.f32 %v267, %v463
    %v465 = vpop.f32.mrb[0].mxu0
    %v466 = vpop.f32.mrb[0].mxu0
    %v467 = vadd.f32 %v268, %v466
    %v468 = vpop.f32.mrb[0].mxu0
    %469 = vdwg.mxu0
    %471 = vrot.lane.b32.xlu0 %v263, 96
    %v472 = vpop.permute.xlu0 %471
    %v474 = vsel %vm272, %v263, 0
    %v477 = vsel %vm272, %v472, 0
    %479 = vmatprep.subr.bf16.mxu0 0
    %480 = vmatpush1.bf16.xpose.msra.mxu0 %v477
    %481 = vmatprep.subr.bf16.mxu0 0
    %482 = vmatpush1.bf16.xpose.msra.mxu0 0
    %483 = vmatprep.subr.bf16.mxu0 0
    %484 = vmatpush1.bf16.xpose.msra.mxu0 0
    %485 = vmatprep.subr.bf16.mxu0 0
    %486 = vmatpush1.bf16.xpose.msra.mxu0 0
    %487 = vmatprep.subr.bf16.mxu0 0
    %488 = vmatpush1.bf16.xpose.msra.mxu0 0
    %489 = vmatprep.subr.bf16.mxu0 0
    %490 = vmatpush1.bf16.xpose.msra.mxu0 0
    %491 = vmatprep.subr.bf16.mxu0 0
    %492 = vmatpush1.bf16.xpose.msra.mxu0 0
    %493 = vmatprep.subr.bf16.mxu0 0
    %494 = vmatpush1.bf16.xpose.msra.mxu0 0
    %495 = vmatprep.subr.bf16.mxu0 0
    %496 = vmatpush1.bf16.xpose.msra.mxu0 0
    %497 = vmatprep.subr.bf16.mxu0 0
    %498 = vmatpush1.bf16.xpose.msra.mxu0 0
    %499 = vmatprep.subr.bf16.mxu0 0
    %500 = vmatpush1.bf16.xpose.msra.mxu0 0
    %501 = vmatprep.subr.bf16.mxu0 0
    %502 = vmatpush1.bf16.xpose.msra.mxu0 0
    %503 = vmatprep.subr.bf16.mxu0 0
    %504 = vmatpush1.bf16.xpose.msra.mxu0 0
    %505 = vmatprep.subr.bf16.mxu0 0
    %506 = vmatpush1.bf16.xpose.msra.mxu0 0
    %507 = vmatprep.subr.bf16.mxu0 0
    %508 = vmatpush1.bf16.xpose.msra.mxu0 0
    %509 = vmatprep.subr.bf16.mxu0 0
    %510 = vmatpush1.bf16.xpose.msra.mxu0 0
    %511 = vmatprep.mubr.bf16.mxu0 0
    %512 = vmatmul.mubr.bf16.gmra.mrb[0].mxu0 %v474
    %v513 = vpop.f32.mrb[0].mxu0
    %v514 = vadd.f32 %v267, %v513
    %v515 = vpop.f32.mrb[0].mxu0
    %v516 = vpop.f32.mrb[0].mxu0
    %v517 = vadd.f32 %v268, %v516
    %v518 = vpop.f32.mrb[0].mxu0
    %519 = vdwg.mxu0
    %521 = vrot.lane.b32.xlu0 %v264, 96
    %v522 = vpop.permute.xlu0 %521
    %v524 = vsel %vm272, %v264, 0
    %v527 = vsel %vm272, %v522, 0
    %529 = vmatprep.subr.bf16.mxu0 0
    %530 = vmatpush1.bf16.xpose.msra.mxu0 %v527
    %531 = vmatprep.subr.bf16.mxu0 0
    %532 = vmatpush1.bf16.xpose.msra.mxu0 0
    %533 = vmatprep.subr.bf16.mxu0 0
    %534 = vmatpush1.bf16.xpose.msra.mxu0 0
    %535 = vmatprep.subr.bf16.mxu0 0
    %536 = vmatpush1.bf16.xpose.msra.mxu0 0
    %537 = vmatprep.subr.bf16.mxu0 0
    %538 = vmatpush1.bf16.xpose.msra.mxu0 0
    %539 = vmatprep.subr.bf16.mxu0 0
    %540 = vmatpush1.bf16.xpose.msra.mxu0 0
    %541 = vmatprep.subr.bf16.mxu0 0
    %542 = vmatpush1.bf16.xpose.msra.mxu0 0
    %543 = vmatprep.subr.bf16.mxu0 0
    %544 = vmatpush1.bf16.xpose.msra.mxu0 0
    %545 = vmatprep.subr.bf16.mxu0 0
    %546 = vmatpush1.bf16.xpose.msra.mxu0 0
    %547 = vmatprep.subr.bf16.mxu0 0
    %548 = vmatpush1.bf16.xpose.msra.mxu0 0
    %549 = vmatprep.subr.bf16.mxu0 0
    %550 = vmatpush1.bf16.xpose.msra.mxu0 0
    %551 = vmatprep.subr.bf16.mxu0 0
    %552 = vmatpush1.bf16.xpose.msra.mxu0 0
    %553 = vmatprep.subr.bf16.mxu0 0
    %554 = vmatpush1.bf16.xpose.msra.mxu0 0
    %555 = vmatprep.subr.bf16.mxu0 0
    %556 = vmatpush1.bf16.xpose.msra.mxu0 0
    %557 = vmatprep.subr.bf16.mxu0 0
    %558 = vmatpush1.bf16.xpose.msra.mxu0 0
    %559 = vmatprep.subr.bf16.mxu0 0
    %560 = vmatpush1.bf16.xpose.msra.mxu0 0
    %561 = vmatprep.mubr.bf16.mxu0 0
    %562 = vmatmul.mubr.bf16.gmra.mrb[0].mxu0 %v524
    %v563 = vpop.f32.mrb[0].mxu0
    %v564 = vadd.f32 %v267, %v563
    %v565 = vpop.f32.mrb[0].mxu0
    %v566 = vpop.f32.mrb[0].mxu0
    %v567 = vadd.f32 %v268, %v566
    %v568 = vpop.f32.mrb[0].mxu0
    %569 = vdwg.mxu0
    %571 = vrot.lane.b32.xlu0 %v265, 96
    %v572 = vpop.permute.xlu0 %571
    %v574 = vsel %vm272, %v265, 0
    %v577 = vsel %vm272, %v572, 0
    %579 = vmatprep.subr.bf16.mxu0 0
    %580 = vmatpush1.bf16.xpose.msra.mxu0 %v577
    %581 = vmatprep.subr.bf16.mxu0 0
    %582 = vmatpush1.bf16.xpose.msra.mxu0 0
    %583 = vmatprep.subr.bf16.mxu0 0
    %584 = vmatpush1.bf16.xpose.msra.mxu0 0
    %585 = vmatprep.subr.bf16.mxu0 0
    %586 = vmatpush1.bf16.xpose.msra.mxu0 0
    %587 = vmatprep.subr.bf16.mxu0 0
    %588 = vmatpush1.bf16.xpose.msra.mxu0 0
    %589 = vmatprep.subr.bf16.mxu0 0
    %590 = vmatpush1.bf16.xpose.msra.mxu0 0
    %591 = vmatprep.subr.bf16.mxu0 0
    %592 = vmatpush1.bf16.xpose.msra.mxu0 0
    %593 = vmatprep.subr.bf16.mxu0 0
    %594 = vmatpush1.bf16.xpose.msra.mxu0 0
    %595 = vmatprep.subr.bf16.mxu0 0
    %596 = vmatpush1.bf16.xpose.msra.mxu0 0
    %597 = vmatprep.subr.bf16.mxu0 0
    %598 = vmatpush1.bf16.xpose.msra.mxu0 0
    %599 = vmatprep.subr.bf16.mxu0 0
    %600 = vmatpush1.bf16.xpose.msra.mxu0 0
    %601 = vmatprep.subr.bf16.mxu0 0
    %602 = vmatpush1.bf16.xpose.msra.mxu0 0
    %603 = vmatprep.subr.bf16.mxu0 0
    %604 = vmatpush1.bf16.xpose.msra.mxu0 0
    %605 = vmatprep.subr.bf16.mxu0 0
    %606 = vmatpush1.bf16.xpose.msra.mxu0 0
    %607 = vmatprep.subr.bf16.mxu0 0
    %608 = vmatpush1.bf16.xpose.msra.mxu0 0
    %609 = vmatprep.subr.bf16.mxu0 0
    %610 = vmatpush1.bf16.xpose.msra.mxu0 0
    %611 = vmatprep.mubr.bf16.mxu0 0
    %612 = vmatmul.mubr.bf16.gmra.mrb[0].mxu0 %v574
    %v613 = vpop.f32.mrb[0].mxu0
    %v614 = vadd.f32 %v267, %v613
    %v615 = vpop.f32.mrb[0].mxu0
    %v616 = vpop.f32.mrb[0].mxu0
    %v617 = vadd.f32 %v268, %v616
    %v618 = vpop.f32.mrb[0].mxu0
    %619 = vdwg.mxu0
    %621 = vrot.lane.b32.xlu0 %v266, 96
    %v622 = vpop.permute.xlu0 %621
    %v624 = vsel %vm272, %v266, 0
    %v627 = vsel %vm272, %v622, 0
    %629 = vmatprep.subr.bf16.mxu0 0
    %630 = vmatpush1.bf16.xpose.msra.mxu0 %v627
    %631 = vmatprep.subr.bf16.mxu0 0
    %632 = vmatpush1.bf16.xpose.msra.mxu0 0
    %633 = vmatprep.subr.bf16.mxu0 0
    %634 = vmatpush1.bf16.xpose.msra.mxu0 0
    %635 = vmatprep.subr.bf16.mxu0 0
    %636 = vmatpush1.bf16.xpose.msra.mxu0 0
    %637 = vmatprep.subr.bf16.mxu0 0
    %638 = vmatpush1.bf16.xpose.msra.mxu0 0
    %639 = vmatprep.subr.bf16.mxu0 0
    %640 = vmatpush1.bf16.xpose.msra.mxu0 0
    %641 = vmatprep.subr.bf16.mxu0 0
    %642 = vmatpush1.bf16.xpose.msra.mxu0 0
    %643 = vmatprep.subr.bf16.mxu0 0
    %644 = vmatpush1.bf16.xpose.msra.mxu0 0
    %645 = vmatprep.subr.bf16.mxu0 0
    %646 = vmatpush1.bf16.xpose.msra.mxu0 0
    %647 = vmatprep.subr.bf16.mxu0 0
    %648 = vmatpush1.bf16.xpose.msra.mxu0 0
    %649 = vmatprep.subr.bf16.mxu0 0
    %650 = vmatpush1.bf16.xpose.msra.mxu0 0
    %651 = vmatprep.subr.bf16.mxu0 0
    %652 = vmatpush1.bf16.xpose.msra.mxu0 0
    %653 = vmatprep.subr.bf16.mxu0 0
    %654 = vmatpush1.bf16.xpose.msra.mxu0 0
    %655 = vmatprep.subr.bf16.mxu0 0
    %656 = vmatpush1.bf16.xpose.msra.mxu0 0
    %657 = vmatprep.subr.bf16.mxu0 0
    %658 = vmatpush1.bf16.xpose.msra.mxu0 0
    %659 = vmatprep.subr.bf16.mxu0 0
    %660 = vmatpush1.bf16.xpose.msra.mxu0 0
    %661 = vmatprep.mubr.bf16.mxu0 0
    %662 = vmatmul.mubr.bf16.gmra.mrb[0].mxu0 %v624
    %v663 = vpop.f32.mrb[0].mxu0
    %v664 = vadd.f32 %v267, %v663
    %v665 = vpop.f32.mrb[0].mxu0
    %v666 = vpop.f32.mrb[0].mxu0
    %v667 = vadd.f32 %v268, %v666
    %v668 = vpop.f32.mrb[0].mxu0
    %669 = vdwg.mxu0
    %vm670 = vcmask 130048
    %v671 = vsel %vm670, %v314, -inf
    %672 = vmax.xlane.f32.xlu0 %v671
    %v673 = vpop.xlane.xlu0 %672
    %v674 = vsel %vm670, %v317, -inf
    %675 = vmax.xlane.f32.xlu0 %v674
    %v676 = vpop.xlane.xlu0 %675
    %v677 = vsel %vm670, %v364, -inf
    %678 = vmax.xlane.f32.xlu0 %v677
    %v679 = vpop.xlane.xlu0 %678
    %v680 = vsel %vm670, %v367, -inf
    %681 = vmax.xlane.f32.xlu0 %v680
    %v682 = vpop.xlane.xlu0 %681
    %v683 = vsel %vm670, %v414, -inf
    %684 = vmax.xlane.f32.xlu0 %v683
    %v685 = vpop.xlane.xlu0 %684
    %v686 = vsel %vm670, %v417, -inf
    %687 = vmax.xlane.f32.xlu0 %v686
    %v688 = vpop.xlane.xlu0 %687
    %v689 = vsel %vm670, %v464, -inf
    %690 = vmax.xlane.f32.xlu0 %v689
    %v691 = vpop.xlane.xlu0 %690
    %v692 = vsel %vm670, %v467, -inf
    %693 = vmax.xlane.f32.xlu0 %v692
    %v694 = vpop.xlane.xlu0 %693
    %v695 = vsel %vm670, %v514, -inf
    %696 = vmax.xlane.f32.xlu0 %v695
    %v697 = vpop.xlane.xlu0 %696
    %v698 = vsel %vm670, %v517, -inf
    %699 = vmax.xlane.f32.xlu0 %v698
    %v700 = vpop.xlane.xlu0 %699
    %v701 = vsel %vm670, %v564, -inf
    %702 = vmax.xlane.f32.xlu0 %v701
    %v703 = vpop.xlane.xlu0 %702
    %v704 = vsel %vm670, %v567, -inf
    %705 = vmax.xlane.f32.xlu0 %v704
    %v706 = vpop.xlane.xlu0 %705
    %v707 = vsel %vm670, %v614, -inf
    %708 = vmax.xlane.f32.xlu0 %v707
    %v709 = vpop.xlane.xlu0 %708
    %v710 = vsel %vm670, %v617, -inf
    %711 = vmax.xlane.f32.xlu0 %v710
    %v712 = vpop.xlane.xlu0 %711
    %v713 = vsel %vm670, %v664, -inf
    %714 = vmax.xlane.f32.xlu0 %v713
    %v715 = vpop.xlane.xlu0 %714
    %v716 = vsel %vm670, %v667, -inf
    %717 = vmax.xlane.f32.xlu0 %v716
    %v718 = vpop.xlane.xlu0 %717
    %v719 = vsub.f32 %v314, %v673
    %v720 = vsub.f32 %v317, %v676
    %v721 = vsub.f32 %v364, %v679
    %v722 = vsub.f32 %v367, %v682
    %v723 = vsub.f32 %v414, %v685
    %v724 = vsub.f32 %v417, %v688
    %v725 = vsub.f32 %v464, %v691
    %v726 = vsub.f32 %v467, %v694
    %v727 = vsub.f32 %v514, %v697
    %v728 = vsub.f32 %v517, %v700
    %v729 = vsub.f32 %v564, %v703
    %v730 = vsub.f32 %v567, %v706
    %v731 = vsub.f32 %v614, %v709
    %v732 = vsub.f32 %v617, %v712
    %v733 = vsub.f32 %v664, %v715
    %v734 = vsub.f32 %v667, %v718
    %v735 = vmul.f32 %v719, 1.442695
    %v736 = vpow.pop %v735
    %v737 = vmul.f32 %v720, 1.442695
    %v738 = vpow.pop %v737
    %v739 = vmul.f32 %v721, 1.442695
    %v740 = vpow.pop %v739
    %v741 = vmul.f32 %v722, 1.442695
    %v742 = vpow.pop %v741
    %v743 = vmul.f32 %v723, 1.442695
    %v744 = vpow.pop %v743
    %v745 = vmul.f32 %v724, 1.442695
    %v746 = vpow.pop %v745
    %v747 = vmul.f32 %v725, 1.442695
    %v748 = vpow.pop %v747
    %v749 = vmul.f32 %v726, 1.442695
    %v750 = vpow.pop %v749
    %v751 = vmul.f32 %v727, 1.442695
    %v752 = vpow.pop %v751
    %v753 = vmul.f32 %v728, 1.442695
    %v754 = vpow.pop %v753
    %v755 = vmul.f32 %v729, 1.442695
    %v756 = vpow.pop %v755
    %v757 = vmul.f32 %v730, 1.442695
    %v758 = vpow.pop %v757
    %v759 = vmul.f32 %v731, 1.442695
    %v760 = vpow.pop %v759
    %v761 = vmul.f32 %v732, 1.442695
    %v762 = vpow.pop %v761
    %v763 = vmul.f32 %v733, 1.442695
    %v764 = vpow.pop %v763
    %v765 = vmul.f32 %v734, 1.442695
    %v766 = vpow.pop %v765
    %v767 = vsel %vm670, %v736, 0.0
    %768 = vadd.xlane.f32.xlu0 %v767
    %v769 = vpop.xlane.xlu0 %768
    %v770 = vsel %vm670, %v738, 0.0
    %771 = vadd.xlane.f32.xlu0 %v770
    %v772 = vpop.xlane.xlu0 %771
    %v773 = vsel %vm670, %v740, 0.0
    %774 = vadd.xlane.f32.xlu0 %v773
    %v775 = vpop.xlane.xlu0 %774
    %v776 = vsel %vm670, %v742, 0.0
    %777 = vadd.xlane.f32.xlu0 %v776
    %v778 = vpop.xlane.xlu0 %777
    %v779 = vsel %vm670, %v744, 0.0
    %780 = vadd.xlane.f32.xlu0 %v779
    %v781 = vpop.xlane.xlu0 %780
    %v782 = vsel %vm670, %v746, 0.0
    %783 = vadd.xlane.f32.xlu0 %v782
    %v784 = vpop.xlane.xlu0 %783
    %v785 = vsel %vm670, %v748, 0.0
    %786 = vadd.xlane.f32.xlu0 %v785
    %v787 = vpop.xlane.xlu0 %786
    %v788 = vsel %vm670, %v750, 0.0
    %789 = vadd.xlane.f32.xlu0 %v788
    %v790 = vpop.xlane.xlu0 %789
    %v791 = vsel %vm670, %v752, 0.0
    %792 = vadd.xlane.f32.xlu0 %v791
    %v793 = vpop.xlane.xlu0 %792
    %v794 = vsel %vm670, %v754, 0.0
    %795 = vadd.xlane.f32.xlu0 %v794
    %v796 = vpop.xlane.xlu0 %795
    %v797 = vsel %vm670, %v756, 0.0
    %798 = vadd.xlane.f32.xlu0 %v797
    %v799 = vpop.xlane.xlu0 %798
    %v800 = vsel %vm670, %v758, 0.0
    %801 = vadd.xlane.f32.xlu0 %v800
    %v802 = vpop.xlane.xlu0 %801
    %v803 = vsel %vm670, %v760, 0.0
    %804 = vadd.xlane.f32.xlu0 %v803
    %v805 = vpop.xlane.xlu0 %804
    %v806 = vsel %vm670, %v762, 0.0
    %807 = vadd.xlane.f32.xlu0 %v806
    %v808 = vpop.xlane.xlu0 %807
    %v809 = vsel %vm670, %v764, 0.0
    %810 = vadd.xlane.f32.xlu0 %v809
    %v811 = vpop.xlane.xlu0 %810
    %v812 = vsel %vm670, %v766, 0.0
    %813 = vadd.xlane.f32.xlu0 %v812
    %v814 = vpop.xlane.xlu0 %813
    %v815 = vrcp.pop %v769
    %v816 = vrcp.pop %v772
    %v817 = vrcp.pop %v775
    %v818 = vrcp.pop %v778
    %v819 = vrcp.pop %v781
    %v820 = vrcp.pop %v784
    %v821 = vrcp.pop %v787
    %v822 = vrcp.pop %v790
    %v823 = vrcp.pop %v793
    %v824 = vrcp.pop %v796
    %v825 = vrcp.pop %v799
    %v826 = vrcp.pop %v802
    %v827 = vrcp.pop %v805
    %v828 = vrcp.pop %v808
    %v829 = vrcp.pop %v811
    %v830 = vrcp.pop %v814
    %v831 = vmul.f32 %v736, %v815
    %v832 = vmul.f32 %v738, %v816
    %v833 = vmul.f32 %v740, %v817
    %v834 = vmul.f32 %v742, %v818
    %v835 = vmul.f32 %v744, %v819
    %v836 = vmul.f32 %v746, %v820
    %v837 = vmul.f32 %v748, %v821
    %v838 = vmul.f32 %v750, %v822
    %v839 = vmul.f32 %v752, %v823
    %v840 = vmul.f32 %v754, %v824
    %v841 = vmul.f32 %v756, %v825
    %v842 = vmul.f32 %v758, %v826
    %v843 = vmul.f32 %v760, %v827
    %v844 = vmul.f32 %v762, %v828
    %v845 = vmul.f32 %v764, %v829
    %v846 = vmul.f32 %v766, %v830
    %v847 = vpack.c.bf16 %v832, %v831
    %v848 = vpack.c.bf16 %v834, %v833
    %v849 = vpack.c.bf16 %v836, %v835
    %v850 = vpack.c.bf16 %v838, %v837
    %v851 = vpack.c.bf16 %v840, %v839
    %v852 = vpack.c.bf16 %v842, %v841
    %v853 = vpack.c.bf16 %v844, %v843
    %v854 = vpack.c.bf16 %v846, %v845
    %855 = vrot.lane.b32.xlu0 %v259, 64
    %v856 = vpop.permute.xlu0 %855
    %v859 = vsel %vm670, %v847, 0
    %861 = vmatprep.subr.bf16.mxu0 0
    %862 = vmatpush1.bf16.msra.mxu0 %v856
    %863 = vmatprep.subr.bf16.mxu0 0
    %864 = vmatpush1.bf16.msra.mxu0 0
    %865 = vmatprep.subr.bf16.mxu0 0
    %866 = vmatpush1.bf16.msra.mxu0 0
    %867 = vmatprep.subr.bf16.mxu0 0
    %868 = vmatpush1.bf16.msra.mxu0 0
    %869 = vmatprep.subr.bf16.mxu0 0
    %870 = vmatpush1.bf16.msra.mxu0 0
    %871 = vmatprep.subr.bf16.mxu0 0
    %872 = vmatpush1.bf16.msra.mxu0 0
    %873 = vmatprep.subr.bf16.mxu0 0
    %874 = vmatpush1.bf16.msra.mxu0 0
    %875 = vmatprep.subr.bf16.mxu0 0
    %876 = vmatpush1.bf16.msra.mxu0 0
    %877 = vmatprep.subr.bf16.mxu0 0
    %878 = vmatpush1.bf16.msra.mxu0 0
    %879 = vmatprep.subr.bf16.mxu0 0
    %880 = vmatpush1.bf16.msra.mxu0 0
    %881 = vmatprep.subr.bf16.mxu0 0
    %882 = vmatpush1.bf16.msra.mxu0 0
    %883 = vmatprep.subr.bf16.mxu0 0
    %884 = vmatpush1.bf16.msra.mxu0 0
    %885 = vmatprep.subr.bf16.mxu0 0
    %886 = vmatpush1.bf16.msra.mxu0 0
    %887 = vmatprep.subr.bf16.mxu0 0
    %888 = vmatpush1.bf16.msra.mxu0 0
    %889 = vmatprep.subr.bf16.mxu0 0
    %890 = vmatpush1.bf16.msra.mxu0 0
    %891 = vmatprep.subr.bf16.mxu0 0
    %892 = vmatpush1.bf16.msra.mxu0 0
    %893 = vmatprep.mubr.bf16.mxu0 0
    %894 = vmatmul.mubr.bf16.gmra.mrb[0].mxu0 %v859
    %v895 = vpop.f32.mrb[0].mxu0
    %v896 = vadd.f32 0.0, %v895
    %v897 = vpop.f32.mrb[0].mxu0
    %v898 = vpop.f32.mrb[0].mxu0
    %v899 = vadd.f32 0.0, %v898
    %v900 = vpop.f32.mrb[0].mxu0
    %901 = vdwg.mxu0
    %902 = vrot.lane.b32.xlu0 %v260, 64
    %v903 = vpop.permute.xlu0 %902
    %v906 = vsel %vm670, %v848, 0
    %908 = vmatprep.subr.bf16.mxu0 0
    %909 = vmatpush1.bf16.msra.mxu0 %v903
    %910 = vmatprep.subr.bf16.mxu0 0
    %911 = vmatpush1.bf16.msra.mxu0 0
    %912 = vmatprep.subr.bf16.mxu0 0
    %913 = vmatpush1.bf16.msra.mxu0 0
    %914 = vmatprep.subr.bf16.mxu0 0
    %915 = vmatpush1.bf16.msra.mxu0 0
    %916 = vmatprep.subr.bf16.mxu0 0
    %917 = vmatpush1.bf16.msra.mxu0 0
    %918 = vmatprep.subr.bf16.mxu0 0
    %919 = vmatpush1.bf16.msra.mxu0 0
    %920 = vmatprep.subr.bf16.mxu0 0
    %921 = vmatpush1.bf16.msra.mxu0 0
    %922 = vmatprep.subr.bf16.mxu0 0
    %923 = vmatpush1.bf16.msra.mxu0 0
    %924 = vmatprep.subr.bf16.mxu0 0
    %925 = vmatpush1.bf16.msra.mxu0 0
    %926 = vmatprep.subr.bf16.mxu0 0
    %927 = vmatpush1.bf16.msra.mxu0 0
    %928 = vmatprep.subr.bf16.mxu0 0
    %929 = vmatpush1.bf16.msra.mxu0 0
    %930 = vmatprep.subr.bf16.mxu0 0
    %931 = vmatpush1.bf16.msra.mxu0 0
    %932 = vmatprep.subr.bf16.mxu0 0
    %933 = vmatpush1.bf16.msra.mxu0 0
    %934 = vmatprep.subr.bf16.mxu0 0
    %935 = vmatpush1.bf16.msra.mxu0 0
    %936 = vmatprep.subr.bf16.mxu0 0
    %937 = vmatpush1.bf16.msra.mxu0 0
    %938 = vmatprep.subr.bf16.mxu0 0
    %939 = vmatpush1.bf16.msra.mxu0 0
    %940 = vmatprep.mubr.bf16.mxu0 0
    %941 = vmatmul.mubr.bf16.gmra.mrb[0].mxu0 %v906
    %v942 = vpop.f32.mrb[0].mxu0
    %v943 = vadd.f32 0.0, %v942
    %v944 = vpop.f32.mrb[0].mxu0
    %v945 = vpop.f32.mrb[0].mxu0
    %v946 = vadd.f32 0.0, %v945
    %v947 = vpop.f32.mrb[0].mxu0
    %948 = vdwg.mxu0
    %949 = vrot.lane.b32.xlu0 %v261, 64
    %v950 = vpop.permute.xlu0 %949
    %v953 = vsel %vm670, %v849, 0
    %955 = vmatprep.subr.bf16.mxu0 0
    %956 = vmatpush1.bf16.msra.mxu0 %v950
    %957 = vmatprep.subr.bf16.mxu0 0
    %958 = vmatpush1.bf16.msra.mxu0 0
    %959 = vmatprep.subr.bf16.mxu0 0
    %960 = vmatpush1.bf16.msra.mxu0 0
    %961 = vmatprep.subr.bf16.mxu0 0
    %962 = vmatpush1.bf16.msra.mxu0 0
    %963 = vmatprep.subr.bf16.mxu0 0
    %964 = vmatpush1.bf16.msra.mxu0 0
    %965 = vmatprep.subr.bf16.mxu0 0
    %966 = vmatpush1.bf16.msra.mxu0 0
    %967 = vmatprep.subr.bf16.mxu0 0
    %968 = vmatpush1.bf16.msra.mxu0 0
    %969 = vmatprep.subr.bf16.mxu0 0
    %970 = vmatpush1.bf16.msra.mxu0 0
    %971 = vmatprep.subr.bf16.mxu0 0
    %972 = vmatpush1.bf16.msra.mxu0 0
    %973 = vmatprep.subr.bf16.mxu0 0
    %974 = vmatpush1.bf16.msra.mxu0 0
    %975 = vmatprep.subr.bf16.mxu0 0
    %976 = vmatpush1.bf16.msra.mxu0 0
    %977 = vmatprep.subr.bf16.mxu0 0
    %978 = vmatpush1.bf16.msra.mxu0 0
    %979 = vmatprep.subr.bf16.mxu0 0
    %980 = vmatpush1.bf16.msra.mxu0 0
    %981 = vmatprep.subr.bf16.mxu0 0
    %982 = vmatpush1.bf16.msra.mxu0 0
    %983 = vmatprep.subr.bf16.mxu0 0
    %984 = vmatpush1.bf16.msra.mxu0 0
    %985 = vmatprep.subr.bf16.mxu0 0
    %986 = vmatpush1.bf16.msra.mxu0 0
    %987 = vmatprep.mubr.bf16.mxu0 0
    %988 = vmatmul.mubr.bf16.gmra.mrb[0].mxu0 %v953
    %v989 = vpop.f32.mrb[0].mxu0
    %v990 = vadd.f32 0.0, %v989
    %v991 = vpop.f32.mrb[0].mxu0
    %v992 = vpop.f32.mrb[0].mxu0
    %v993 = vadd.f32 0.0, %v992
    %v994 = vpop.f32.mrb[0].mxu0
    %995 = vdwg.mxu0
    %996 = vrot.lane.b32.xlu0 %v262, 64
    %v997 = vpop.permute.xlu0 %996
    %v1000 = vsel %vm670, %v850, 0
    %1002 = vmatprep.subr.bf16.mxu0 0
    %1003 = vmatpush1.bf16.msra.mxu0 %v997
    %1004 = vmatprep.subr.bf16.mxu0 0
    %1005 = vmatpush1.bf16.msra.mxu0 0
    %1006 = vmatprep.subr.bf16.mxu0 0
    %1007 = vmatpush1.bf16.msra.mxu0 0
    %1008 = vmatprep.subr.bf16.mxu0 0
    %1009 = vmatpush1.bf16.msra.mxu0 0
    %1010 = vmatprep.subr.bf16.mxu0 0
    %1011 = vmatpush1.bf16.msra.mxu0 0
    %1012 = vmatprep.subr.bf16.mxu0 0
    %1013 = vmatpush1.bf16.msra.mxu0 0
    %1014 = vmatprep.subr.bf16.mxu0 0
    %1015 = vmatpush1.bf16.msra.mxu0 0
    %1016 = vmatprep.subr.bf16.mxu0 0
    %1017 = vmatpush1.bf16.msra.mxu0 0
    %1018 = vmatprep.subr.bf16.mxu0 0
    %1019 = vmatpush1.bf16.msra.mxu0 0
    %1020 = vmatprep.subr.bf16.mxu0 0
    %1021 = vmatpush1.bf16.msra.mxu0 0
    %1022 = vmatprep.subr.bf16.mxu0 0
    %1023 = vmatpush1.bf16.msra.mxu0 0
    %1024 = vmatprep.subr.bf16.mxu0 0
    %1025 = vmatpush1.bf16.msra.mxu0 0
    %1026 = vmatprep.subr.bf16.mxu0 0
    %1027 = vmatpush1.bf16.msra.mxu0 0
    %1028 = vmatprep.subr.bf16.mxu0 0
    %1029 = vmatpush1.bf16.msra.mxu0 0
    %1030 = vmatprep.subr.bf16.mxu0 0
    %1031 = vmatpush1.bf16.msra.mxu0 0
    %1032 = vmatprep.subr.bf16.mxu0 0
    %1033 = vmatpush1.bf16.msra.mxu0 0
    %1034 = vmatprep.mubr.bf16.mxu0 0
    %1035 = vmatmul.mubr.bf16.gmra.mrb[0].mxu0 %v1000
    %v1036 = vpop.f32.mrb[0].mxu0
    %v1037 = vadd.f32 0.0, %v1036
    %v1038 = vpop.f32.mrb[0].mxu0
    %v1039 = vpop.f32.mrb[0].mxu0
    %v1040 = vadd.f32 0.0, %v1039
    %v1041 = vpop.f32.mrb[0].mxu0
    %1042 = vdwg.mxu0
    %1043 = vrot.lane.b32.xlu0 %v263, 64
    %v1044 = vpop.permute.xlu0 %1043
    %v1047 = vsel %vm670, %v851, 0
    %1049 = vmatprep.subr.bf16.mxu0 0
    %1050 = vmatpush1.bf16.msra.mxu0 %v1044
    %1051 = vmatprep.subr.bf16.mxu0 0
    %1052 = vmatpush1.bf16.msra.mxu0 0
    %1053 = vmatprep.subr.bf16.mxu0 0
    %1054 = vmatpush1.bf16.msra.mxu0 0
    %1055 = vmatprep.subr.bf16.mxu0 0
    %1056 = vmatpush1.bf16.msra.mxu0 0
    %1057 = vmatprep.subr.bf16.mxu0 0
    %1058 = vmatpush1.bf16.msra.mxu0 0
    %1059 = vmatprep.subr.bf16.mxu0 0
    %1060 = vmatpush1.bf16.msra.mxu0 0
    %1061 = vmatprep.subr.bf16.mxu0 0
    %1062 = vmatpush1.bf16.msra.mxu0 0
    %1063 = vmatprep.subr.bf16.mxu0 0
    %1064 = vmatpush1.bf16.msra.mxu0 0
    %1065 = vmatprep.subr.bf16.mxu0 0
    %1066 = vmatpush1.bf16.msra.mxu0 0
    %1067 = vmatprep.subr.bf16.mxu0 0
    %1068 = vmatpush1.bf16.msra.mxu0 0
    %1069 = vmatprep.subr.bf16.mxu0 0
    %1070 = vmatpush1.bf16.msra.mxu0 0
    %1071 = vmatprep.subr.bf16.mxu0 0
    %1072 = vmatpush1.bf16.msra.mxu0 0
    %1073 = vmatprep.subr.bf16.mxu0 0
    %1074 = vmatpush1.bf16.msra.mxu0 0
    %1075 = vmatprep.subr.bf16.mxu0 0
    %1076 = vmatpush1.bf16.msra.mxu0 0
    %1077 = vmatprep.subr.bf16.mxu0 0
    %1078 = vmatpush1.bf16.msra.mxu0 0
    %1079 = vmatprep.subr.bf16.mxu0 0
    %1080 = vmatpush1.bf16.msra.mxu0 0
    %1081 = vmatprep.mubr.bf16.mxu0 0
    %1082 = vmatmul.mubr.bf16.gmra.mrb[0].mxu0 %v1047
    %v1083 = vpop.f32.mrb[0].mxu0
    %v1084 = vadd.f32 0.0, %v1083
    %v1085 = vpop.f32.mrb[0].mxu0
    %v1086 = vpop.f32.mrb[0].mxu0
    %v1087 = vadd.f32 0.0, %v1086
    %v1088 = vpop.f32.mrb[0].mxu0
    %1089 = vdwg.mxu0
    %1090 = vrot.lane.b32.xlu0 %v264, 64
    %v1091 = vpop.permute.xlu0 %1090
    %v1094 = vsel %vm670, %v852, 0
    %1096 = vmatprep.subr.bf16.mxu0 0
    %1097 = vmatpush1.bf16.msra.mxu0 %v1091
    %1098 = vmatprep.subr.bf16.mxu0 0
    %1099 = vmatpush1.bf16.msra.mxu0 0
    %1100 = vmatprep.subr.bf16.mxu0 0
    %1101 = vmatpush1.bf16.msra.mxu0 0
    %1102 = vmatprep.subr.bf16.mxu0 0
    %1103 = vmatpush1.bf16.msra.mxu0 0
    %1104 = vmatprep.subr.bf16.mxu0 0
    %1105 = vmatpush1.bf16.msra.mxu0 0
    %1106 = vmatprep.subr.bf16.mxu0 0
    %1107 = vmatpush1.bf16.msra.mxu0 0
    %1108 = vmatprep.subr.bf16.mxu0 0
    %1109 = vmatpush1.bf16.msra.mxu0 0
    %1110 = vmatprep.subr.bf16.mxu0 0
    %1111 = vmatpush1.bf16.msra.mxu0 0
    %1112 = vmatprep.subr.bf16.mxu0 0
    %1113 = vmatpush1.bf16.msra.mxu0 0
    %1114 = vmatprep.subr.bf16.mxu0 0
    %1115 = vmatpush1.bf16.msra.mxu0 0
    %1116 = vmatprep.subr.bf16.mxu0 0
    %1117 = vmatpush1.bf16.msra.mxu0 0
    %1118 = vmatprep.subr.bf16.mxu0 0
    %1119 = vmatpush1.bf16.msra.mxu0 0
    %1120 = vmatprep.subr.bf16.mxu0 0
    %1121 = vmatpush1.bf16.msra.mxu0 0
    %1122 = vmatprep.subr.bf16.mxu0 0
    %1123 = vmatpush1.bf16.msra.mxu0 0
    %1124 = vmatprep.subr.bf16.mxu0 0
    %1125 = vmatpush1.bf16.msra.mxu0 0
    %1126 = vmatprep.subr.bf16.mxu0 0
    %1127 = vmatpush1.bf16.msra.mxu0 0
    %1128 = vmatprep.mubr.bf16.mxu0 0
    %1129 = vmatmul.mubr.bf16.gmra.mrb[0].mxu0 %v1094
    %v1130 = vpop.f32.mrb[0].mxu0
    %v1131 = vadd.f32 0.0, %v1130
    %v1132 = vpop.f32.mrb[0].mxu0
    %v1133 = vpop.f32.mrb[0].mxu0
    %v1134 = vadd.f32 0.0, %v1133
    %v1135 = vpop.f32.mrb[0].mxu0
    %1136 = vdwg.mxu0
    %1137 = vrot.lane.b32.xlu0 %v265, 64
    %v1138 = vpop.permute.xlu0 %1137
    %v1141 = vsel %vm670, %v853, 0
    %1143 = vmatprep.subr.bf16.mxu0 0
    %1144 = vmatpush1.bf16.msra.mxu0 %v1138
    %1145 = vmatprep.subr.bf16.mxu0 0
    %1146 = vmatpush1.bf16.msra.mxu0 0
    %1147 = vmatprep.subr.bf16.mxu0 0
    %1148 = vmatpush1.bf16.msra.mxu0 0
    %1149 = vmatprep.subr.bf16.mxu0 0
    %1150 = vmatpush1.bf16.msra.mxu0 0
    %1151 = vmatprep.subr.bf16.mxu0 0
    %1152 = vmatpush1.bf16.msra.mxu0 0
    %1153 = vmatprep.subr.bf16.mxu0 0
    %1154 = vmatpush1.bf16.msra.mxu0 0
    %1155 = vmatprep.subr.bf16.mxu0 0
    %1156 = vmatpush1.bf16.msra.mxu0 0
    %1157 = vmatprep.subr.bf16.mxu0 0
    %1158 = vmatpush1.bf16.msra.mxu0 0
    %1159 = vmatprep.subr.bf16.mxu0 0
    %1160 = vmatpush1.bf16.msra.mxu0 0
    %1161 = vmatprep.subr.bf16.mxu0 0
    %1162 = vmatpush1.bf16.msra.mxu0 0
    %1163 = vmatprep.subr.bf16.mxu0 0
    %1164 = vmatpush1.bf16.msra.mxu0 0
    %1165 = vmatprep.subr.bf16.mxu0 0
    %1166 = vmatpush1.bf16.msra.mxu0 0
    %1167 = vmatprep.subr.bf16.mxu0 0
    %1168 = vmatpush1.bf16.msra.mxu0 0
    %1169 = vmatprep.subr.bf16.mxu0 0
    %1170 = vmatpush1.bf16.msra.mxu0 0
    %1171 = vmatprep.subr.bf16.mxu0 0
    %1172 = vmatpush1.bf16.msra.mxu0 0
    %1173 = vmatprep.subr.bf16.mxu0 0
    %1174 = vmatpush1.bf16.msra.mxu0 0
    %1175 = vmatprep.mubr.bf16.mxu0 0
    %1176 = vmatmul.mubr.bf16.gmra.mrb[0].mxu0 %v1141
    %v1177 = vpop.f32.mrb[0].mxu0
    %v1178 = vadd.f32 0.0, %v1177
    %v1179 = vpop.f32.mrb[0].mxu0
    %v1180 = vpop.f32.mrb[0].mxu0
    %v1181 = vadd.f32 0.0, %v1180
    %v1182 = vpop.f32.mrb[0].mxu0
    %1183 = vdwg.mxu0
    %1184 = vrot.lane.b32.xlu0 %v266, 64
    %v1185 = vpop.permute.xlu0 %1184
    %v1188 = vsel %vm670, %v854, 0
    %1190 = vmatprep.subr.bf16.mxu0 0
    %1191 = vmatpush1.bf16.msra.mxu0 %v1185
    %1192 = vmatprep.subr.bf16.mxu0 0
    %1193 = vmatpush1.bf16.msra.mxu0 0
    %1194 = vmatprep.subr.bf16.mxu0 0
    %1195 = vmatpush1.bf16.msra.mxu0 0
    %1196 = vmatprep.subr.bf16.mxu0 0
    %1197 = vmatpush1.bf16.msra.mxu0 0
    %1198 = vmatprep.subr.bf16.mxu0 0
    %1199 = vmatpush1.bf16.msra.mxu0 0
    %1200 = vmatprep.subr.bf16.mxu0 0
    %1201 = vmatpush1.bf16.msra.mxu0 0
    %1202 = vmatprep.subr.bf16.mxu0 0
    %1203 = vmatpush1.bf16.msra.mxu0 0
    %1204 = vmatprep.subr.bf16.mxu0 0
    %1205 = vmatpush1.bf16.msra.mxu0 0
    %1206 = vmatprep.subr.bf16.mxu0 0
    %1207 = vmatpush1.bf16.msra.mxu0 0
    %1208 = vmatprep.subr.bf16.mxu0 0
    %1209 = vmatpush1.bf16.msra.mxu0 0
    %1210 = vmatprep.subr.bf16.mxu0 0
    %1211 = vmatpush1.bf16.msra.mxu0 0
    %1212 = vmatprep.subr.bf16.mxu0 0
    %1213 = vmatpush1.bf16.msra.mxu0 0
    %1214 = vmatprep.subr.bf16.mxu0 0
    %1215 = vmatpush1.bf16.msra.mxu0 0
    %1216 = vmatprep.subr.bf16.mxu0 0
    %1217 = vmatpush1.bf16.msra.mxu0 0
    %1218 = vmatprep.subr.bf16.mxu0 0
    %1219 = vmatpush1.bf16.msra.mxu0 0
    %1220 = vmatprep.subr.bf16.mxu0 0
    %1221 = vmatpush1.bf16.msra.mxu0 0
    %1222 = vmatprep.mubr.bf16.mxu0 0
    %1223 = vmatmul.mubr.bf16.gmra.mrb[0].mxu0 %v1188
    %v1224 = vpop.f32.mrb[0].mxu0
    %v1225 = vadd.f32 0.0, %v1224
    %v1226 = vpop.f32.mrb[0].mxu0
    %v1227 = vpop.f32.mrb[0].mxu0
    %v1228 = vadd.f32 0.0, %v1227
    %v1229 = vpop.f32.mrb[0].mxu0
    %1230 = vdwg.mxu0
    %1231 = vst.msk [vmem:[#allocation3] sm:$0xff] %vm272, %v896
    %1232 = vst.msk [vmem:[#allocation3 + $0x8] sm:$0xff] %vm272, %v899
    %1233 = vst.msk [vmem:[#allocation3 + $0x10] sm:$0xff] %vm272, %v943
    %1234 = vst.msk [vmem:[#allocation3 + $0x18] sm:$0xff] %vm272, %v946
    %1235 = vst.msk [vmem:[#allocation3 + $0x20] sm:$0xff] %vm272, %v990
    %1236 = vst.msk [vmem:[#allocation3 + $0x28] sm:$0xff] %vm272, %v993
    %1237 = vst.msk [vmem:[#allocation3 + $0x30] sm:$0xff] %vm272, %v1037
    %1238 = vst.msk [vmem:[#allocation3 + $0x38] sm:$0xff] %vm272, %v1040
    %1239 = vst.msk [vmem:[#allocation3 + $0x40] sm:$0xff] %vm272, %v1084
    %1240 = vst.msk [vmem:[#allocation3 + $0x48] sm:$0xff] %vm272, %v1087
    %1241 = vst.msk [vmem:[#allocation3 + $0x50] sm:$0xff] %vm272, %v1131
    %1242 = vst.msk [vmem:[#allocation3 + $0x58] sm:$0xff] %vm272, %v1134
    %1243 = vst.msk [vmem:[#allocation3 + $0x60] sm:$0xff] %vm272, %v1178
    %1244 = vst.msk [vmem:[#allocation3 + $0x68] sm:$0xff] %vm272, %v1181
    %1245 = vst.msk [vmem:[#allocation3 + $0x70] sm:$0xff] %vm272, %v1225
    %1246 = vst.msk [vmem:[#allocation3 + $0x78] sm:$0xff] %vm272, %v1228
    %v1247 = vld [vmem:[#allocation2] sm:$0xff]
    %v1248 = vld [vmem:[#allocation2 + $0x8] sm:$0xff]
    %v1249 = vld [vmem:[#allocation2 + $0x10] sm:$0xff]
    %v1250 = vld [vmem:[#allocation2 + $0x18] sm:$0xff]
    %v1251 = vld [vmem:[#allocation2 + $0x20] sm:$0xff]
    %v1252 = vld [vmem:[#allocation2 + $0x28] sm:$0xff]
    %v1253 = vld [vmem:[#allocation2 + $0x30] sm:$0xff]
    %v1254 = vld [vmem:[#allocation2 + $0x38] sm:$0xff]
    %v1255 = vld [vmem:[#allocation2 + $0x40] sm:$0xff]
    %v1256 = vld [vmem:[#allocation2 + $0x48] sm:$0xff]
    %v1257 = vld [vmem:[#allocation2 + $0x50] sm:$0xff]
    %v1258 = vld [vmem:[#allocation2 + $0x58] sm:$0xff]
    %v1259 = vld [vmem:[#allocation2 + $0x60] sm:$0xff]
    %v1260 = vld [vmem:[#allocation2 + $0x68] sm:$0xff]
    %v1261 = vld [vmem:[#allocation2 + $0x70] sm:$0xff]
    %v1262 = vld [vmem:[#allocation2 + $0x78] sm:$0xff]
    %v1263 = vpack.c.bf16 %v1248, %v1247
    %v1264 = vpack.c.bf16 %v1250, %v1249
    %v1265 = vpack.c.bf16 %v1252, %v1251
    %v1266 = vpack.c.bf16 %v1254, %v1253
    %v1267 = vpack.c.bf16 %v1256, %v1255
    %v1268 = vpack.c.bf16 %v1258, %v1257
    %v1269 = vpack.c.bf16 %v1260, %v1259
    %v1270 = vpack.c.bf16 %v1262, %v1261
    %s1271 = scalar_lea.vmem %s5, 16
    %v1272 = vld [vmem:[%s1271] sm:$0xff]
    %v1273 = vld [vmem:[%s1271 + $0x8] sm:$0xff]
    %1275 = vrot.lane.b32.xlu0 %v1263, 120
    %v1276 = vpop.permute.xlu0 %1275
    %1277 = vrot.lane.b32.xlu0 %v1263, 88
    %v1278 = vpop.permute.xlu0 %1277
    %v1280 = vsel %vm272, %v1276, 0
    %v1283 = vsel %vm272, %v1278, 0
    %1285 = vmatprep.subr.bf16.mxu0 0
    %1286 = vmatpush1.bf16.xpose.msra.mxu0 %v1283
    %1287 = vmatprep.subr.bf16.mxu0 0
    %1288 = vmatpush1.bf16.xpose.msra.mxu0 0
    %1289 = vmatprep.subr.bf16.mxu0 0
    %1290 = vmatpush1.bf16.xpose.msra.mxu0 0
    %1291 = vmatprep.subr.bf16.mxu0 0
    %1292 = vmatpush1.bf16.xpose.msra.mxu0 0
    %1293 = vmatprep.subr.bf16.mxu0 0
    %1294 = vmatpush1.bf16.xpose.msra.mxu0 0
    %1295 = vmatprep.subr.bf16.mxu0 0
    %1296 = vmatpush1.bf16.xpose.msra.mxu0 0
    %1297 = vmatprep.subr.bf16.mxu0 0
    %1298 = vmatpush1.bf16.xpose.msra.mxu0 0
    %1299 = vmatprep.subr.bf16.mxu0 0
    %1300 = vmatpush1.bf16.xpose.msra.mxu0 0
    %1301 = vmatprep.subr.bf16.mxu0 0
    %1302 = vmatpush1.bf16.xpose.msra.mxu0 0
    %1303 = vmatprep.subr.bf16.mxu0 0
    %1304 = vmatpush1.bf16.xpose.msra.mxu0 0
    %1305 = vmatprep.subr.bf16.mxu0 0
    %1306 = vmatpush1.bf16.xpose.msra.mxu0 0
    %1307 = vmatprep.subr.bf16.mxu0 0
    %1308 = vmatpush1.bf16.xpose.msra.mxu0 0
    %1309 = vmatprep.subr.bf16.mxu0 0
    %1310 = vmatpush1.bf16.xpose.msra.mxu0 0
    %1311 = vmatprep.subr.bf16.mxu0 0
    %1312 = vmatpush1.bf16.xpose.msra.mxu0 0
    %1313 = vmatprep.subr.bf16.mxu0 0
    %1314 = vmatpush1.bf16.xpose.msra.mxu0 0
    %1315 = vmatprep.subr.bf16.mxu0 0
    %1316 = vmatpush1.bf16.xpose.msra.mxu0 0
    %1317 = vmatprep.mubr.bf16.mxu0 0
    %1318 = vmatmul.mubr.bf16.gmra.mrb[0].mxu0 %v1280
    %v1319 = vpop.f32.mrb[0].mxu0
    %v1320 = vadd.f32 %v1272, %v1319
    %v1321 = vpop.f32.mrb[0].mxu0
    %v1322 = vpop.f32.mrb[0].mxu0
    %v1323 = vadd.f32 %v1273, %v1322
    %v1324 = vpop.f32.mrb[0].mxu0
    %1325 = vdwg.mxu0
    %1327 = vrot.lane.b32.xlu0 %v1264, 120
    %v1328 = vpop.permute.xlu0 %1327
    %1329 = vrot.lane.b32.xlu0 %v1264, 88
    %v1330 = vpop.permute.xlu0 %1329
    %v1332 = vsel %vm272, %v1328, 0
    %v1335 = vsel %vm272, %v1330, 0
    %1337 = vmatprep.subr.bf16.mxu0 0
    %1338 = vmatpush1.bf16.xpose.msra.mxu0 %v1335
    %1339 = vmatprep.subr.bf16.mxu0 0
    %1340 = vmatpush1.bf16.xpose.msra.mxu0 0
    %1341 = vmatprep.subr.bf16.mxu0 0
    %1342 = vmatpush1.bf16.xpose.msra.mxu0 0
    %1343 = vmatprep.subr.bf16.mxu0 0
    %1344 = vmatpush1.bf16.xpose.msra.mxu0 0
    %1345 = vmatprep.subr.bf16.mxu0 0
    %1346 = vmatpush1.bf16.xpose.msra.mxu0 0
    %1347 = vmatprep.subr.bf16.mxu0 0
    %1348 = vmatpush1.bf16.xpose.msra.mxu0 0
    %1349 = vmatprep.subr.bf16.mxu0 0
    %1350 = vmatpush1.bf16.xpose.msra.mxu0 0
    %1351 = vmatprep.subr.bf16.mxu0 0
    %1352 = vmatpush1.bf16.xpose.msra.mxu0 0
    %1353 = vmatprep.subr.bf16.mxu0 0
    %1354 = vmatpush1.bf16.xpose.msra.mxu0 0
    %1355 = vmatprep.subr.bf16.mxu0 0
    %1356 = vmatpush1.bf16.xpose.msra.mxu0 0
    %1357 = vmatprep.subr.bf16.mxu0 0
    %1358 = vmatpush1.bf16.xpose.msra.mxu0 0
    %1359 = vmatprep.subr.bf16.mxu0 0
    %1360 = vmatpush1.bf16.xpose.msra.mxu0 0
    %1361 = vmatprep.subr.bf16.mxu0 0
    %1362 = vmatpush1.bf16.xpose.msra.mxu0 0
    %1363 = vmatprep.subr.bf16.mxu0 0
    %1364 = vmatpush1.bf16.xpose.msra.mxu0 0
    %1365 = vmatprep.subr.bf16.mxu0 0
    %1366 = vmatpush1.bf16.xpose.msra.mxu0 0
    %1367 = vmatprep.subr.bf16.mxu0 0
    %1368 = vmatpush1.bf16.xpose.msra.mxu0 0
    %1369 = vmatprep.mubr.bf16.mxu0 0
    %1370 = vmatmul.mubr.bf16.gmra.mrb[0].mxu0 %v1332
    %v1371 = vpop.f32.mrb[0].mxu0
    %v1372 = vadd.f32 %v1272, %v1371
    %v1373 = vpop.f32.mrb[0].mxu0
    %v1374 = vpop.f32.mrb[0].mxu0
    %v1375 = vadd.f32 %v1273, %v1374
    %v1376 = vpop.f32.mrb[0].mxu0
    %1377 = vdwg.mxu0
    %1379 = vrot.lane.b32.xlu0 %v1265, 120
    %v1380 = vpop.permute.xlu0 %1379
    %1381 = vrot.lane.b32.xlu0 %v1265, 88
    %v1382 = vpop.permute.xlu0 %1381
    %v1384 = vsel %vm272, %v1380, 0
    %v1387 = vsel %vm272, %v1382, 0
    %1389 = vmatprep.subr.bf16.mxu0 0
    %1390 = vmatpush1.bf16.xpose.msra.mxu0 %v1387
    %1391 = vmatprep.subr.bf16.mxu0 0
    %1392 = vmatpush1.bf16.xpose.msra.mxu0 0
    %1393 = vmatprep.subr.bf16.mxu0 0
    %1394 = vmatpush1.bf16.xpose.msra.mxu0 0
    %1395 = vmatprep.subr.bf16.mxu0 0
    %1396 = vmatpush1.bf16.xpose.msra.mxu0 0
    %1397 = vmatprep.subr.bf16.mxu0 0
    %1398 = vmatpush1.bf16.xpose.msra.mxu0 0
    %1399 = vmatprep.subr.bf16.mxu0 0
    %1400 = vmatpush1.bf16.xpose.msra.mxu0 0
    %1401 = vmatprep.subr.bf16.mxu0 0
    %1402 = vmatpush1.bf16.xpose.msra.mxu0 0
    %1403 = vmatprep.subr.bf16.mxu0 0
    %1404 = vmatpush1.bf16.xpose.msra.mxu0 0
    %1405 = vmatprep.subr.bf16.mxu0 0
    %1406 = vmatpush1.bf16.xpose.msra.mxu0 0
    %1407 = vmatprep.subr.bf16.mxu0 0
    %1408 = vmatpush1.bf16.xpose.msra.mxu0 0
    %1409 = vmatprep.subr.bf16.mxu0 0
    %1410 = vmatpush1.bf16.xpose.msra.mxu0 0
    %1411 = vmatprep.subr.bf16.mxu0 0
    %1412 = vmatpush1.bf16.xpose.msra.mxu0 0
    %1413 = vmatprep.subr.bf16.mxu0 0
    %1414 = vmatpush1.bf16.xpose.msra.mxu0 0
    %1415 = vmatprep.subr.bf16.mxu0 0
    %1416 = vmatpush1.bf16.xpose.msra.mxu0 0
    %1417 = vmatprep.subr.bf16.mxu0 0
    %1418 = vmatpush1.bf16.xpose.msra.mxu0 0
    %1419 = vmatprep.subr.bf16.mxu0 0
    %1420 = vmatpush1.bf16.xpose.msra.mxu0 0
    %1421 = vmatprep.mubr.bf16.mxu0 0
    %1422 = vmatmul.mubr.bf16.gmra.mrb[0].mxu0 %v1384
    %v1423 = vpop.f32.mrb[0].mxu0
    %v1424 = vadd.f32 %v1272, %v1423
    %v1425 = vpop.f32.mrb[0].mxu0
    %v1426 = vpop.f32.mrb[0].mxu0
    %v1427 = vadd.f32 %v1273, %v1426
    %v1428 = vpop.f32.mrb[0].mxu0
    %1429 = vdwg.mxu0
    %1431 = vrot.lane.b32.xlu0 %v1266, 120
    %v1432 = vpop.permute.xlu0 %1431
    %1433 = vrot.lane.b32.xlu0 %v1266, 88
    %v1434 = vpop.permute.xlu0 %1433
    %v1436 = vsel %vm272, %v1432, 0
    %v1439 = vsel %vm272, %v1434, 0
    %1441 = vmatprep.subr.bf16.mxu0 0
    %1442 = vmatpush1.bf16.xpose.msra.mxu0 %v1439
    %1443 = vmatprep.subr.bf16.mxu0 0
    %1444 = vmatpush1.bf16.xpose.msra.mxu0 0
    %1445 = vmatprep.subr.bf16.mxu0 0
    %1446 = vmatpush1.bf16.xpose.msra.mxu0 0
    %1447 = vmatprep.subr.bf16.mxu0 0
    %1448 = vmatpush1.bf16.xpose.msra.mxu0 0
    %1449 = vmatprep.subr.bf16.mxu0 0
    %1450 = vmatpush1.bf16.xpose.msra.mxu0 0
    %1451 = vmatprep.subr.bf16.mxu0 0
    %1452 = vmatpush1.bf16.xpose.msra.mxu0 0
    %1453 = vmatprep.subr.bf16.mxu0 0
    %1454 = vmatpush1.bf16.xpose.msra.mxu0 0
    %1455 = vmatprep.subr.bf16.mxu0 0
    %1456 = vmatpush1.bf16.xpose.msra.mxu0 0
    %1457 = vmatprep.subr.bf16.mxu0 0
    %1458 = vmatpush1.bf16.xpose.msra.mxu0 0
    %1459 = vmatprep.subr.bf16.mxu0 0
    %1460 = vmatpush1.bf16.xpose.msra.mxu0 0
    %1461 = vmatprep.subr.bf16.mxu0 0
    %1462 = vmatpush1.bf16.xpose.msra.mxu0 0
    %1463 = vmatprep.subr.bf16.mxu0 0
    %1464 = vmatpush1.bf16.xpose.msra.mxu0 0
    %1465 = vmatprep.subr.bf16.mxu0 0
    %1466 = vmatpush1.bf16.xpose.msra.mxu0 0
    %1467 = vmatprep.subr.bf16.mxu0 0
    %1468 = vmatpush1.bf16.xpose.msra.mxu0 0
    %1469 = vmatprep.subr.bf16.mxu0 0
    %1470 = vmatpush1.bf16.xpose.msra.mxu0 0
    %1471 = vmatprep.subr.bf16.mxu0 0
    %1472 = vmatpush1.bf16.xpose.msra.mxu0 0
    %1473 = vmatprep.mubr.bf16.mxu0 0
    %1474 = vmatmul.mubr.bf16.gmra.mrb[0].mxu0 %v1436
    %v1475 = vpop.f32.mrb[0].mxu0
    %v1476 = vadd.f32 %v1272, %v1475
    %v1477 = vpop.f32.mrb[0].mxu0
    %v1478 = vpop.f32.mrb[0].mxu0
    %v1479 = vadd.f32 %v1273, %v1478
    %v1480 = vpop.f32.mrb[0].mxu0
    %1481 = vdwg.mxu0
    %1483 = vrot.lane.b32.xlu0 %v1267, 120
    %v1484 = vpop.permute.xlu0 %1483
    %1485 = vrot.lane.b32.xlu0 %v1267, 88
    %v1486 = vpop.permute.xlu0 %1485
    %v1488 = vsel %vm272, %v1484, 0
    %v1491 = vsel %vm272, %v1486, 0
    %1493 = vmatprep.subr.bf16.mxu0 0
    %1494 = vmatpush1.bf16.xpose.msra.mxu0 %v1491
    %1495 = vmatprep.subr.bf16.mxu0 0
    %1496 = vmatpush1.bf16.xpose.msra.mxu0 0
    %1497 = vmatprep.subr.bf16.mxu0 0
    %1498 = vmatpush1.bf16.xpose.msra.mxu0 0
    %1499 = vmatprep.subr.bf16.mxu0 0
    %1500 = vmatpush1.bf16.xpose.msra.mxu0 0
    %1501 = vmatprep.subr.bf16.mxu0 0
    %1502 = vmatpush1.bf16.xpose.msra.mxu0 0
    %1503 = vmatprep.subr.bf16.mxu0 0
    %1504 = vmatpush1.bf16.xpose.msra.mxu0 0
    %1505 = vmatprep.subr.bf16.mxu0 0
    %1506 = vmatpush1.bf16.xpose.msra.mxu0 0
    %1507 = vmatprep.subr.bf16.mxu0 0
    %1508 = vmatpush1.bf16.xpose.msra.mxu0 0
    %1509 = vmatprep.subr.bf16.mxu0 0
    %1510 = vmatpush1.bf16.xpose.msra.mxu0 0
    %1511 = vmatprep.subr.bf16.mxu0 0
    %1512 = vmatpush1.bf16.xpose.msra.mxu0 0
    %1513 = vmatprep.subr.bf16.mxu0 0
    %1514 = vmatpush1.bf16.xpose.msra.mxu0 0
    %1515 = vmatprep.subr.bf16.mxu0 0
    %1516 = vmatpush1.bf16.xpose.msra.mxu0 0
    %1517 = vmatprep.subr.bf16.mxu0 0
    %1518 = vmatpush1.bf16.xpose.msra.mxu0 0
    %1519 = vmatprep.subr.bf16.mxu0 0
    %1520 = vmatpush1.bf16.xpose.msra.mxu0 0
    %1521 = vmatprep.subr.bf16.mxu0 0
    %1522 = vmatpush1.bf16.xpose.msra.mxu0 0
    %1523 = vmatprep.subr.bf16.mxu0 0
    %1524 = vmatpush1.bf16.xpose.msra.mxu0 0
    %1525 = vmatprep.mubr.bf16.mxu0 0
    %1526 = vmatmul.mubr.bf16.gmra.mrb[0].mxu0 %v1488
    %v1527 = vpop.f32.mrb[0].mxu0
    %v1528 = vadd.f32 %v1272, %v1527
    %v1529 = vpop.f32.mrb[0].mxu0
    %v1530 = vpop.f32.mrb[0].mxu0
    %v1531 = vadd.f32 %v1273, %v1530
    %v1532 = vpop.f32.mrb[0].mxu0
    %1533 = vdwg.mxu0
    %1535 = vrot.lane.b32.xlu0 %v1268, 120
    %v1536 = vpop.permute.xlu0 %1535
    %1537 = vrot.lane.b32.xlu0 %v1268, 88
    %v1538 = vpop.permute.xlu0 %1537
    %v1540 = vsel %vm272, %v1536, 0
    %v1543 = vsel %vm272, %v1538, 0
    %1545 = vmatprep.subr.bf16.mxu0 0
    %1546 = vmatpush1.bf16.xpose.msra.mxu0 %v1543
    %1547 = vmatprep.subr.bf16.mxu0 0
    %1548 = vmatpush1.bf16.xpose.msra.mxu0 0
    %1549 = vmatprep.subr.bf16.mxu0 0
    %1550 = vmatpush1.bf16.xpose.msra.mxu0 0
    %1551 = vmatprep.subr.bf16.mxu0 0
    %1552 = vmatpush1.bf16.xpose.msra.mxu0 0
    %1553 = vmatprep.subr.bf16.mxu0 0
    %1554 = vmatpush1.bf16.xpose.msra.mxu0 0
    %1555 = vmatprep.subr.bf16.mxu0 0
    %1556 = vmatpush1.bf16.xpose.msra.mxu0 0
    %1557 = vmatprep.subr.bf16.mxu0 0
    %1558 = vmatpush1.bf16.xpose.msra.mxu0 0
    %1559 = vmatprep.subr.bf16.mxu0 0
    %1560 = vmatpush1.bf16.xpose.msra.mxu0 0
    %1561 = vmatprep.subr.bf16.mxu0 0
    %1562 = vmatpush1.bf16.xpose.msra.mxu0 0
    %1563 = vmatprep.subr.bf16.mxu0 0
    %1564 = vmatpush1.bf16.xpose.msra.mxu0 0
    %1565 = vmatprep.subr.bf16.mxu0 0
    %1566 = vmatpush1.bf16.xpose.msra.mxu0 0
    %1567 = vmatprep.subr.bf16.mxu0 0
    %1568 = vmatpush1.bf16.xpose.msra.mxu0 0
    %1569 = vmatprep.subr.bf16.mxu0 0
    %1570 = vmatpush1.bf16.xpose.msra.mxu0 0
    %1571 = vmatprep.subr.bf16.mxu0 0
    %1572 = vmatpush1.bf16.xpose.msra.mxu0 0
    %1573 = vmatprep.subr.bf16.mxu0 0
    %1574 = vmatpush1.bf16.xpose.msra.mxu0 0
    %1575 = vmatprep.subr.bf16.mxu0 0
    %1576 = vmatpush1.bf16.xpose.msra.mxu0 0
    %1577 = vmatprep.mubr.bf16.mxu0 0
    %1578 = vmatmul.mubr.bf16.gmra.mrb[0].mxu0 %v1540
    %v1579 = vpop.f32.mrb[0].mxu0
    %v1580 = vadd.f32 %v1272, %v1579
    %v1581 = vpop.f32.mrb[0].mxu0
    %v1582 = vpop.f32.mrb[0].mxu0
    %v1583 = vadd.f32 %v1273, %v1582
    %v1584 = vpop.f32.mrb[0].mxu0
    %1585 = vdwg.mxu0
    %1587 = vrot.lane.b32.xlu0 %v1269, 120
    %v1588 = vpop.permute.xlu0 %1587
    %1589 = vrot.lane.b32.xlu0 %v1269, 88
    %v1590 = vpop.permute.xlu0 %1589
    %v1592 = vsel %vm272, %v1588, 0
    %v1595 = vsel %vm272, %v1590, 0
    %1597 = vmatprep.subr.bf16.mxu0 0
    %1598 = vmatpush1.bf16.xpose.msra.mxu0 %v1595
    %1599 = vmatprep.subr.bf16.mxu0 0
    %1600 = vmatpush1.bf16.xpose.msra.mxu0 0
    %1601 = vmatprep.subr.bf16.mxu0 0
    %1602 = vmatpush1.bf16.xpose.msra.mxu0 0
    %1603 = vmatprep.subr.bf16.mxu0 0
    %1604 = vmatpush1.bf16.xpose.msra.mxu0 0
    %1605 = vmatprep.subr.bf16.mxu0 0
    %1606 = vmatpush1.bf16.xpose.msra.mxu0 0
    %1607 = vmatprep.subr.bf16.mxu0 0
    %1608 = vmatpush1.bf16.xpose.msra.mxu0 0
    %1609 = vmatprep.subr.bf16.mxu0 0
    %1610 = vmatpush1.bf16.xpose.msra.mxu0 0
    %1611 = vmatprep.subr.bf16.mxu0 0
    %1612 = vmatpush1.bf16.xpose.msra.mxu0 0
    %1613 = vmatprep.subr.bf16.mxu0 0
    %1614 = vmatpush1.bf16.xpose.msra.mxu0 0
    %1615 = vmatprep.subr.bf16.mxu0 0
    %1616 = vmatpush1.bf16.xpose.msra.mxu0 0
    %1617 = vmatprep.subr.bf16.mxu0 0
    %1618 = vmatpush1.bf16.xpose.msra.mxu0 0
    %1619 = vmatprep.subr.bf16.mxu0 0
    %1620 = vmatpush1.bf16.xpose.msra.mxu0 0
    %1621 = vmatprep.subr.bf16.mxu0 0
    %1622 = vmatpush1.bf16.xpose.msra.mxu0 0
    %1623 = vmatprep.subr.bf16.mxu0 0
    %1624 = vmatpush1.bf16.xpose.msra.mxu0 0
    %1625 = vmatprep.subr.bf16.mxu0 0
    %1626 = vmatpush1.bf16.xpose.msra.mxu0 0
    %1627 = vmatprep.subr.bf16.mxu0 0
    %1628 = vmatpush1.bf16.xpose.msra.mxu0 0
    %1629 = vmatprep.mubr.bf16.mxu0 0
    %1630 = vmatmul.mubr.bf16.gmra.mrb[0].mxu0 %v1592
    %v1631 = vpop.f32.mrb[0].mxu0
    %v1632 = vadd.f32 %v1272, %v1631
    %v1633 = vpop.f32.mrb[0].mxu0
    %v1634 = vpop.f32.mrb[0].mxu0
    %v1635 = vadd.f32 %v1273, %v1634
    %v1636 = vpop.f32.mrb[0].mxu0
    %1637 = vdwg.mxu0
    %1639 = vrot.lane.b32.xlu0 %v1270, 120
    %v1640 = vpop.permute.xlu0 %1639
    %1641 = vrot.lane.b32.xlu0 %v1270, 88
    %v1642 = vpop.permute.xlu0 %1641
    %v1644 = vsel %vm272, %v1640, 0
    %v1647 = vsel %vm272, %v1642, 0
    %1649 = vmatprep.subr.bf16.mxu0 0
    %1650 = vmatpush1.bf16.xpose.msra.mxu0 %v1647
    %1651 = vmatprep.subr.bf16.mxu0 0
    %1652 = vmatpush1.bf16.xpose.msra.mxu0 0
    %1653 = vmatprep.subr.bf16.mxu0 0
    %1654 = vmatpush1.bf16.xpose.msra.mxu0 0
    %1655 = vmatprep.subr.bf16.mxu0 0
    %1656 = vmatpush1.bf16.xpose.msra.mxu0 0
    %1657 = vmatprep.subr.bf16.mxu0 0
    %1658 = vmatpush1.bf16.xpose.msra.mxu0 0
    %1659 = vmatprep.subr.bf16.mxu0 0
    %1660 = vmatpush1.bf16.xpose.msra.mxu0 0
    %1661 = vmatprep.subr.bf16.mxu0 0
    %1662 = vmatpush1.bf16.xpose.msra.mxu0 0
    %1663 = vmatprep.subr.bf16.mxu0 0
    %1664 = vmatpush1.bf16.xpose.msra.mxu0 0
    %1665 = vmatprep.subr.bf16.mxu0 0
    %1666 = vmatpush1.bf16.xpose.msra.mxu0 0
    %1667 = vmatprep.subr.bf16.mxu0 0
    %1668 = vmatpush1.bf16.xpose.msra.mxu0 0
    %1669 = vmatprep.subr.bf16.mxu0 0
    %1670 = vmatpush1.bf16.xpose.msra.mxu0 0
    %1671 = vmatprep.subr.bf16.mxu0 0
    %1672 = vmatpush1.bf16.xpose.msra.mxu0 0
    %1673 = vmatprep.subr.bf16.mxu0 0
    %1674 = vmatpush1.bf16.xpose.msra.mxu0 0
    %1675 = vmatprep.subr.bf16.mxu0 0
    %1676 = vmatpush1.bf16.xpose.msra.mxu0 0
    %1677 = vmatprep.subr.bf16.mxu0 0
    %1678 = vmatpush1.bf16.xpose.msra.mxu0 0
    %1679 = vmatprep.subr.bf16.mxu0 0
    %1680 = vmatpush1.bf16.xpose.msra.mxu0 0
    %1681 = vmatprep.mubr.bf16.mxu0 0
    %1682 = vmatmul.mubr.bf16.gmra.mrb[0].mxu0 %v1644
    %v1683 = vpop.f32.mrb[0].mxu0
    %v1684 = vadd.f32 %v1272, %v1683
    %v1685 = vpop.f32.mrb[0].mxu0
    %v1686 = vpop.f32.mrb[0].mxu0
    %v1687 = vadd.f32 %v1273, %v1686
    %v1688 = vpop.f32.mrb[0].mxu0
    %1689 = vdwg.mxu0
    %v1690 = vsel %vm670, %v1320, -inf
    %1691 = vmax.xlane.f32.xlu0 %v1690
    %v1692 = vpop.xlane.xlu0 %1691
    %v1693 = vsel %vm670, %v1323, -inf
    %1694 = vmax.xlane.f32.xlu0 %v1693
    %v1695 = vpop.xlane.xlu0 %1694
    %v1696 = vsel %vm670, %v1372, -inf
    %1697 = vmax.xlane.f32.xlu0 %v1696
    %v1698 = vpop.xlane.xlu0 %1697
    %v1699 = vsel %vm670, %v1375, -inf
    %1700 = vmax.xlane.f32.xlu0 %v1699
    %v1701 = vpop.xlane.xlu0 %1700
    %v1702 = vsel %vm670, %v1424, -inf
    %1703 = vmax.xlane.f32.xlu0 %v1702
    %v1704 = vpop.xlane.xlu0 %1703
    %v1705 = vsel %vm670, %v1427, -inf
    %1706 = vmax.xlane.f32.xlu0 %v1705
    %v1707 = vpop.xlane.xlu0 %1706
    %v1708 = vsel %vm670, %v1476, -inf
    %1709 = vmax.xlane.f32.xlu0 %v1708
    %v1710 = vpop.xlane.xlu0 %1709
    %v1711 = vsel %vm670, %v1479, -inf
    %1712 = vmax.xlane.f32.xlu0 %v1711
    %v1713 = vpop.xlane.xlu0 %1712
    %v1714 = vsel %vm670, %v1528, -inf
    %1715 = vmax.xlane.f32.xlu0 %v1714
    %v1716 = vpop.xlane.xlu0 %1715
    %v1717 = vsel %vm670, %v1531, -inf
    %1718 = vmax.xlane.f32.xlu0 %v1717
    %v1719 = vpop.xlane.xlu0 %1718
    %v1720 = vsel %vm670, %v1580, -inf
    %1721 = vmax.xlane.f32.xlu0 %v1720
    %v1722 = vpop.xlane.xlu0 %1721
    %v1723 = vsel %vm670, %v1583, -inf
    %1724 = vmax.xlane.f32.xlu0 %v1723
    %v1725 = vpop.xlane.xlu0 %1724
    %v1726 = vsel %vm670, %v1632, -inf
    %1727 = vmax.xlane.f32.xlu0 %v1726
    %v1728 = vpop.xlane.xlu0 %1727
    %v1729 = vsel %vm670, %v1635, -inf
    %1730 = vmax.xlane.f32.xlu0 %v1729
    %v1731 = vpop.xlane.xlu0 %1730
    %v1732 = vsel %vm670, %v1684, -inf
    %1733 = vmax.xlane.f32.xlu0 %v1732
    %v1734 = vpop.xlane.xlu0 %1733
    %v1735 = vsel %vm670, %v1687, -inf
    %1736 = vmax.xlane.f32.xlu0 %v1735
    %v1737 = vpop.xlane.xlu0 %1736
    %v1738 = vsub.f32 %v1320, %v1692
    %v1739 = vsub.f32 %v1323, %v1695
    %v1740 = vsub.f32 %v1372, %v1698
    %v1741 = vsub.f32 %v1375, %v1701
    %v1742 = vsub.f32 %v1424, %v1704
    %v1743 = vsub.f32 %v1427, %v1707
    %v1744 = vsub.f32 %v1476, %v1710
    %v1745 = vsub.f32 %v1479, %v1713
    %v1746 = vsub.f32 %v1528, %v1716
    %v1747 = vsub.f32 %v1531, %v1719
    %v1748 = vsub.f32 %v1580, %v1722
    %v1749 = vsub.f32 %v1583, %v1725
    %v1750 = vsub.f32 %v1632, %v1728
    %v1751 = vsub.f32 %v1635, %v1731
    %v1752 = vsub.f32 %v1684, %v1734
    %v1753 = vsub.f32 %v1687, %v1737
    %v1754 = vmul.f32 %v1738, 1.442695
    %v1755 = vpow.pop %v1754
    %v1756 = vmul.f32 %v1739, 1.442695
    %v1757 = vpow.pop %v1756
    %v1758 = vmul.f32 %v1740, 1.442695
    %v1759 = vpow.pop %v1758
    %v1760 = vmul.f32 %v1741, 1.442695
    %v1761 = vpow.pop %v1760
    %v1762 = vmul.f32 %v1742, 1.442695
    %v1763 = vpow.pop %v1762
    %v1764 = vmul.f32 %v1743, 1.442695
    %v1765 = vpow.pop %v1764
    %v1766 = vmul.f32 %v1744, 1.442695
    %v1767 = vpow.pop %v1766
    %v1768 = vmul.f32 %v1745, 1.442695
    %v1769 = vpow.pop %v1768
    %v1770 = vmul.f32 %v1746, 1.442695
    %v1771 = vpow.pop %v1770
    %v1772 = vmul.f32 %v1747, 1.442695
    %v1773 = vpow.pop %v1772
    %v1774 = vmul.f32 %v1748, 1.442695
    %v1775 = vpow.pop %v1774
    %v1776 = vmul.f32 %v1749, 1.442695
    %v1777 = vpow.pop %v1776
    %v1778 = vmul.f32 %v1750, 1.442695
    %v1779 = vpow.pop %v1778
    %v1780 = vmul.f32 %v1751, 1.442695
    %v1781 = vpow.pop %v1780
    %v1782 = vmul.f32 %v1752, 1.442695
    %v1783 = vpow.pop %v1782
    %v1784 = vmul.f32 %v1753, 1.442695
    %v1785 = vpow.pop %v1784
    %v1786 = vsel %vm670, %v1755, 0.0
    %1787 = vadd.xlane.f32.xlu0 %v1786
    %v1788 = vpop.xlane.xlu0 %1787
    %v1789 = vsel %vm670, %v1757, 0.0
    %1790 = vadd.xlane.f32.xlu0 %v1789
    %v1791 = vpop.xlane.xlu0 %1790
    %v1792 = vsel %vm670, %v1759, 0.0
    %1793 = vadd.xlane.f32.xlu0 %v1792
    %v1794 = vpop.xlane.xlu0 %1793
    %v1795 = vsel %vm670, %v1761, 0.0
    %1796 = vadd.xlane.f32.xlu0 %v1795
    %v1797 = vpop.xlane.xlu0 %1796
    %v1798 = vsel %vm670, %v1763, 0.0
    %1799 = vadd.xlane.f32.xlu0 %v1798
    %v1800 = vpop.xlane.xlu0 %1799
    %v1801 = vsel %vm670, %v1765, 0.0
    %1802 = vadd.xlane.f32.xlu0 %v1801
    %v1803 = vpop.xlane.xlu0 %1802
    %v1804 = vsel %vm670, %v1767, 0.0
    %1805 = vadd.xlane.f32.xlu0 %v1804
    %v1806 = vpop.xlane.xlu0 %1805
    %v1807 = vsel %vm670, %v1769, 0.0
    %1808 = vadd.xlane.f32.xlu0 %v1807
    %v1809 = vpop.xlane.xlu0 %1808
    %v1810 = vsel %vm670, %v1771, 0.0
    %1811 = vadd.xlane.f32.xlu0 %v1810
    %v1812 = vpop.xlane.xlu0 %1811
    %v1813 = vsel %vm670, %v1773, 0.0
    %1814 = vadd.xlane.f32.xlu0 %v1813
    %v1815 = vpop.xlane.xlu0 %1814
    %v1816 = vsel %vm670, %v1775, 0.0
    %1817 = vadd.xlane.f32.xlu0 %v1816
    %v1818 = vpop.xlane.xlu0 %1817
    %v1819 = vsel %vm670, %v1777, 0.0
    %1820 = vadd.xlane.f32.xlu0 %v1819
    %v1821 = vpop.xlane.xlu0 %1820
    %v1822 = vsel %vm670, %v1779, 0.0
    %1823 = vadd.xlane.f32.xlu0 %v1822
    %v1824 = vpop.xlane.xlu0 %1823
    %v1825 = vsel %vm670, %v1781, 0.0
    %1826 = vadd.xlane.f32.xlu0 %v1825
    %v1827 = vpop.xlane.xlu0 %1826
    %v1828 = vsel %vm670, %v1783, 0.0
    %1829 = vadd.xlane.f32.xlu0 %v1828
    %v1830 = vpop.xlane.xlu0 %1829
    %v1831 = vsel %vm670, %v1785, 0.0
    %1832 = vadd.xlane.f32.xlu0 %v1831
    %v1833 = vpop.xlane.xlu0 %1832
    %v1834 = vrcp.pop %v1788
    %v1835 = vrcp.pop %v1791
    %v1836 = vrcp.pop %v1794
    %v1837 = vrcp.pop %v1797
    %v1838 = vrcp.pop %v1800
    %v1839 = vrcp.pop %v1803
    %v1840 = vrcp.pop %v1806
    %v1841 = vrcp.pop %v1809
    %v1842 = vrcp.pop %v1812
    %v1843 = vrcp.pop %v1815
    %v1844 = vrcp.pop %v1818
    %v1845 = vrcp.pop %v1821
    %v1846 = vrcp.pop %v1824
    %v1847 = vrcp.pop %v1827
    %v1848 = vrcp.pop %v1830
    %v1849 = vrcp.pop %v1833
    %v1850 = vmul.f32 %v1755, %v1834
    %v1851 = vmul.f32 %v1757, %v1835
    %v1852 = vmul.f32 %v1759, %v1836
    %v1853 = vmul.f32 %v1761, %v1837
    %v1854 = vmul.f32 %v1763, %v1838
    %v1855 = vmul.f32 %v1765, %v1839
    %v1856 = vmul.f32 %v1767, %v1840
    %v1857 = vmul.f32 %v1769, %v1841
    %v1858 = vmul.f32 %v1771, %v1842
    %v1859 = vmul.f32 %v1773, %v1843
    %v1860 = vmul.f32 %v1775, %v1844
    %v1861 = vmul.f32 %v1777, %v1845
    %v1862 = vmul.f32 %v1779, %v1846
    %v1863 = vmul.f32 %v1781, %v1847
    %v1864 = vmul.f32 %v1783, %v1848
    %v1865 = vmul.f32 %v1785, %v1849
    %v1866 = vpack.c.bf16 %v1851, %v1850
    %v1867 = vpack.c.bf16 %v1853, %v1852
    %v1868 = vpack.c.bf16 %v1855, %v1854
    %v1869 = vpack.c.bf16 %v1857, %v1856
    %v1870 = vpack.c.bf16 %v1859, %v1858
    %v1871 = vpack.c.bf16 %v1861, %v1860
    %v1872 = vpack.c.bf16 %v1863, %v1862
    %v1873 = vpack.c.bf16 %v1865, %v1864
    %1874 = vrot.lane.b32.xlu0 %v1263, 56
    %v1875 = vpop.permute.xlu0 %1874
    %v1878 = vsel %vm670, %v1866, 0
    %1880 = vmatprep.subr.bf16.mxu0 0
    %1881 = vmatpush1.bf16.msra.mxu0 %v1875
    %1882 = vmatprep.subr.bf16.mxu0 0
    %1883 = vmatpush1.bf16.msra.mxu0 0
    %1884 = vmatprep.subr.bf16.mxu0 0
    %1885 = vmatpush1.bf16.msra.mxu0 0
    %1886 = vmatprep.subr.bf16.mxu0 0
    %1887 = vmatpush1.bf16.msra.mxu0 0
    %1888 = vmatprep.subr.bf16.mxu0 0
    %1889 = vmatpush1.bf16.msra.mxu0 0
    %1890 = vmatprep.subr.bf16.mxu0 0
    %1891 = vmatpush1.bf16.msra.mxu0 0
    %1892 = vmatprep.subr.bf16.mxu0 0
    %1893 = vmatpush1.bf16.msra.mxu0 0
    %1894 = vmatprep.subr.bf16.mxu0 0
    %1895 = vmatpush1.bf16.msra.mxu0 0
    %1896 = vmatprep.subr.bf16.mxu0 0
    %1897 = vmatpush1.bf16.msra.mxu0 0
    %1898 = vmatprep.subr.bf16.mxu0 0
    %1899 = vmatpush1.bf16.msra.mxu0 0
    %1900 = vmatprep.subr.bf16.mxu0 0
    %1901 = vmatpush1.bf16.msra.mxu0 0
    %1902 = vmatprep.subr.bf16.mxu0 0
    %1903 = vmatpush1.bf16.msra.mxu0 0
    %1904 = vmatprep.subr.bf16.mxu0 0
    %1905 = vmatpush1.bf16.msra.mxu0 0
    %1906 = vmatprep.subr.bf16.mxu0 0
    %1907 = vmatpush1.bf16.msra.mxu0 0
    %1908 = vmatprep.subr.bf16.mxu0 0
    %1909 = vmatpush1.bf16.msra.mxu0 0
    %1910 = vmatprep.subr.bf16.mxu0 0
    %1911 = vmatpush1.bf16.msra.mxu0 0
    %1912 = vmatprep.mubr.bf16.mxu0 0
    %1913 = vmatmul.mubr.bf16.gmra.mrb[0].mxu0 %v1878
    %v1914 = vpop.f32.mrb[0].mxu0
    %v1915 = vadd.f32 0.0, %v1914
    %v1916 = vpop.f32.mrb[0].mxu0
    %v1917 = vpop.f32.mrb[0].mxu0
    %v1918 = vadd.f32 0.0, %v1917
    %v1919 = vpop.f32.mrb[0].mxu0
    %1920 = vdwg.mxu0
    %1921 = vrot.lane.b32.xlu0 %v1264, 56
    %v1922 = vpop.permute.xlu0 %1921
    %v1925 = vsel %vm670, %v1867, 0
    %1927 = vmatprep.subr.bf16.mxu0 0
    %1928 = vmatpush1.bf16.msra.mxu0 %v1922
    %1929 = vmatprep.subr.bf16.mxu0 0
    %1930 = vmatpush1.bf16.msra.mxu0 0
    %1931 = vmatprep.subr.bf16.mxu0 0
    %1932 = vmatpush1.bf16.msra.mxu0 0
    %1933 = vmatprep.subr.bf16.mxu0 0
    %1934 = vmatpush1.bf16.msra.mxu0 0
    %1935 = vmatprep.subr.bf16.mxu0 0
    %1936 = vmatpush1.bf16.msra.mxu0 0
    %1937 = vmatprep.subr.bf16.mxu0 0
    %1938 = vmatpush1.bf16.msra.mxu0 0
    %1939 = vmatprep.subr.bf16.mxu0 0
    %1940 = vmatpush1.bf16.msra.mxu0 0
    %1941 = vmatprep.subr.bf16.mxu0 0
    %1942 = vmatpush1.bf16.msra.mxu0 0
    %1943 = vmatprep.subr.bf16.mxu0 0
    %1944 = vmatpush1.bf16.msra.mxu0 0
    %1945 = vmatprep.subr.bf16.mxu0 0
    %1946 = vmatpush1.bf16.msra.mxu0 0
    %1947 = vmatprep.subr.bf16.mxu0 0
    %1948 = vmatpush1.bf16.msra.mxu0 0
    %1949 = vmatprep.subr.bf16.mxu0 0
    %1950 = vmatpush1.bf16.msra.mxu0 0
    %1951 = vmatprep.subr.bf16.mxu0 0
    %1952 = vmatpush1.bf16.msra.mxu0 0
    %1953 = vmatprep.subr.bf16.mxu0 0
    %1954 = vmatpush1.bf16.msra.mxu0 0
    %1955 = vmatprep.subr.bf16.mxu0 0
    %1956 = vmatpush1.bf16.msra.mxu0 0
    %1957 = vmatprep.subr.bf16.mxu0 0
    %1958 = vmatpush1.bf16.msra.mxu0 0
    %1959 = vmatprep.mubr.bf16.mxu0 0
    %1960 = vmatmul.mubr.bf16.gmra.mrb[0].mxu0 %v1925
    %v1961 = vpop.f32.mrb[0].mxu0
    %v1962 = vadd.f32 0.0, %v1961
    %v1963 = vpop.f32.mrb[0].mxu0
    %v1964 = vpop.f32.mrb[0].mxu0
    %v1965 = vadd.f32 0.0, %v1964
    %v1966 = vpop.f32.mrb[0].mxu0
    %1967 = vdwg.mxu0
    %1968 = vrot.lane.b32.xlu0 %v1265, 56
    %v1969 = vpop.permute.xlu0 %1968
    %v1972 = vsel %vm670, %v1868, 0
    %1974 = vmatprep.subr.bf16.mxu0 0
    %1975 = vmatpush1.bf16.msra.mxu0 %v1969
    %1976 = vmatprep.subr.bf16.mxu0 0
    %1977 = vmatpush1.bf16.msra.mxu0 0
    %1978 = vmatprep.subr.bf16.mxu0 0
    %1979 = vmatpush1.bf16.msra.mxu0 0
    %1980 = vmatprep.subr.bf16.mxu0 0
    %1981 = vmatpush1.bf16.msra.mxu0 0
    %1982 = vmatprep.subr.bf16.mxu0 0
    %1983 = vmatpush1.bf16.msra.mxu0 0
    %1984 = vmatprep.subr.bf16.mxu0 0
    %1985 = vmatpush1.bf16.msra.mxu0 0
    %1986 = vmatprep.subr.bf16.mxu0 0
    %1987 = vmatpush1.bf16.msra.mxu0 0
    %1988 = vmatprep.subr.bf16.mxu0 0
    %1989 = vmatpush1.bf16.msra.mxu0 0
    %1990 = vmatprep.subr.bf16.mxu0 0
    %1991 = vmatpush1.bf16.msra.mxu0 0
    %1992 = vmatprep.subr.bf16.mxu0 0
    %1993 = vmatpush1.bf16.msra.mxu0 0
    %1994 = vmatprep.subr.bf16.mxu0 0
    %1995 = vmatpush1.bf16.msra.mxu0 0
    %1996 = vmatprep.subr.bf16.mxu0 0
    %1997 = vmatpush1.bf16.msra.mxu0 0
    %1998 = vmatprep.subr.bf16.mxu0 0
    %1999 = vmatpush1.bf16.msra.mxu0 0
    %2000 = vmatprep.subr.bf16.mxu0 0
    %2001 = vmatpush1.bf16.msra.mxu0 0
    %2002 = vmatprep.subr.bf16.mxu0 0
    %2003 = vmatpush1.bf16.msra.mxu0 0
    %2004 = vmatprep.subr.bf16.mxu0 0
    %2005 = vmatpush1.bf16.msra.mxu0 0
    %2006 = vmatprep.mubr.bf16.mxu0 0
    %2007 = vmatmul.mubr.bf16.gmra.mrb[0].mxu0 %v1972
    %v2008 = vpop.f32.mrb[0].mxu0
    %v2009 = vadd.f32 0.0, %v2008
    %v2010 = vpop.f32.mrb[0].mxu0
    %v2011 = vpop.f32.mrb[0].mxu0
    %v2012 = vadd.f32 0.0, %v2011
    %v2013 = vpop.f32.mrb[0].mxu0
    %2014 = vdwg.mxu0
    %2015 = vrot.lane.b32.xlu0 %v1266, 56
    %v2016 = vpop.permute.xlu0 %2015
    %v2019 = vsel %vm670, %v1869, 0
    %2021 = vmatprep.subr.bf16.mxu0 0
    %2022 = vmatpush1.bf16.msra.mxu0 %v2016
    %2023 = vmatprep.subr.bf16.mxu0 0
    %2024 = vmatpush1.bf16.msra.mxu0 0
    %2025 = vmatprep.subr.bf16.mxu0 0
    %2026 = vmatpush1.bf16.msra.mxu0 0
    %2027 = vmatprep.subr.bf16.mxu0 0
    %2028 = vmatpush1.bf16.msra.mxu0 0
    %2029 = vmatprep.subr.bf16.mxu0 0
    %2030 = vmatpush1.bf16.msra.mxu0 0
    %2031 = vmatprep.subr.bf16.mxu0 0
    %2032 = vmatpush1.bf16.msra.mxu0 0
    %2033 = vmatprep.subr.bf16.mxu0 0
    %2034 = vmatpush1.bf16.msra.mxu0 0
    %2035 = vmatprep.subr.bf16.mxu0 0
    %2036 = vmatpush1.bf16.msra.mxu0 0
    %2037 = vmatprep.subr.bf16.mxu0 0
    %2038 = vmatpush1.bf16.msra.mxu0 0
    %2039 = vmatprep.subr.bf16.mxu0 0
    %2040 = vmatpush1.bf16.msra.mxu0 0
    %2041 = vmatprep.subr.bf16.mxu0 0
    %2042 = vmatpush1.bf16.msra.mxu0 0
    %2043 = vmatprep.subr.bf16.mxu0 0
    %2044 = vmatpush1.bf16.msra.mxu0 0
    %2045 = vmatprep.subr.bf16.mxu0 0
    %2046 = vmatpush1.bf16.msra.mxu0 0
    %2047 = vmatprep.subr.bf16.mxu0 0
    %2048 = vmatpush1.bf16.msra.mxu0 0
    %2049 = vmatprep.subr.bf16.mxu0 0
    %2050 = vmatpush1.bf16.msra.mxu0 0
    %2051 = vmatprep.subr.bf16.mxu0 0
    %2052 = vmatpush1.bf16.msra.mxu0 0
    %2053 = vmatprep.mubr.bf16.mxu0 0
    %2054 = vmatmul.mubr.bf16.gmra.mrb[0].mxu0 %v2019
    %v2055 = vpop.f32.mrb[0].mxu0
    %v2056 = vadd.f32 0.0, %v2055
    %v2057 = vpop.f32.mrb[0].mxu0
    %v2058 = vpop.f32.mrb[0].mxu0
    %v2059 = vadd.f32 0.0, %v2058
    %v2060 = vpop.f32.mrb[0].mxu0
    %2061 = vdwg.mxu0
    %2062 = vrot.lane.b32.xlu0 %v1267, 56
    %v2063 = vpop.permute.xlu0 %2062
    %v2066 = vsel %vm670, %v1870, 0
    %2068 = vmatprep.subr.bf16.mxu0 0
    %2069 = vmatpush1.bf16.msra.mxu0 %v2063
    %2070 = vmatprep.subr.bf16.mxu0 0
    %2071 = vmatpush1.bf16.msra.mxu0 0
    %2072 = vmatprep.subr.bf16.mxu0 0
    %2073 = vmatpush1.bf16.msra.mxu0 0
    %2074 = vmatprep.subr.bf16.mxu0 0
    %2075 = vmatpush1.bf16.msra.mxu0 0
    %2076 = vmatprep.subr.bf16.mxu0 0
    %2077 = vmatpush1.bf16.msra.mxu0 0
    %2078 = vmatprep.subr.bf16.mxu0 0
    %2079 = vmatpush1.bf16.msra.mxu0 0
    %2080 = vmatprep.subr.bf16.mxu0 0
    %2081 = vmatpush1.bf16.msra.mxu0 0
    %2082 = vmatprep.subr.bf16.mxu0 0
    %2083 = vmatpush1.bf16.msra.mxu0 0
    %2084 = vmatprep.subr.bf16.mxu0 0
    %2085 = vmatpush1.bf16.msra.mxu0 0
    %2086 = vmatprep.subr.bf16.mxu0 0
    %2087 = vmatpush1.bf16.msra.mxu0 0
    %2088 = vmatprep.subr.bf16.mxu0 0
    %2089 = vmatpush1.bf16.msra.mxu0 0
    %2090 = vmatprep.subr.bf16.mxu0 0
    %2091 = vmatpush1.bf16.msra.mxu0 0
    %2092 = vmatprep.subr.bf16.mxu0 0
    %2093 = vmatpush1.bf16.msra.mxu0 0
    %2094 = vmatprep.subr.bf16.mxu0 0
    %2095 = vmatpush1.bf16.msra.mxu0 0
    %2096 = vmatprep.subr.bf16.mxu0 0
    %2097 = vmatpush1.bf16.msra.mxu0 0
    %2098 = vmatprep.subr.bf16.mxu0 0
    %2099 = vmatpush1.bf16.msra.mxu0 0
    %2100 = vmatprep.mubr.bf16.mxu0 0
    %2101 = vmatmul.mubr.bf16.gmra.mrb[0].mxu0 %v2066
    %v2102 = vpop.f32.mrb[0].mxu0
    %v2103 = vadd.f32 0.0, %v2102
    %v2104 = vpop.f32.mrb[0].mxu0
    %v2105 = vpop.f32.mrb[0].mxu0
    %v2106 = vadd.f32 0.0, %v2105
    %v2107 = vpop.f32.mrb[0].mxu0
    %2108 = vdwg.mxu0
    %2109 = vrot.lane.b32.xlu0 %v1268, 56
    %v2110 = vpop.permute.xlu0 %2109
    %v2113 = vsel %vm670, %v1871, 0
    %2115 = vmatprep.subr.bf16.mxu0 0
    %2116 = vmatpush1.bf16.msra.mxu0 %v2110
    %2117 = vmatprep.subr.bf16.mxu0 0
    %2118 = vmatpush1.bf16.msra.mxu0 0
    %2119 = vmatprep.subr.bf16.mxu0 0
    %2120 = vmatpush1.bf16.msra.mxu0 0
    %2121 = vmatprep.subr.bf16.mxu0 0
    %2122 = vmatpush1.bf16.msra.mxu0 0
    %2123 = vmatprep.subr.bf16.mxu0 0
    %2124 = vmatpush1.bf16.msra.mxu0 0
    %2125 = vmatprep.subr.bf16.mxu0 0
    %2126 = vmatpush1.bf16.msra.mxu0 0
    %2127 = vmatprep.subr.bf16.mxu0 0
    %2128 = vmatpush1.bf16.msra.mxu0 0
    %2129 = vmatprep.subr.bf16.mxu0 0
    %2130 = vmatpush1.bf16.msra.mxu0 0
    %2131 = vmatprep.subr.bf16.mxu0 0
    %2132 = vmatpush1.bf16.msra.mxu0 0
    %2133 = vmatprep.subr.bf16.mxu0 0
    %2134 = vmatpush1.bf16.msra.mxu0 0
    %2135 = vmatprep.subr.bf16.mxu0 0
    %2136 = vmatpush1.bf16.msra.mxu0 0
    %2137 = vmatprep.subr.bf16.mxu0 0
    %2138 = vmatpush1.bf16.msra.mxu0 0
    %2139 = vmatprep.subr.bf16.mxu0 0
    %2140 = vmatpush1.bf16.msra.mxu0 0
    %2141 = vmatprep.subr.bf16.mxu0 0
    %2142 = vmatpush1.bf16.msra.mxu0 0
    %2143 = vmatprep.subr.bf16.mxu0 0
    %2144 = vmatpush1.bf16.msra.mxu0 0
    %2145 = vmatprep.subr.bf16.mxu0 0
    %2146 = vmatpush1.bf16.msra.mxu0 0
    %2147 = vmatprep.mubr.bf16.mxu0 0
    %2148 = vmatmul.mubr.bf16.gmra.mrb[0].mxu0 %v2113
    %v2149 = vpop.f32.mrb[0].mxu0
    %v2150 = vadd.f32 0.0, %v2149
    %v2151 = vpop.f32.mrb[0].mxu0
    %v2152 = vpop.f32.mrb[0].mxu0
    %v2153 = vadd.f32 0.0, %v2152
    %v2154 = vpop.f32.mrb[0].mxu0
    %2155 = vdwg.mxu0
    %2156 = vrot.lane.b32.xlu0 %v1269, 56
    %v2157 = vpop.permute.xlu0 %2156
    %v2160 = vsel %vm670, %v1872, 0
    %2162 = vmatprep.subr.bf16.mxu0 0
    %2163 = vmatpush1.bf16.msra.mxu0 %v2157
    %2164 = vmatprep.subr.bf16.mxu0 0
    %2165 = vmatpush1.bf16.msra.mxu0 0
    %2166 = vmatprep.subr.bf16.mxu0 0
    %2167 = vmatpush1.bf16.msra.mxu0 0
    %2168 = vmatprep.subr.bf16.mxu0 0
    %2169 = vmatpush1.bf16.msra.mxu0 0
    %2170 = vmatprep.subr.bf16.mxu0 0
    %2171 = vmatpush1.bf16.msra.mxu0 0
    %2172 = vmatprep.subr.bf16.mxu0 0
    %2173 = vmatpush1.bf16.msra.mxu0 0
    %2174 = vmatprep.subr.bf16.mxu0 0
    %2175 = vmatpush1.bf16.msra.mxu0 0
    %2176 = vmatprep.subr.bf16.mxu0 0
    %2177 = vmatpush1.bf16.msra.mxu0 0
    %2178 = vmatprep.subr.bf16.mxu0 0
    %2179 = vmatpush1.bf16.msra.mxu0 0
    %2180 = vmatprep.subr.bf16.mxu0 0
    %2181 = vmatpush1.bf16.msra.mxu0 0
    %2182 = vmatprep.subr.bf16.mxu0 0
    %2183 = vmatpush1.bf16.msra.mxu0 0
    %2184 = vmatprep.subr.bf16.mxu0 0
    %2185 = vmatpush1.bf16.msra.mxu0 0
    %2186 = vmatprep.subr.bf16.mxu0 0
    %2187 = vmatpush1.bf16.msra.mxu0 0
    %2188 = vmatprep.subr.bf16.mxu0 0
    %2189 = vmatpush1.bf16.msra.mxu0 0
    %2190 = vmatprep.subr.bf16.mxu0 0
    %2191 = vmatpush1.bf16.msra.mxu0 0
    %2192 = vmatprep.subr.bf16.mxu0 0
    %2193 = vmatpush1.bf16.msra.mxu0 0
    %2194 = vmatprep.mubr.bf16.mxu0 0
    %2195 = vmatmul.mubr.bf16.gmra.mrb[0].mxu0 %v2160
    %v2196 = vpop.f32.mrb[0].mxu0
    %v2197 = vadd.f32 0.0, %v2196
    %v2198 = vpop.f32.mrb[0].mxu0
    %v2199 = vpop.f32.mrb[0].mxu0
    %v2200 = vadd.f32 0.0, %v2199
    %v2201 = vpop.f32.mrb[0].mxu0
    %2202 = vdwg.mxu0
    %2203 = vrot.lane.b32.xlu0 %v1270, 56
    %v2204 = vpop.permute.xlu0 %2203
    %v2207 = vsel %vm670, %v1873, 0
    %2209 = vmatprep.subr.bf16.mxu0 0
    %2210 = vmatpush1.bf16.msra.mxu0 %v2204
    %2211 = vmatprep.subr.bf16.mxu0 0
    %2212 = vmatpush1.bf16.msra.mxu0 0
    %2213 = vmatprep.subr.bf16.mxu0 0
    %2214 = vmatpush1.bf16.msra.mxu0 0
    %2215 = vmatprep.subr.bf16.mxu0 0
    %2216 = vmatpush1.bf16.msra.mxu0 0
    %2217 = vmatprep.subr.bf16.mxu0 0
    %2218 = vmatpush1.bf16.msra.mxu0 0
    %2219 = vmatprep.subr.bf16.mxu0 0
    %2220 = vmatpush1.bf16.msra.mxu0 0
    %2221 = vmatprep.subr.bf16.mxu0 0
    %2222 = vmatpush1.bf16.msra.mxu0 0
    %2223 = vmatprep.subr.bf16.mxu0 0
    %2224 = vmatpush1.bf16.msra.mxu0 0
    %2225 = vmatprep.subr.bf16.mxu0 0
    %2226 = vmatpush1.bf16.msra.mxu0 0
    %2227 = vmatprep.subr.bf16.mxu0 0
    %2228 = vmatpush1.bf16.msra.mxu0 0
    %2229 = vmatprep.subr.bf16.mxu0 0
    %2230 = vmatpush1.bf16.msra.mxu0 0
    %2231 = vmatprep.subr.bf16.mxu0 0
    %2232 = vmatpush1.bf16.msra.mxu0 0
    %2233 = vmatprep.subr.bf16.mxu0 0
    %2234 = vmatpush1.bf16.msra.mxu0 0
    %2235 = vmatprep.subr.bf16.mxu0 0
    %2236 = vmatpush1.bf16.msra.mxu0 0
    %2237 = vmatprep.subr.bf16.mxu0 0
    %2238 = vmatpush1.bf16.msra.mxu0 0
    %2239 = vmatprep.subr.bf16.mxu0 0
    %2240 = vmatpush1.bf16.msra.mxu0 0
    %2241 = vmatprep.mubr.bf16.mxu0 0
    %2242 = vmatmul.mubr.bf16.gmra.mrb[0].mxu0 %v2207
    %v2243 = vpop.f32.mrb[0].mxu0
    %v2244 = vadd.f32 0.0, %v2243
    %v2245 = vpop.f32.mrb[0].mxu0
    %v2246 = vpop.f32.mrb[0].mxu0
    %v2247 = vadd.f32 0.0, %v2246
    %v2248 = vpop.f32.mrb[0].mxu0
    %2249 = vdwg.mxu0
    %2266 = vrot.lane.b32.xlu0 %v1915, 8
    %v2267 = vpop.permute.xlu0 %2266
    %2268 = vrot.lane.b32.xlu0 %v1918, 8
    %v2269 = vpop.permute.xlu0 %2268
    %2270 = vrot.lane.b32.xlu0 %v1962, 8
    %v2271 = vpop.permute.xlu0 %2270
    %2272 = vrot.lane.b32.xlu0 %v1965, 8
    %v2273 = vpop.permute.xlu0 %2272
    %2274 = vrot.lane.b32.xlu0 %v2009, 8
    %v2275 = vpop.permute.xlu0 %2274
    %2276 = vrot.lane.b32.xlu0 %v2012, 8
    %v2277 = vpop.permute.xlu0 %2276
    %2278 = vrot.lane.b32.xlu0 %v2056, 8
    %v2279 = vpop.permute.xlu0 %2278
    %2280 = vrot.lane.b32.xlu0 %v2059, 8
    %v2281 = vpop.permute.xlu0 %2280
    %2282 = vrot.lane.b32.xlu0 %v2103, 8
    %v2283 = vpop.permute.xlu0 %2282
    %2284 = vrot.lane.b32.xlu0 %v2106, 8
    %v2285 = vpop.permute.xlu0 %2284
    %2286 = vrot.lane.b32.xlu0 %v2150, 8
    %v2287 = vpop.permute.xlu0 %2286
    %2288 = vrot.lane.b32.xlu0 %v2153, 8
    %v2289 = vpop.permute.xlu0 %2288
    %2290 = vrot.lane.b32.xlu0 %v2197, 8
    %v2291 = vpop.permute.xlu0 %2290
    %2292 = vrot.lane.b32.xlu0 %v2200, 8
    %v2293 = vpop.permute.xlu0 %2292
    %2294 = vrot.lane.b32.xlu0 %v2244, 8
    %v2295 = vpop.permute.xlu0 %2294
    %2296 = vrot.lane.b32.xlu0 %v2247, 8
    %v2297 = vpop.permute.xlu0 %2296
    %vm2314 = vcmask 130112
    %2315 = vst.msk [vmem:[#allocation3] sm:$0xff] %vm2314, %v2267
    %2316 = vst.msk [vmem:[#allocation3 + $0x8] sm:$0xff] %vm2314, %v2269
    %2317 = vst.msk [vmem:[#allocation3 + $0x10] sm:$0xff] %vm2314, %v2271
    %2318 = vst.msk [vmem:[#allocation3 + $0x18] sm:$0xff] %vm2314, %v2273
    %2319 = vst.msk [vmem:[#allocation3 + $0x20] sm:$0xff] %vm2314, %v2275
    %2320 = vst.msk [vmem:[#allocation3 + $0x28] sm:$0xff] %vm2314, %v2277
    %2321 = vst.msk [vmem:[#allocation3 + $0x30] sm:$0xff] %vm2314, %v2279
    %2322 = vst.msk [vmem:[#allocation3 + $0x38] sm:$0xff] %vm2314, %v2281
    %2323 = vst.msk [vmem:[#allocation3 + $0x40] sm:$0xff] %vm2314, %v2283
    %2324 = vst.msk [vmem:[#allocation3 + $0x48] sm:$0xff] %vm2314, %v2285
    %2325 = vst.msk [vmem:[#allocation3 + $0x50] sm:$0xff] %vm2314, %v2287
    %2326 = vst.msk [vmem:[#allocation3 + $0x58] sm:$0xff] %vm2314, %v2289
    %2327 = vst.msk [vmem:[#allocation3 + $0x60] sm:$0xff] %vm2314, %v2291
    %2328 = vst.msk [vmem:[#allocation3 + $0x68] sm:$0xff] %vm2314, %v2293
    %2329 = vst.msk [vmem:[#allocation3 + $0x70] sm:$0xff] %vm2314, %v2295
    %2330 = vst.msk [vmem:[#allocation3 + $0x78] sm:$0xff] %vm2314, %v2297
    %v2331 = vld [vmem:[#allocation2] sm:$0xff]
    %v2332 = vld [vmem:[#allocation2 + $0x8] sm:$0xff]
    %v2333 = vld [vmem:[#allocation2 + $0x10] sm:$0xff]
    %v2334 = vld [vmem:[#allocation2 + $0x18] sm:$0xff]
    %v2335 = vld [vmem:[#allocation2 + $0x20] sm:$0xff]
    %v2336 = vld [vmem:[#allocation2 + $0x28] sm:$0xff]
    %v2337 = vld [vmem:[#allocation2 + $0x30] sm:$0xff]
    %v2338 = vld [vmem:[#allocation2 + $0x38] sm:$0xff]
    %v2339 = vld [vmem:[#allocation2 + $0x40] sm:$0xff]
    %v2340 = vld [vmem:[#allocation2 + $0x48] sm:$0xff]
    %v2341 = vld [vmem:[#allocation2 + $0x50] sm:$0xff]
    %v2342 = vld [vmem:[#allocation2 + $0x58] sm:$0xff]
    %v2343 = vld [vmem:[#allocation2 + $0x60] sm:$0xff]
    %v2344 = vld [vmem:[#allocation2 + $0x68] sm:$0xff]
    %v2345 = vld [vmem:[#allocation2 + $0x70] sm:$0xff]
    %v2346 = vld [vmem:[#allocation2 + $0x78] sm:$0xff]
    %v2347 = vpack.c.bf16 %v2332, %v2331
    %v2348 = vpack.c.bf16 %v2334, %v2333
    %v2349 = vpack.c.bf16 %v2336, %v2335
    %v2350 = vpack.c.bf16 %v2338, %v2337
    %v2351 = vpack.c.bf16 %v2340, %v2339
    %v2352 = vpack.c.bf16 %v2342, %v2341
    %v2353 = vpack.c.bf16 %v2344, %v2343
    %v2354 = vpack.c.bf16 %v2346, %v2345
    %s2355 = scalar_lea.vmem %s5, 32
    %v2356 = vld [vmem:[%s2355] sm:$0xff]
    %v2357 = vld [vmem:[%s2355 + $0x8] sm:$0xff]
    %2359 = vrot.lane.b32.xlu0 %v2347, 112
    %v2360 = vpop.permute.xlu0 %2359
    %2361 = vrot.lane.b32.xlu0 %v2347, 80
    %v2362 = vpop.permute.xlu0 %2361
    %v2364 = vsel %vm272, %v2360, 0
    %v2367 = vsel %vm272, %v2362, 0
    %2369 = vmatprep.subr.bf16.mxu0 0
    %2370 = vmatpush1.bf16.xpose.msra.mxu0 %v2367
    %2371 = vmatprep.subr.bf16.mxu0 0
    %2372 = vmatpush1.bf16.xpose.msra.mxu0 0
    %2373 = vmatprep.subr.bf16.mxu0 0
    %2374 = vmatpush1.bf16.xpose.msra.mxu0 0
    %2375 = vmatprep.subr.bf16.mxu0 0
    %2376 = vmatpush1.bf16.xpose.msra.mxu0 0
    %2377 = vmatprep.subr.bf16.mxu0 0
    %2378 = vmatpush1.bf16.xpose.msra.mxu0 0
    %2379 = vmatprep.subr.bf16.mxu0 0
    %2380 = vmatpush1.bf16.xpose.msra.mxu0 0
    %2381 = vmatprep.subr.bf16.mxu0 0
    %2382 = vmatpush1.bf16.xpose.msra.mxu0 0
    %2383 = vmatprep.subr.bf16.mxu0 0
    %2384 = vmatpush1.bf16.xpose.msra.mxu0 0
    %2385 = vmatprep.subr.bf16.mxu0 0
    %2386 = vmatpush1.bf16.xpose.msra.mxu0 0
    %2387 = vmatprep.subr.bf16.mxu0 0
    %2388 = vmatpush1.bf16.xpose.msra.mxu0 0
    %2389 = vmatprep.subr.bf16.mxu0 0
    %2390 = vmatpush1.bf16.xpose.msra.mxu0 0
    %2391 = vmatprep.subr.bf16.mxu0 0
    %2392 = vmatpush1.bf16.xpose.msra.mxu0 0
    %2393 = vmatprep.subr.bf16.mxu0 0
    %2394 = vmatpush1.bf16.xpose.msra.mxu0 0
    %2395 = vmatprep.subr.bf16.mxu0 0
    %2396 = vmatpush1.bf16.xpose.msra.mxu0 0
    %2397 = vmatprep.subr.bf16.mxu0 0
    %2398 = vmatpush1.bf16.xpose.msra.mxu0 0
    %2399 = vmatprep.subr.bf16.mxu0 0
    %2400 = vmatpush1.bf16.xpose.msra.mxu0 0
    %2401 = vmatprep.mubr.bf16.mxu0 0
    %2402 = vmatmul.mubr.bf16.gmra.mrb[0].mxu0 %v2364
    %v2403 = vpop.f32.mrb[0].mxu0
    %v2404 = vadd.f32 %v2356, %v2403
    %v2405 = vpop.f32.mrb[0].mxu0
    %v2406 = vpop.f32.mrb[0].mxu0
    %v2407 = vadd.f32 %v2357, %v2406
    %v2408 = vpop.f32.mrb[0].mxu0
    %2409 = vdwg.mxu0
    %2411 = vrot.lane.b32.xlu0 %v2348, 112
    %v2412 = vpop.permute.xlu0 %2411
    %2413 = vrot.lane.b32.xlu0 %v2348, 80
    %v2414 = vpop.permute.xlu0 %2413
    %v2416 = vsel %vm272, %v2412, 0
    %v2419 = vsel %vm272, %v2414, 0
    %2421 = vmatprep.subr.bf16.mxu0 0
    %2422 = vmatpush1.bf16.xpose.msra.mxu0 %v2419
    %2423 = vmatprep.subr.bf16.mxu0 0
    %2424 = vmatpush1.bf16.xpose.msra.mxu0 0
    %2425 = vmatprep.subr.bf16.mxu0 0
    %2426 = vmatpush1.bf16.xpose.msra.mxu0 0
    %2427 = vmatprep.subr.bf16.mxu0 0
    %2428 = vmatpush1.bf16.xpose.msra.mxu0 0
    %2429 = vmatprep.subr.bf16.mxu0 0
    %2430 = vmatpush1.bf16.xpose.msra.mxu0 0
    %2431 = vmatprep.subr.bf16.mxu0 0
    %2432 = vmatpush1.bf16.xpose.msra.mxu0 0
    %2433 = vmatprep.subr.bf16.mxu0 0
    %2434 = vmatpush1.bf16.xpose.msra.mxu0 0
    %2435 = vmatprep.subr.bf16.mxu0 0
    %2436 = vmatpush1.bf16.xpose.msra.mxu0 0
    %2437 = vmatprep.subr.bf16.mxu0 0
    %2438 = vmatpush1.bf16.xpose.msra.mxu0 0
    %2439 = vmatprep.subr.bf16.mxu0 0
    %2440 = vmatpush1.bf16.xpose.msra.mxu0 0
    %2441 = vmatprep.subr.bf16.mxu0 0
    %2442 = vmatpush1.bf16.xpose.msra.mxu0 0
    %2443 = vmatprep.subr.bf16.mxu0 0
    %2444 = vmatpush1.bf16.xpose.msra.mxu0 0
    %2445 = vmatprep.subr.bf16.mxu0 0
    %2446 = vmatpush1.bf16.xpose.msra.mxu0 0
    %2447 = vmatprep.subr.bf16.mxu0 0
    %2448 = vmatpush1.bf16.xpose.msra.mxu0 0
    %2449 = vmatprep.subr.bf16.mxu0 0
    %2450 = vmatpush1.bf16.xpose.msra.mxu0 0
    %2451 = vmatprep.subr.bf16.mxu0 0
    %2452 = vmatpush1.bf16.xpose.msra.mxu0 0
    %2453 = vmatprep.mubr.bf16.mxu0 0
    %2454 = vmatmul.mubr.bf16.gmra.mrb[0].mxu0 %v2416
    %v2455 = vpop.f32.mrb[0].mxu0
    %v2456 = vadd.f32 %v2356, %v2455
    %v2457 = vpop.f32.mrb[0].mxu0
    %v2458 = vpop.f32.mrb[0].mxu0
    %v2459 = vadd.f32 %v2357, %v2458
    %v2460 = vpop.f32.mrb[0].mxu0
    %2461 = vdwg.mxu0
    %2463 = vrot.lane.b32.xlu0 %v2349, 112
    %v2464 = vpop.permute.xlu0 %2463
    %2465 = vrot.lane.b32.xlu0 %v2349, 80
    %v2466 = vpop.permute.xlu0 %2465
    %v2468 = vsel %vm272, %v2464, 0
    %v2471 = vsel %vm272, %v2466, 0
    %2473 = vmatprep.subr.bf16.mxu0 0
    %2474 = vmatpush1.bf16.xpose.msra.mxu0 %v2471
    %2475 = vmatprep.subr.bf16.mxu0 0
    %2476 = vmatpush1.bf16.xpose.msra.mxu0 0
    %2477 = vmatprep.subr.bf16.mxu0 0
    %2478 = vmatpush1.bf16.xpose.msra.mxu0 0
    %2479 = vmatprep.subr.bf16.mxu0 0
    %2480 = vmatpush1.bf16.xpose.msra.mxu0 0
    %2481 = vmatprep.subr.bf16.mxu0 0
    %2482 = vmatpush1.bf16.xpose.msra.mxu0 0
    %2483 = vmatprep.subr.bf16.mxu0 0
    %2484 = vmatpush1.bf16.xpose.msra.mxu0 0
    %2485 = vmatprep.subr.bf16.mxu0 0
    %2486 = vmatpush1.bf16.xpose.msra.mxu0 0
    %2487 = vmatprep.subr.bf16.mxu0 0
    %2488 = vmatpush1.bf16.xpose.msra.mxu0 0
    %2489 = vmatprep.subr.bf16.mxu0 0
    %2490 = vmatpush1.bf16.xpose.msra.mxu0 0
    %2491 = vmatprep.subr.bf16.mxu0 0
    %2492 = vmatpush1.bf16.xpose.msra.mxu0 0
    %2493 = vmatprep.subr.bf16.mxu0 0
    %2494 = vmatpush1.bf16.xpose.msra.mxu0 0
    %2495 = vmatprep.subr.bf16.mxu0 0
    %2496 = vmatpush1.bf16.xpose.msra.mxu0 0
    %2497 = vmatprep.subr.bf16.mxu0 0
    %2498 = vmatpush1.bf16.xpose.msra.mxu0 0
    %2499 = vmatprep.subr.bf16.mxu0 0
    %2500 = vmatpush1.bf16.xpose.msra.mxu0 0
    %2501 = vmatprep.subr.bf16.mxu0 0
    %2502 = vmatpush1.bf16.xpose.msra.mxu0 0
    %2503 = vmatprep.subr.bf16.mxu0 0
    %2504 = vmatpush1.bf16.xpose.msra.mxu0 0
    %2505 = vmatprep.mubr.bf16.mxu0 0
    %2506 = vmatmul.mubr.bf16.gmra.mrb[0].mxu0 %v2468
    %v2507 = vpop.f32.mrb[0].mxu0
    %v2508 = vadd.f32 %v2356, %v2507
    %v2509 = vpop.f32.mrb[0].mxu0
    %v2510 = vpop.f32.mrb[0].mxu0
    %v2511 = vadd.f32 %v2357, %v2510
    %v2512 = vpop.f32.mrb[0].mxu0
    %2513 = vdwg.mxu0
    %2515 = vrot.lane.b32.xlu0 %v2350, 112
    %v2516 = vpop.permute.xlu0 %2515
    %2517 = vrot.lane.b32.xlu0 %v2350, 80
    %v2518 = vpop.permute.xlu0 %2517
    %v2520 = vsel %vm272, %v2516, 0
    %v2523 = vsel %vm272, %v2518, 0
    %2525 = vmatprep.subr.bf16.mxu0 0
    %2526 = vmatpush1.bf16.xpose.msra.mxu0 %v2523
    %2527 = vmatprep.subr.bf16.mxu0 0
    %2528 = vmatpush1.bf16.xpose.msra.mxu0 0
    %2529 = vmatprep.subr.bf16.mxu0 0
    %2530 = vmatpush1.bf16.xpose.msra.mxu0 0
    %2531 = vmatprep.subr.bf16.mxu0 0
    %2532 = vmatpush1.bf16.xpose.msra.mxu0 0
    %2533 = vmatprep.subr.bf16.mxu0 0
    %2534 = vmatpush1.bf16.xpose.msra.mxu0 0
    %2535 = vmatprep.subr.bf16.mxu0 0
    %2536 = vmatpush1.bf16.xpose.msra.mxu0 0
    %2537 = vmatprep.subr.bf16.mxu0 0
    %2538 = vmatpush1.bf16.xpose.msra.mxu0 0
    %2539 = vmatprep.subr.bf16.mxu0 0
    %2540 = vmatpush1.bf16.xpose.msra.mxu0 0
    %2541 = vmatprep.subr.bf16.mxu0 0
    %2542 = vmatpush1.bf16.xpose.msra.mxu0 0
    %2543 = vmatprep.subr.bf16.mxu0 0
    %2544 = vmatpush1.bf16.xpose.msra.mxu0 0
    %2545 = vmatprep.subr.bf16.mxu0 0
    %2546 = vmatpush1.bf16.xpose.msra.mxu0 0
    %2547 = vmatprep.subr.bf16.mxu0 0
    %2548 = vmatpush1.bf16.xpose.msra.mxu0 0
    %2549 = vmatprep.subr.bf16.mxu0 0
    %2550 = vmatpush1.bf16.xpose.msra.mxu0 0
    %2551 = vmatprep.subr.bf16.mxu0 0
    %2552 = vmatpush1.bf16.xpose.msra.mxu0 0
    %2553 = vmatprep.subr.bf16.mxu0 0
    %2554 = vmatpush1.bf16.xpose.msra.mxu0 0
    %2555 = vmatprep.subr.bf16.mxu0 0
    %2556 = vmatpush1.bf16.xpose.msra.mxu0 0
    %2557 = vmatprep.mubr.bf16.mxu0 0
    %2558 = vmatmul.mubr.bf16.gmra.mrb[0].mxu0 %v2520
    %v2559 = vpop.f32.mrb[0].mxu0
    %v2560 = vadd.f32 %v2356, %v2559
    %v2561 = vpop.f32.mrb[0].mxu0
    %v2562 = vpop.f32.mrb[0].mxu0
    %v2563 = vadd.f32 %v2357, %v2562
    %v2564 = vpop.f32.mrb[0].mxu0
    %2565 = vdwg.mxu0
    %2567 = vrot.lane.b32.xlu0 %v2351, 112
    %v2568 = vpop.permute.xlu0 %2567
    %2569 = vrot.lane.b32.xlu0 %v2351, 80
    %v2570 = vpop.permute.xlu0 %2569
    %v2572 = vsel %vm272, %v2568, 0
    %v2575 = vsel %vm272, %v2570, 0
    %2577 = vmatprep.subr.bf16.mxu0 0
    %2578 = vmatpush1.bf16.xpose.msra.mxu0 %v2575
    %2579 = vmatprep.subr.bf16.mxu0 0
    %2580 = vmatpush1.bf16.xpose.msra.mxu0 0
    %2581 = vmatprep.subr.bf16.mxu0 0
    %2582 = vmatpush1.bf16.xpose.msra.mxu0 0
    %2583 = vmatprep.subr.bf16.mxu0 0
    %2584 = vmatpush1.bf16.xpose.msra.mxu0 0
    %2585 = vmatprep.subr.bf16.mxu0 0
    %2586 = vmatpush1.bf16.xpose.msra.mxu0 0
    %2587 = vmatprep.subr.bf16.mxu0 0
    %2588 = vmatpush1.bf16.xpose.msra.mxu0 0
    %2589 = vmatprep.subr.bf16.mxu0 0
    %2590 = vmatpush1.bf16.xpose.msra.mxu0 0
    %2591 = vmatprep.subr.bf16.mxu0 0
    %2592 = vmatpush1.bf16.xpose.msra.mxu0 0
    %2593 = vmatprep.subr.bf16.mxu0 0
    %2594 = vmatpush1.bf16.xpose.msra.mxu0 0
    %2595 = vmatprep.subr.bf16.mxu0 0
    %2596 = vmatpush1.bf16.xpose.msra.mxu0 0
    %2597 = vmatprep.subr.bf16.mxu0 0
    %2598 = vmatpush1.bf16.xpose.msra.mxu0 0
    %2599 = vmatprep.subr.bf16.mxu0 0
    %2600 = vmatpush1.bf16.xpose.msra.mxu0 0
    %2601 = vmatprep.subr.bf16.mxu0 0
    %2602 = vmatpush1.bf16.xpose.msra.mxu0 0
    %2603 = vmatprep.subr.bf16.mxu0 0
    %2604 = vmatpush1.bf16.xpose.msra.mxu0 0
    %2605 = vmatprep.subr.bf16.mxu0 0
    %2606 = vmatpush1.bf16.xpose.msra.mxu0 0
    %2607 = vmatprep.subr.bf16.mxu0 0
    %2608 = vmatpush1.bf16.xpose.msra.mxu0 0
    %2609 = vmatprep.mubr.bf16.mxu0 0
    %2610 = vmatmul.mubr.bf16.gmra.mrb[0].mxu0 %v2572
    %v2611 = vpop.f32.mrb[0].mxu0
    %v2612 = vadd.f32 %v2356, %v2611
    %v2613 = vpop.f32.mrb[0].mxu0
    %v2614 = vpop.f32.mrb[0].mxu0
    %v2615 = vadd.f32 %v2357, %v2614
    %v2616 = vpop.f32.mrb[0].mxu0
    %2617 = vdwg.mxu0
    %2619 = vrot.lane.b32.xlu0 %v2352, 112
    %v2620 = vpop.permute.xlu0 %2619
    %2621 = vrot.lane.b32.xlu0 %v2352, 80
    %v2622 = vpop.permute.xlu0 %2621
    %v2624 = vsel %vm272, %v2620, 0
    %v2627 = vsel %vm272, %v2622, 0
    %2629 = vmatprep.subr.bf16.mxu0 0
    %2630 = vmatpush1.bf16.xpose.msra.mxu0 %v2627
    %2631 = vmatprep.subr.bf16.mxu0 0
    %2632 = vmatpush1.bf16.xpose.msra.mxu0 0
    %2633 = vmatprep.subr.bf16.mxu0 0
    %2634 = vmatpush1.bf16.xpose.msra.mxu0 0
    %2635 = vmatprep.subr.bf16.mxu0 0
    %2636 = vmatpush1.bf16.xpose.msra.mxu0 0
    %2637 = vmatprep.subr.bf16.mxu0 0
    %2638 = vmatpush1.bf16.xpose.msra.mxu0 0
    %2639 = vmatprep.subr.bf16.mxu0 0
    %2640 = vmatpush1.bf16.xpose.msra.mxu0 0
    %2641 = vmatprep.subr.bf16.mxu0 0
    %2642 = vmatpush1.bf16.xpose.msra.mxu0 0
    %2643 = vmatprep.subr.bf16.mxu0 0
    %2644 = vmatpush1.bf16.xpose.msra.mxu0 0
    %2645 = vmatprep.subr.bf16.mxu0 0
    %2646 = vmatpush1.bf16.xpose.msra.mxu0 0
    %2647 = vmatprep.subr.bf16.mxu0 0
    %2648 = vmatpush1.bf16.xpose.msra.mxu0 0
    %2649 = vmatprep.subr.bf16.mxu0 0
    %2650 = vmatpush1.bf16.xpose.msra.mxu0 0
    %2651 = vmatprep.subr.bf16.mxu0 0
    %2652 = vmatpush1.bf16.xpose.msra.mxu0 0
    %2653 = vmatprep.subr.bf16.mxu0 0
    %2654 = vmatpush1.bf16.xpose.msra.mxu0 0
    %2655 = vmatprep.subr.bf16.mxu0 0
    %2656 = vmatpush1.bf16.xpose.msra.mxu0 0
    %2657 = vmatprep.subr.bf16.mxu0 0
    %2658 = vmatpush1.bf16.xpose.msra.mxu0 0
    %2659 = vmatprep.subr.bf16.mxu0 0
    %2660 = vmatpush1.bf16.xpose.msra.mxu0 0
    %2661 = vmatprep.mubr.bf16.mxu0 0
    %2662 = vmatmul.mubr.bf16.gmra.mrb[0].mxu0 %v2624
    %v2663 = vpop.f32.mrb[0].mxu0
    %v2664 = vadd.f32 %v2356, %v2663
    %v2665 = vpop.f32.mrb[0].mxu0
    %v2666 = vpop.f32.mrb[0].mxu0
    %v2667 = vadd.f32 %v2357, %v2666
    %v2668 = vpop.f32.mrb[0].mxu0
    %2669 = vdwg.mxu0
    %2671 = vrot.lane.b32.xlu0 %v2353, 112
    %v2672 = vpop.permute.xlu0 %2671
    %2673 = vrot.lane.b32.xlu0 %v2353, 80
    %v2674 = vpop.permute.xlu0 %2673
    %v2676 = vsel %vm272, %v2672, 0
    %v2679 = vsel %vm272, %v2674, 0
    %2681 = vmatprep.subr.bf16.mxu0 0
    %2682 = vmatpush1.bf16.xpose.msra.mxu0 %v2679
    %2683 = vmatprep.subr.bf16.mxu0 0
    %2684 = vmatpush1.bf16.xpose.msra.mxu0 0
    %2685 = vmatprep.subr.bf16.mxu0 0
    %2686 = vmatpush1.bf16.xpose.msra.mxu0 0
    %2687 = vmatprep.subr.bf16.mxu0 0
    %2688 = vmatpush1.bf16.xpose.msra.mxu0 0
    %2689 = vmatprep.subr.bf16.mxu0 0
    %2690 = vmatpush1.bf16.xpose.msra.mxu0 0
    %2691 = vmatprep.subr.bf16.mxu0 0
    %2692 = vmatpush1.bf16.xpose.msra.mxu0 0
    %2693 = vmatprep.subr.bf16.mxu0 0
    %2694 = vmatpush1.bf16.xpose.msra.mxu0 0
    %2695 = vmatprep.subr.bf16.mxu0 0
    %2696 = vmatpush1.bf16.xpose.msra.mxu0 0
    %2697 = vmatprep.subr.bf16.mxu0 0
    %2698 = vmatpush1.bf16.xpose.msra.mxu0 0
    %2699 = vmatprep.subr.bf16.mxu0 0
    %2700 = vmatpush1.bf16.xpose.msra.mxu0 0
    %2701 = vmatprep.subr.bf16.mxu0 0
    %2702 = vmatpush1.bf16.xpose.msra.mxu0 0
    %2703 = vmatprep.subr.bf16.mxu0 0
    %2704 = vmatpush1.bf16.xpose.msra.mxu0 0
    %2705 = vmatprep.subr.bf16.mxu0 0
    %2706 = vmatpush1.bf16.xpose.msra.mxu0 0
    %2707 = vmatprep.subr.bf16.mxu0 0
    %2708 = vmatpush1.bf16.xpose.msra.mxu0 0
    %2709 = vmatprep.subr.bf16.mxu0 0
    %2710 = vmatpush1.bf16.xpose.msra.mxu0 0
    %2711 = vmatprep.subr.bf16.mxu0 0
    %2712 = vmatpush1.bf16.xpose.msra.mxu0 0
    %2713 = vmatprep.mubr.bf16.mxu0 0
    %2714 = vmatmul.mubr.bf16.gmra.mrb[0].mxu0 %v2676
    %v2715 = vpop.f32.mrb[0].mxu0
    %v2716 = vadd.f32 %v2356, %v2715
    %v2717 = vpop.f32.mrb[0].mxu0
    %v2718 = vpop.f32.mrb[0].mxu0
    %v2719 = vadd.f32 %v2357, %v2718
    %v2720 = vpop.f32.mrb[0].mxu0
    %2721 = vdwg.mxu0
    %2723 = vrot.lane.b32.xlu0 %v2354, 112
    %v2724 = vpop.permute.xlu0 %2723
    %2725 = vrot.lane.b32.xlu0 %v2354, 80
    %v2726 = vpop.permute.xlu0 %2725
    %v2728 = vsel %vm272, %v2724, 0
    %v2731 = vsel %vm272, %v2726, 0
    %2733 = vmatprep.subr.bf16.mxu0 0
    %2734 = vmatpush1.bf16.xpose.msra.mxu0 %v2731
    %2735 = vmatprep.subr.bf16.mxu0 0
    %2736 = vmatpush1.bf16.xpose.msra.mxu0 0
    %2737 = vmatprep.subr.bf16.mxu0 0
    %2738 = vmatpush1.bf16.xpose.msra.mxu0 0
    %2739 = vmatprep.subr.bf16.mxu0 0
    %2740 = vmatpush1.bf16.xpose.msra.mxu0 0
    %2741 = vmatprep.subr.bf16.mxu0 0
    %2742 = vmatpush1.bf16.xpose.msra.mxu0 0
    %2743 = vmatprep.subr.bf16.mxu0 0
    %2744 = vmatpush1.bf16.xpose.msra.mxu0 0
    %2745 = vmatprep.subr.bf16.mxu0 0
    %2746 = vmatpush1.bf16.xpose.msra.mxu0 0
    %2747 = vmatprep.subr.bf16.mxu0 0
    %2748 = vmatpush1.bf16.xpose.msra.mxu0 0
    %2749 = vmatprep.subr.bf16.mxu0 0
    %2750 = vmatpush1.bf16.xpose.msra.mxu0 0
    %2751 = vmatprep.subr.bf16.mxu0 0
    %2752 = vmatpush1.bf16.xpose.msra.mxu0 0
    %2753 = vmatprep.subr.bf16.mxu0 0
    %2754 = vmatpush1.bf16.xpose.msra.mxu0 0
    %2755 = vmatprep.subr.bf16.mxu0 0
    %2756 = vmatpush1.bf16.xpose.msra.mxu0 0
    %2757 = vmatprep.subr.bf16.mxu0 0
    %2758 = vmatpush1.bf16.xpose.msra.mxu0 0
    %2759 = vmatprep.subr.bf16.mxu0 0
    %2760 = vmatpush1.bf16.xpose.msra.mxu0 0
    %2761 = vmatprep.subr.bf16.mxu0 0
    %2762 = vmatpush1.bf16.xpose.msra.mxu0 0
    %2763 = vmatprep.subr.bf16.mxu0 0
    %2764 = vmatpush1.bf16.xpose.msra.mxu0 0
    %2765 = vmatprep.mubr.bf16.mxu0 0
    %2766 = vmatmul.mubr.bf16.gmra.mrb[0].mxu0 %v2728
    %v2767 = vpop.f32.mrb[0].mxu0
    %v2768 = vadd.f32 %v2356, %v2767
    %v2769 = vpop.f32.mrb[0].mxu0
    %v2770 = vpop.f32.mrb[0].mxu0
    %v2771 = vadd.f32 %v2357, %v2770
    %v2772 = vpop.f32.mrb[0].mxu0
    %2773 = vdwg.mxu0
    %v2774 = vsel %vm670, %v2404, -inf
    %2775 = vmax.xlane.f32.xlu0 %v2774
    %v2776 = vpop.xlane.xlu0 %2775
    %v2777 = vsel %vm670, %v2407, -inf
    %2778 = vmax.xlane.f32.xlu0 %v2777
    %v2779 = vpop.xlane.xlu0 %2778
    %v2780 = vsel %vm670, %v2456, -inf
    %2781 = vmax.xlane.f32.xlu0 %v2780
    %v2782 = vpop.xlane.xlu0 %2781
    %v2783 = vsel %vm670, %v2459, -inf
    %2784 = vmax.xlane.f32.xlu0 %v2783
    %v2785 = vpop.xlane.xlu0 %2784
    %v2786 = vsel %vm670, %v2508, -inf
    %2787 = vmax.xlane.f32.xlu0 %v2786
    %v2788 = vpop.xlane.xlu0 %2787
    %v2789 = vsel %vm670, %v2511, -inf
    %2790 = vmax.xlane.f32.xlu0 %v2789
    %v2791 = vpop.xlane.xlu0 %2790
    %v2792 = vsel %vm670, %v2560, -inf
    %2793 = vmax.xlane.f32.xlu0 %v2792
    %v2794 = vpop.xlane.xlu0 %2793
    %v2795 = vsel %vm670, %v2563, -inf
    %2796 = vmax.xlane.f32.xlu0 %v2795
    %v2797 = vpop.xlane.xlu0 %2796
    %v2798 = vsel %vm670, %v2612, -inf
    %2799 = vmax.xlane.f32.xlu0 %v2798
    %v2800 = vpop.xlane.xlu0 %2799
    %v2801 = vsel %vm670, %v2615, -inf
    %2802 = vmax.xlane.f32.xlu0 %v2801
    %v2803 = vpop.xlane.xlu0 %2802
    %v2804 = vsel %vm670, %v2664, -inf
    %2805 = vmax.xlane.f32.xlu0 %v2804
    %v2806 = vpop.xlane.xlu0 %2805
    %v2807 = vsel %vm670, %v2667, -inf
    %2808 = vmax.xlane.f32.xlu0 %v2807
    %v2809 = vpop.xlane.xlu0 %2808
    %v2810 = vsel %vm670, %v2716, -inf
    %2811 = vmax.xlane.f32.xlu0 %v2810
    %v2812 = vpop.xlane.xlu0 %2811
    %v2813 = vsel %vm670, %v2719, -inf
    %2814 = vmax.xlane.f32.xlu0 %v2813
    %v2815 = vpop.xlane.xlu0 %2814
    %v2816 = vsel %vm670, %v2768, -inf
    %2817 = vmax.xlane.f32.xlu0 %v2816
    %v2818 = vpop.xlane.xlu0 %2817
    %v2819 = vsel %vm670, %v2771, -inf
    %2820 = vmax.xlane.f32.xlu0 %v2819
    %v2821 = vpop.xlane.xlu0 %2820
    %v2822 = vsub.f32 %v2404, %v2776
    %v2823 = vsub.f32 %v2407, %v2779
    %v2824 = vsub.f32 %v2456, %v2782
    %v2825 = vsub.f32 %v2459, %v2785
    %v2826 = vsub.f32 %v2508, %v2788
    %v2827 = vsub.f32 %v2511, %v2791
    %v2828 = vsub.f32 %v2560, %v2794
    %v2829 = vsub.f32 %v2563, %v2797
    %v2830 = vsub.f32 %v2612, %v2800
    %v2831 = vsub.f32 %v2615, %v2803
    %v2832 = vsub.f32 %v2664, %v2806
    %v2833 = vsub.f32 %v2667, %v2809
    %v2834 = vsub.f32 %v2716, %v2812
    %v2835 = vsub.f32 %v2719, %v2815
    %v2836 = vsub.f32 %v2768, %v2818
    %v2837 = vsub.f32 %v2771, %v2821
    %v2838 = vmul.f32 %v2822, 1.442695
    %v2839 = vpow.pop %v2838
    %v2840 = vmul.f32 %v2823, 1.442695
    %v2841 = vpow.pop %v2840
    %v2842 = vmul.f32 %v2824, 1.442695
    %v2843 = vpow.pop %v2842
    %v2844 = vmul.f32 %v2825, 1.442695
    %v2845 = vpow.pop %v2844
    %v2846 = vmul.f32 %v2826, 1.442695
    %v2847 = vpow.pop %v2846
    %v2848 = vmul.f32 %v2827, 1.442695
    %v2849 = vpow.pop %v2848
    %v2850 = vmul.f32 %v2828, 1.442695
    %v2851 = vpow.pop %v2850
    %v2852 = vmul.f32 %v2829, 1.442695
    %v2853 = vpow.pop %v2852
    %v2854 = vmul.f32 %v2830, 1.442695
    %v2855 = vpow.pop %v2854
    %v2856 = vmul.f32 %v2831, 1.442695
    %v2857 = vpow.pop %v2856
    %v2858 = vmul.f32 %v2832, 1.442695
    %v2859 = vpow.pop %v2858
    %v2860 = vmul.f32 %v2833, 1.442695
    %v2861 = vpow.pop %v2860
    %v2862 = vmul.f32 %v2834, 1.442695
    %v2863 = vpow.pop %v2862
    %v2864 = vmul.f32 %v2835, 1.442695
    %v2865 = vpow.pop %v2864
    %v2866 = vmul.f32 %v2836, 1.442695
    %v2867 = vpow.pop %v2866
    %v2868 = vmul.f32 %v2837, 1.442695
    %v2869 = vpow.pop %v2868
    %v2870 = vsel %vm670, %v2839, 0.0
    %2871 = vadd.xlane.f32.xlu0 %v2870
    %v2872 = vpop.xlane.xlu0 %2871
    %v2873 = vsel %vm670, %v2841, 0.0
    %2874 = vadd.xlane.f32.xlu0 %v2873
    %v2875 = vpop.xlane.xlu0 %2874
    %v2876 = vsel %vm670, %v2843, 0.0
    %2877 = vadd.xlane.f32.xlu0 %v2876
    %v2878 = vpop.xlane.xlu0 %2877
    %v2879 = vsel %vm670, %v2845, 0.0
    %2880 = vadd.xlane.f32.xlu0 %v2879
    %v2881 = vpop.xlane.xlu0 %2880
    %v2882 = vsel %vm670, %v2847, 0.0
    %2883 = vadd.xlane.f32.xlu0 %v2882
    %v2884 = vpop.xlane.xlu0 %2883
    %v2885 = vsel %vm670, %v2849, 0.0
    %2886 = vadd.xlane.f32.xlu0 %v2885
    %v2887 = vpop.xlane.xlu0 %2886
    %v2888 = vsel %vm670, %v2851, 0.0
    %2889 = vadd.xlane.f32.xlu0 %v2888
    %v2890 = vpop.xlane.xlu0 %2889
    %v2891 = vsel %vm670, %v2853, 0.0
    %2892 = vadd.xlane.f32.xlu0 %v2891
    %v2893 = vpop.xlane.xlu0 %2892
    %v2894 = vsel %vm670, %v2855, 0.0
    %2895 = vadd.xlane.f32.xlu0 %v2894
    %v2896 = vpop.xlane.xlu0 %2895
    %v2897 = vsel %vm670, %v2857, 0.0
    %2898 = vadd.xlane.f32.xlu0 %v2897
    %v2899 = vpop.xlane.xlu0 %2898
    %v2900 = vsel %vm670, %v2859, 0.0
    %2901 = vadd.xlane.f32.xlu0 %v2900
    %v2902 = vpop.xlane.xlu0 %2901
    %v2903 = vsel %vm670, %v2861, 0.0
    %2904 = vadd.xlane.f32.xlu0 %v2903
    %v2905 = vpop.xlane.xlu0 %2904
    %v2906 = vsel %vm670, %v2863, 0.0
    %2907 = vadd.xlane.f32.xlu0 %v2906
    %v2908 = vpop.xlane.xlu0 %2907
    %v2909 = vsel %vm670, %v2865, 0.0
    %2910 = vadd.xlane.f32.xlu0 %v2909
    %v2911 = vpop.xlane.xlu0 %2910
    %v2912 = vsel %vm670, %v2867, 0.0
    %2913 = vadd.xlane.f32.xlu0 %v2912
    %v2914 = vpop.xlane.xlu0 %2913
    %v2915 = vsel %vm670, %v2869, 0.0
    %2916 = vadd.xlane.f32.xlu0 %v2915
    %v2917 = vpop.xlane.xlu0 %2916
    %v2918 = vrcp.pop %v2872
    %v2919 = vrcp.pop %v2875
    %v2920 = vrcp.pop %v2878
    %v2921 = vrcp.pop %v2881
    %v2922 = vrcp.pop %v2884
    %v2923 = vrcp.pop %v2887
    %v2924 = vrcp.pop %v2890
    %v2925 = vrcp.pop %v2893
    %v2926 = vrcp.pop %v2896
    %v2927 = vrcp.pop %v2899
    %v2928 = vrcp.pop %v2902
    %v2929 = vrcp.pop %v2905
    %v2930 = vrcp.pop %v2908
    %v2931 = vrcp.pop %v2911
    %v2932 = vrcp.pop %v2914
    %v2933 = vrcp.pop %v2917
    %v2934 = vmul.f32 %v2839, %v2918
    %v2935 = vmul.f32 %v2841, %v2919
    %v2936 = vmul.f32 %v2843, %v2920
    %v2937 = vmul.f32 %v2845, %v2921
    %v2938 = vmul.f32 %v2847, %v2922
    %v2939 = vmul.f32 %v2849, %v2923
    %v2940 = vmul.f32 %v2851, %v2924
    %v2941 = vmul.f32 %v2853, %v2925
    %v2942 = vmul.f32 %v2855, %v2926
    %v2943 = vmul.f32 %v2857, %v2927
    %v2944 = vmul.f32 %v2859, %v2928
    %v2945 = vmul.f32 %v2861, %v2929
    %v2946 = vmul.f32 %v2863, %v2930
    %v2947 = vmul.f32 %v2865, %v2931
    %v2948 = vmul.f32 %v2867, %v2932
    %v2949 = vmul.f32 %v2869, %v2933
    %v2950 = vpack.c.bf16 %v2935, %v2934
    %v2951 = vpack.c.bf16 %v2937, %v2936
    %v2952 = vpack.c.bf16 %v2939, %v2938
    %v2953 = vpack.c.bf16 %v2941, %v2940
    %v2954 = vpack.c.bf16 %v2943, %v2942
    %v2955 = vpack.c.bf16 %v2945, %v2944
    %v2956 = vpack.c.bf16 %v2947, %v2946
    %v2957 = vpack.c.bf16 %v2949, %v2948
    %2958 = vrot.lane.b32.xlu0 %v2347, 48
    %v2959 = vpop.permute.xlu0 %2958
    %v2962 = vsel %vm670, %v2950, 0
    %2964 = vmatprep.subr.bf16.mxu0 0
    %2965 = vmatpush1.bf16.msra.mxu0 %v2959
    %2966 = vmatprep.subr.bf16.mxu0 0
    %2967 = vmatpush1.bf16.msra.mxu0 0
    %2968 = vmatprep.subr.bf16.mxu0 0
    %2969 = vmatpush1.bf16.msra.mxu0 0
    %2970 = vmatprep.subr.bf16.mxu0 0
    %2971 = vmatpush1.bf16.msra.mxu0 0
    %2972 = vmatprep.subr.bf16.mxu0 0
    %2973 = vmatpush1.bf16.msra.mxu0 0
    %2974 = vmatprep.subr.bf16.mxu0 0
    %2975 = vmatpush1.bf16.msra.mxu0 0
    %2976 = vmatprep.subr.bf16.mxu0 0
    %2977 = vmatpush1.bf16.msra.mxu0 0
    %2978 = vmatprep.subr.bf16.mxu0 0
    %2979 = vmatpush1.bf16.msra.mxu0 0
    %2980 = vmatprep.subr.bf16.mxu0 0
    %2981 = vmatpush1.bf16.msra.mxu0 0
    %2982 = vmatprep.subr.bf16.mxu0 0
    %2983 = vmatpush1.bf16.msra.mxu0 0
    %2984 = vmatprep.subr.bf16.mxu0 0
    %2985 = vmatpush1.bf16.msra.mxu0 0
    %2986 = vmatprep.subr.bf16.mxu0 0
    %2987 = vmatpush1.bf16.msra.mxu0 0
    %2988 = vmatprep.subr.bf16.mxu0 0
    %2989 = vmatpush1.bf16.msra.mxu0 0
    %2990 = vmatprep.subr.bf16.mxu0 0
    %2991 = vmatpush1.bf16.msra.mxu0 0
    %2992 = vmatprep.subr.bf16.mxu0 0
    %2993 = vmatpush1.bf16.msra.mxu0 0
    %2994 = vmatprep.subr.bf16.mxu0 0
    %2995 = vmatpush1.bf16.msra.mxu0 0
    %2996 = vmatprep.mubr.bf16.mxu0 0
    %2997 = vmatmul.mubr.bf16.gmra.mrb[0].mxu0 %v2962
    %v2998 = vpop.f32.mrb[0].mxu0
    %v2999 = vadd.f32 0.0, %v2998
    %v3000 = vpop.f32.mrb[0].mxu0
    %v3001 = vpop.f32.mrb[0].mxu0
    %v3002 = vadd.f32 0.0, %v3001
    %v3003 = vpop.f32.mrb[0].mxu0
    %3004 = vdwg.mxu0
    %3005 = vrot.lane.b32.xlu0 %v2348, 48
    %v3006 = vpop.permute.xlu0 %3005
    %v3009 = vsel %vm670, %v2951, 0
    %3011 = vmatprep.subr.bf16.mxu0 0
    %3012 = vmatpush1.bf16.msra.mxu0 %v3006
    %3013 = vmatprep.subr.bf16.mxu0 0
    %3014 = vmatpush1.bf16.msra.mxu0 0
    %3015 = vmatprep.subr.bf16.mxu0 0
    %3016 = vmatpush1.bf16.msra.mxu0 0
    %3017 = vmatprep.subr.bf16.mxu0 0
    %3018 = vmatpush1.bf16.msra.mxu0 0
    %3019 = vmatprep.subr.bf16.mxu0 0
    %3020 = vmatpush1.bf16.msra.mxu0 0
    %3021 = vmatprep.subr.bf16.mxu0 0
    %3022 = vmatpush1.bf16.msra.mxu0 0
    %3023 = vmatprep.subr.bf16.mxu0 0
    %3024 = vmatpush1.bf16.msra.mxu0 0
    %3025 = vmatprep.subr.bf16.mxu0 0
    %3026 = vmatpush1.bf16.msra.mxu0 0
    %3027 = vmatprep.subr.bf16.mxu0 0
    %3028 = vmatpush1.bf16.msra.mxu0 0
    %3029 = vmatprep.subr.bf16.mxu0 0
    %3030 = vmatpush1.bf16.msra.mxu0 0
    %3031 = vmatprep.subr.bf16.mxu0 0
    %3032 = vmatpush1.bf16.msra.mxu0 0
    %3033 = vmatprep.subr.bf16.mxu0 0
    %3034 = vmatpush1.bf16.msra.mxu0 0
    %3035 = vmatprep.subr.bf16.mxu0 0
    %3036 = vmatpush1.bf16.msra.mxu0 0
    %3037 = vmatprep.subr.bf16.mxu0 0
    %3038 = vmatpush1.bf16.msra.mxu0 0
    %3039 = vmatprep.subr.bf16.mxu0 0
    %3040 = vmatpush1.bf16.msra.mxu0 0
    %3041 = vmatprep.subr.bf16.mxu0 0
    %3042 = vmatpush1.bf16.msra.mxu0 0
    %3043 = vmatprep.mubr.bf16.mxu0 0
    %3044 = vmatmul.mubr.bf16.gmra.mrb[0].mxu0 %v3009
    %v3045 = vpop.f32.mrb[0].mxu0
    %v3046 = vadd.f32 0.0, %v3045
    %v3047 = vpop.f32.mrb[0].mxu0
    %v3048 = vpop.f32.mrb[0].mxu0
    %v3049 = vadd.f32 0.0, %v3048
    %v3050 = vpop.f32.mrb[0].mxu0
    %3051 = vdwg.mxu0
    %3052 = vrot.lane.b32.xlu0 %v2349, 48
    %v3053 = vpop.permute.xlu0 %3052
    %v3056 = vsel %vm670, %v2952, 0
    %3058 = vmatprep.subr.bf16.mxu0 0
    %3059 = vmatpush1.bf16.msra.mxu0 %v3053
    %3060 = vmatprep.subr.bf16.mxu0 0
    %3061 = vmatpush1.bf16.msra.mxu0 0
    %3062 = vmatprep.subr.bf16.mxu0 0
    %3063 = vmatpush1.bf16.msra.mxu0 0
    %3064 = vmatprep.subr.bf16.mxu0 0
    %3065 = vmatpush1.bf16.msra.mxu0 0
    %3066 = vmatprep.subr.bf16.mxu0 0
    %3067 = vmatpush1.bf16.msra.mxu0 0
    %3068 = vmatprep.subr.bf16.mxu0 0
    %3069 = vmatpush1.bf16.msra.mxu0 0
    %3070 = vmatprep.subr.bf16.mxu0 0
    %3071 = vmatpush1.bf16.msra.mxu0 0
    %3072 = vmatprep.subr.bf16.mxu0 0
    %3073 = vmatpush1.bf16.msra.mxu0 0
    %3074 = vmatprep.subr.bf16.mxu0 0
    %3075 = vmatpush1.bf16.msra.mxu0 0
    %3076 = vmatprep.subr.bf16.mxu0 0
    %3077 = vmatpush1.bf16.msra.mxu0 0
    %3078 = vmatprep.subr.bf16.mxu0 0
    %3079 = vmatpush1.bf16.msra.mxu0 0
    %3080 = vmatprep.subr.bf16.mxu0 0
    %3081 = vmatpush1.bf16.msra.mxu0 0
    %3082 = vmatprep.subr.bf16.mxu0 0
    %3083 = vmatpush1.bf16.msra.mxu0 0
    %3084 = vmatprep.subr.bf16.mxu0 0
    %3085 = vmatpush1.bf16.msra.mxu0 0
    %3086 = vmatprep.subr.bf16.mxu0 0
    %3087 = vmatpush1.bf16.msra.mxu0 0
    %3088 = vmatprep.subr.bf16.mxu0 0
    %3089 = vmatpush1.bf16.msra.mxu0 0
    %3090 = vmatprep.mubr.bf16.mxu0 0
    %3091 = vmatmul.mubr.bf16.gmra.mrb[0].mxu0 %v3056
    %v3092 = vpop.f32.mrb[0].mxu0
    %v3093 = vadd.f32 0.0, %v3092
    %v3094 = vpop.f32.mrb[0].mxu0
    %v3095 = vpop.f32.mrb[0].mxu0
    %v3096 = vadd.f32 0.0, %v3095
    %v3097 = vpop.f32.mrb[0].mxu0
    %3098 = vdwg.mxu0
    %3099 = vrot.lane.b32.xlu0 %v2350, 48
    %v3100 = vpop.permute.xlu0 %3099
    %v3103 = vsel %vm670, %v2953, 0
    %3105 = vmatprep.subr.bf16.mxu0 0
    %3106 = vmatpush1.bf16.msra.mxu0 %v3100
    %3107 = vmatprep.subr.bf16.mxu0 0
    %3108 = vmatpush1.bf16.msra.mxu0 0
    %3109 = vmatprep.subr.bf16.mxu0 0
    %3110 = vmatpush1.bf16.msra.mxu0 0
    %3111 = vmatprep.subr.bf16.mxu0 0
    %3112 = vmatpush1.bf16.msra.mxu0 0
    %3113 = vmatprep.subr.bf16.mxu0 0
    %3114 = vmatpush1.bf16.msra.mxu0 0
    %3115 = vmatprep.subr.bf16.mxu0 0
    %3116 = vmatpush1.bf16.msra.mxu0 0
    %3117 = vmatprep.subr.bf16.mxu0 0
    %3118 = vmatpush1.bf16.msra.mxu0 0
    %3119 = vmatprep.subr.bf16.mxu0 0
    %3120 = vmatpush1.bf16.msra.mxu0 0
    %3121 = vmatprep.subr.bf16.mxu0 0
    %3122 = vmatpush1.bf16.msra.mxu0 0
    %3123 = vmatprep.subr.bf16.mxu0 0
    %3124 = vmatpush1.bf16.msra.mxu0 0
    %3125 = vmatprep.subr.bf16.mxu0 0
    %3126 = vmatpush1.bf16.msra.mxu0 0
    %3127 = vmatprep.subr.bf16.mxu0 0
    %3128 = vmatpush1.bf16.msra.mxu0 0
    %3129 = vmatprep.subr.bf16.mxu0 0
    %3130 = vmatpush1.bf16.msra.mxu0 0
    %3131 = vmatprep.subr.bf16.mxu0 0
    %3132 = vmatpush1.bf16.msra.mxu0 0
    %3133 = vmatprep.subr.bf16.mxu0 0
    %3134 = vmatpush1.bf16.msra.mxu0 0
    %3135 = vmatprep.subr.bf16.mxu0 0
    %3136 = vmatpush1.bf16.msra.mxu0 0
    %3137 = vmatprep.mubr.bf16.mxu0 0
    %3138 = vmatmul.mubr.bf16.gmra.mrb[0].mxu0 %v3103
    %v3139 = vpop.f32.mrb[0].mxu0
    %v3140 = vadd.f32 0.0, %v3139
    %v3141 = vpop.f32.mrb[0].mxu0
    %v3142 = vpop.f32.mrb[0].mxu0
    %v3143 = vadd.f32 0.0, %v3142
    %v3144 = vpop.f32.mrb[0].mxu0
    %3145 = vdwg.mxu0
    %3146 = vrot.lane.b32.xlu0 %v2351, 48
    %v3147 = vpop.permute.xlu0 %3146
    %v3150 = vsel %vm670, %v2954, 0
    %3152 = vmatprep.subr.bf16.mxu0 0
    %3153 = vmatpush1.bf16.msra.mxu0 %v3147
    %3154 = vmatprep.subr.bf16.mxu0 0
    %3155 = vmatpush1.bf16.msra.mxu0 0
    %3156 = vmatprep.subr.bf16.mxu0 0
    %3157 = vmatpush1.bf16.msra.mxu0 0
    %3158 = vmatprep.subr.bf16.mxu0 0
    %3159 = vmatpush1.bf16.msra.mxu0 0
    %3160 = vmatprep.subr.bf16.mxu0 0
    %3161 = vmatpush1.bf16.msra.mxu0 0
    %3162 = vmatprep.subr.bf16.mxu0 0
    %3163 = vmatpush1.bf16.msra.mxu0 0
    %3164 = vmatprep.subr.bf16.mxu0 0
    %3165 = vmatpush1.bf16.msra.mxu0 0
    %3166 = vmatprep.subr.bf16.mxu0 0
    %3167 = vmatpush1.bf16.msra.mxu0 0
    %3168 = vmatprep.subr.bf16.mxu0 0
    %3169 = vmatpush1.bf16.msra.mxu0 0
    %3170 = vmatprep.subr.bf16.mxu0 0
    %3171 = vmatpush1.bf16.msra.mxu0 0
    %3172 = vmatprep.subr.bf16.mxu0 0
    %3173 = vmatpush1.bf16.msra.mxu0 0
    %3174 = vmatprep.subr.bf16.mxu0 0
    %3175 = vmatpush1.bf16.msra.mxu0 0
    %3176 = vmatprep.subr.bf16.mxu0 0
    %3177 = vmatpush1.bf16.msra.mxu0 0
    %3178 = vmatprep.subr.bf16.mxu0 0
    %3179 = vmatpush1.bf16.msra.mxu0 0
    %3180 = vmatprep.subr.bf16.mxu0 0
    %3181 = vmatpush1.bf16.msra.mxu0 0
    %3182 = vmatprep.subr.bf16.mxu0 0
    %3183 = vmatpush1.bf16.msra.mxu0 0
    %3184 = vmatprep.mubr.bf16.mxu0 0
    %3185 = vmatmul.mubr.bf16.gmra.mrb[0].mxu0 %v3150
    %v3186 = vpop.f32.mrb[0].mxu0
    %v3187 = vadd.f32 0.0, %v3186
    %v3188 = vpop.f32.mrb[0].mxu0
    %v3189 = vpop.f32.mrb[0].mxu0
    %v3190 = vadd.f32 0.0, %v3189
    %v3191 = vpop.f32.mrb[0].mxu0
    %3192 = vdwg.mxu0
    %3193 = vrot.lane.b32.xlu0 %v2352, 48
    %v3194 = vpop.permute.xlu0 %3193
    %v3197 = vsel %vm670, %v2955, 0
    %3199 = vmatprep.subr.bf16.mxu0 0
    %3200 = vmatpush1.bf16.msra.mxu0 %v3194
    %3201 = vmatprep.subr.bf16.mxu0 0
    %3202 = vmatpush1.bf16.msra.mxu0 0
    %3203 = vmatprep.subr.bf16.mxu0 0
    %3204 = vmatpush1.bf16.msra.mxu0 0
    %3205 = vmatprep.subr.bf16.mxu0 0
    %3206 = vmatpush1.bf16.msra.mxu0 0
    %3207 = vmatprep.subr.bf16.mxu0 0
    %3208 = vmatpush1.bf16.msra.mxu0 0
    %3209 = vmatprep.subr.bf16.mxu0 0
    %3210 = vmatpush1.bf16.msra.mxu0 0
    %3211 = vmatprep.subr.bf16.mxu0 0
    %3212 = vmatpush1.bf16.msra.mxu0 0
    %3213 = vmatprep.subr.bf16.mxu0 0
    %3214 = vmatpush1.bf16.msra.mxu0 0
    %3215 = vmatprep.subr.bf16.mxu0 0
    %3216 = vmatpush1.bf16.msra.mxu0 0
    %3217 = vmatprep.subr.bf16.mxu0 0
    %3218 = vmatpush1.bf16.msra.mxu0 0
    %3219 = vmatprep.subr.bf16.mxu0 0
    %3220 = vmatpush1.bf16.msra.mxu0 0
    %3221 = vmatprep.subr.bf16.mxu0 0
    %3222 = vmatpush1.bf16.msra.mxu0 0
    %3223 = vmatprep.subr.bf16.mxu0 0
    %3224 = vmatpush1.bf16.msra.mxu0 0
    %3225 = vmatprep.subr.bf16.mxu0 0
    %3226 = vmatpush1.bf16.msra.mxu0 0
    %3227 = vmatprep.subr.bf16.mxu0 0
    %3228 = vmatpush1.bf16.msra.mxu0 0
    %3229 = vmatprep.subr.bf16.mxu0 0
    %3230 = vmatpush1.bf16.msra.mxu0 0
    %3231 = vmatprep.mubr.bf16.mxu0 0
    %3232 = vmatmul.mubr.bf16.gmra.mrb[0].mxu0 %v3197
    %v3233 = vpop.f32.mrb[0].mxu0
    %v3234 = vadd.f32 0.0, %v3233
    %v3235 = vpop.f32.mrb[0].mxu0
    %v3236 = vpop.f32.mrb[0].mxu0
    %v3237 = vadd.f32 0.0, %v3236
    %v3238 = vpop.f32.mrb[0].mxu0
    %3239 = vdwg.mxu0
    %3240 = vrot.lane.b32.xlu0 %v2353, 48
    %v3241 = vpop.permute.xlu0 %3240
    %v3244 = vsel %vm670, %v2956, 0
    %3246 = vmatprep.subr.bf16.mxu0 0
    %3247 = vmatpush1.bf16.msra.mxu0 %v3241
    %3248 = vmatprep.subr.bf16.mxu0 0
    %3249 = vmatpush1.bf16.msra.mxu0 0
    %3250 = vmatprep.subr.bf16.mxu0 0
    %3251 = vmatpush1.bf16.msra.mxu0 0
    %3252 = vmatprep.subr.bf16.mxu0 0
    %3253 = vmatpush1.bf16.msra.mxu0 0
    %3254 = vmatprep.subr.bf16.mxu0 0
    %3255 = vmatpush1.bf16.msra.mxu0 0
    %3256 = vmatprep.subr.bf16.mxu0 0
    %3257 = vmatpush1.bf16.msra.mxu0 0
    %3258 = vmatprep.subr.bf16.mxu0 0
    %3259 = vmatpush1.bf16.msra.mxu0 0
    %3260 = vmatprep.subr.bf16.mxu0 0
    %3261 = vmatpush1.bf16.msra.mxu0 0
    %3262 = vmatprep.subr.bf16.mxu0 0
    %3263 = vmatpush1.bf16.msra.mxu0 0
    %3264 = vmatprep.subr.bf16.mxu0 0
    %3265 = vmatpush1.bf16.msra.mxu0 0
    %3266 = vmatprep.subr.bf16.mxu0 0
    %3267 = vmatpush1.bf16.msra.mxu0 0
    %3268 = vmatprep.subr.bf16.mxu0 0
    %3269 = vmatpush1.bf16.msra.mxu0 0
    %3270 = vmatprep.subr.bf16.mxu0 0
    %3271 = vmatpush1.bf16.msra.mxu0 0
    %3272 = vmatprep.subr.bf16.mxu0 0
    %3273 = vmatpush1.bf16.msra.mxu0 0
    %3274 = vmatprep.subr.bf16.mxu0 0
    %3275 = vmatpush1.bf16.msra.mxu0 0
    %3276 = vmatprep.subr.bf16.mxu0 0
    %3277 = vmatpush1.bf16.msra.mxu0 0
    %3278 = vmatprep.mubr.bf16.mxu0 0
    %3279 = vmatmul.mubr.bf16.gmra.mrb[0].mxu0 %v3244
    %v3280 = vpop.f32.mrb[0].mxu0
    %v3281 = vadd.f32 0.0, %v3280
    %v3282 = vpop.f32.mrb[0].mxu0
    %v3283 = vpop.f32.mrb[0].mxu0
    %v3284 = vadd.f32 0.0, %v3283
    %v3285 = vpop.f32.mrb[0].mxu0
    %3286 = vdwg.mxu0
    %3287 = vrot.lane.b32.xlu0 %v2354, 48
    %v3288 = vpop.permute.xlu0 %3287
    %v3291 = vsel %vm670, %v2957, 0
    %3293 = vmatprep.subr.bf16.mxu0 0
    %3294 = vmatpush1.bf16.msra.mxu0 %v3288
    %3295 = vmatprep.subr.bf16.mxu0 0
    %3296 = vmatpush1.bf16.msra.mxu0 0
    %3297 = vmatprep.subr.bf16.mxu0 0
    %3298 = vmatpush1.bf16.msra.mxu0 0
    %3299 = vmatprep.subr.bf16.mxu0 0
    %3300 = vmatpush1.bf16.msra.mxu0 0
    %3301 = vmatprep.subr.bf16.mxu0 0
    %3302 = vmatpush1.bf16.msra.mxu0 0
    %3303 = vmatprep.subr.bf16.mxu0 0
    %3304 = vmatpush1.bf16.msra.mxu0 0
    %3305 = vmatprep.subr.bf16.mxu0 0
    %3306 = vmatpush1.bf16.msra.mxu0 0
    %3307 = vmatprep.subr.bf16.mxu0 0
    %3308 = vmatpush1.bf16.msra.mxu0 0
    %3309 = vmatprep.subr.bf16.mxu0 0
    %3310 = vmatpush1.bf16.msra.mxu0 0
    %3311 = vmatprep.subr.bf16.mxu0 0
    %3312 = vmatpush1.bf16.msra.mxu0 0
    %3313 = vmatprep.subr.bf16.mxu0 0
    %3314 = vmatpush1.bf16.msra.mxu0 0
    %3315 = vmatprep.subr.bf16.mxu0 0
    %3316 = vmatpush1.bf16.msra.mxu0 0
    %3317 = vmatprep.subr.bf16.mxu0 0
    %3318 = vmatpush1.bf16.msra.mxu0 0
    %3319 = vmatprep.subr.bf16.mxu0 0
    %3320 = vmatpush1.bf16.msra.mxu0 0
    %3321 = vmatprep.subr.bf16.mxu0 0
    %3322 = vmatpush1.bf16.msra.mxu0 0
    %3323 = vmatprep.subr.bf16.mxu0 0
    %3324 = vmatpush1.bf16.msra.mxu0 0
    %3325 = vmatprep.mubr.bf16.mxu0 0
    %3326 = vmatmul.mubr.bf16.gmra.mrb[0].mxu0 %v3291
    %v3327 = vpop.f32.mrb[0].mxu0
    %v3328 = vadd.f32 0.0, %v3327
    %v3329 = vpop.f32.mrb[0].mxu0
    %v3330 = vpop.f32.mrb[0].mxu0
    %v3331 = vadd.f32 0.0, %v3330
    %v3332 = vpop.f32.mrb[0].mxu0
    %3333 = vdwg.mxu0
    %3350 = vrot.lane.b32.xlu0 %v2999, 16
    %v3351 = vpop.permute.xlu0 %3350
    %3352 = vrot.lane.b32.xlu0 %v3002, 16
    %v3353 = vpop.permute.xlu0 %3352
    %3354 = vrot.lane.b32.xlu0 %v3046, 16
    %v3355 = vpop.permute.xlu0 %3354
    %3356 = vrot.lane.b32.xlu0 %v3049, 16
    %v3357 = vpop.permute.xlu0 %3356
    %3358 = vrot.lane.b32.xlu0 %v3093, 16
    %v3359 = vpop.permute.xlu0 %3358
    %3360 = vrot.lane.b32.xlu0 %v3096, 16
    %v3361 = vpop.permute.xlu0 %3360
    %3362 = vrot.lane.b32.xlu0 %v3140, 16
    %v3363 = vpop.permute.xlu0 %3362
    %3364 = vrot.lane.b32.xlu0 %v3143, 16
    %v3365 = vpop.permute.xlu0 %3364
    %3366 = vrot.lane.b32.xlu0 %v3187, 16
    %v3367 = vpop.permute.xlu0 %3366
    %3368 = vrot.lane.b32.xlu0 %v3190, 16
    %v3369 = vpop.permute.xlu0 %3368
    %3370 = vrot.lane.b32.xlu0 %v3234, 16
    %v3371 = vpop.permute.xlu0 %3370
    %3372 = vrot.lane.b32.xlu0 %v3237, 16
    %v3373 = vpop.permute.xlu0 %3372
    %3374 = vrot.lane.b32.xlu0 %v3281, 16
    %v3375 = vpop.permute.xlu0 %3374
    %3376 = vrot.lane.b32.xlu0 %v3284, 16
    %v3377 = vpop.permute.xlu0 %3376
    %3378 = vrot.lane.b32.xlu0 %v3328, 16
    %v3379 = vpop.permute.xlu0 %3378
    %3380 = vrot.lane.b32.xlu0 %v3331, 16
    %v3381 = vpop.permute.xlu0 %3380
    %vm3398 = vcmask 195712
    %3399 = vst.msk [vmem:[#allocation3] sm:$0xff] %vm3398, %v3351
    %3400 = vst.msk [vmem:[#allocation3 + $0x8] sm:$0xff] %vm3398, %v3353
    %3401 = vst.msk [vmem:[#allocation3 + $0x10] sm:$0xff] %vm3398, %v3355
    %3402 = vst.msk [vmem:[#allocation3 + $0x18] sm:$0xff] %vm3398, %v3357
    %3403 = vst.msk [vmem:[#allocation3 + $0x20] sm:$0xff] %vm3398, %v3359
    %3404 = vst.msk [vmem:[#allocation3 + $0x28] sm:$0xff] %vm3398, %v3361
    %3405 = vst.msk [vmem:[#allocation3 + $0x30] sm:$0xff] %vm3398, %v3363
    %3406 = vst.msk [vmem:[#allocation3 + $0x38] sm:$0xff] %vm3398, %v3365
    %3407 = vst.msk [vmem:[#allocation3 + $0x40] sm:$0xff] %vm3398, %v3367
    %3408 = vst.msk [vmem:[#allocation3 + $0x48] sm:$0xff] %vm3398, %v3369
    %3409 = vst.msk [vmem:[#allocation3 + $0x50] sm:$0xff] %vm3398, %v3371
    %3410 = vst.msk [vmem:[#allocation3 + $0x58] sm:$0xff] %vm3398, %v3373
    %3411 = vst.msk [vmem:[#allocation3 + $0x60] sm:$0xff] %vm3398, %v3375
    %3412 = vst.msk [vmem:[#allocation3 + $0x68] sm:$0xff] %vm3398, %v3377
    %3413 = vst.msk [vmem:[#allocation3 + $0x70] sm:$0xff] %vm3398, %v3379
    %3414 = vst.msk [vmem:[#allocation3 + $0x78] sm:$0xff] %vm3398, %v3381
    %v3415 = vld [vmem:[#allocation2] sm:$0xff]
    %v3416 = vld [vmem:[#allocation2 + $0x8] sm:$0xff]
    %v3417 = vld [vmem:[#allocation2 + $0x10] sm:$0xff]
    %v3418 = vld [vmem:[#allocation2 + $0x18] sm:$0xff]
    %v3419 = vld [vmem:[#allocation2 + $0x20] sm:$0xff]
    %v3420 = vld [vmem:[#allocation2 + $0x28] sm:$0xff]
    %v3421 = vld [vmem:[#allocation2 + $0x30] sm:$0xff]
    %v3422 = vld [vmem:[#allocation2 + $0x38] sm:$0xff]
    %v3423 = vld [vmem:[#allocation2 + $0x40] sm:$0xff]
    %v3424 = vld [vmem:[#allocation2 + $0x48] sm:$0xff]
    %v3425 = vld [vmem:[#allocation2 + $0x50] sm:$0xff]
    %v3426 = vld [vmem:[#allocation2 + $0x58] sm:$0xff]
    %v3427 = vld [vmem:[#allocation2 + $0x60] sm:$0xff]
    %v3428 = vld [vmem:[#allocation2 + $0x68] sm:$0xff]
    %v3429 = vld [vmem:[#allocation2 + $0x70] sm:$0xff]
    %v3430 = vld [vmem:[#allocation2 + $0x78] sm:$0xff]
    %v3431 = vpack.c.bf16 %v3416, %v3415
    %v3432 = vpack.c.bf16 %v3418, %v3417
    %v3433 = vpack.c.bf16 %v3420, %v3419
    %v3434 = vpack.c.bf16 %v3422, %v3421
    %v3435 = vpack.c.bf16 %v3424, %v3423
    %v3436 = vpack.c.bf16 %v3426, %v3425
    %v3437 = vpack.c.bf16 %v3428, %v3427
    %v3438 = vpack.c.bf16 %v3430, %v3429
    %s3439 = scalar_lea.vmem %s5, 48
    %v3440 = vld [vmem:[%s3439] sm:$0xff]
    %v3441 = vld [vmem:[%s3439 + $0x8] sm:$0xff]
    %3443 = vrot.lane.b32.xlu0 %v3431, 104
    %v3444 = vpop.permute.xlu0 %3443
    %3445 = vrot.lane.b32.xlu0 %v3431, 72
    %v3446 = vpop.permute.xlu0 %3445
    %v3448 = vsel %vm272, %v3444, 0
    %v3451 = vsel %vm272, %v3446, 0
    %3453 = vmatprep.subr.bf16.mxu0 0
    %3454 = vmatpush1.bf16.xpose.msra.mxu0 %v3451
    %3455 = vmatprep.subr.bf16.mxu0 0
    %3456 = vmatpush1.bf16.xpose.msra.mxu0 0
    %3457 = vmatprep.subr.bf16.mxu0 0
    %3458 = vmatpush1.bf16.xpose.msra.mxu0 0
    %3459 = vmatprep.subr.bf16.mxu0 0
    %3460 = vmatpush1.bf16.xpose.msra.mxu0 0
    %3461 = vmatprep.subr.bf16.mxu0 0
    %3462 = vmatpush1.bf16.xpose.msra.mxu0 0
    %3463 = vmatprep.subr.bf16.mxu0 0
    %3464 = vmatpush1.bf16.xpose.msra.mxu0 0
    %3465 = vmatprep.subr.bf16.mxu0 0
    %3466 = vmatpush1.bf16.xpose.msra.mxu0 0
    %3467 = vmatprep.subr.bf16.mxu0 0
    %3468 = vmatpush1.bf16.xpose.msra.mxu0 0
    %3469 = vmatprep.subr.bf16.mxu0 0
    %3470 = vmatpush1.bf16.xpose.msra.mxu0 0
    %3471 = vmatprep.subr.bf16.mxu0 0
    %3472 = vmatpush1.bf16.xpose.msra.mxu0 0
    %3473 = vmatprep.subr.bf16.mxu0 0
    %3474 = vmatpush1.bf16.xpose.msra.mxu0 0
    %3475 = vmatprep.subr.bf16.mxu0 0
    %3476 = vmatpush1.bf16.xpose.msra.mxu0 0
    %3477 = vmatprep.subr.bf16.mxu0 0
    %3478 = vmatpush1.bf16.xpose.msra.mxu0 0
    %3479 = vmatprep.subr.bf16.mxu0 0
    %3480 = vmatpush1.bf16.xpose.msra.mxu0 0
    %3481 = vmatprep.subr.bf16.mxu0 0
    %3482 = vmatpush1.bf16.xpose.msra.mxu0 0
    %3483 = vmatprep.subr.bf16.mxu0 0
    %3484 = vmatpush1.bf16.xpose.msra.mxu0 0
    %3485 = vmatprep.mubr.bf16.mxu0 0
    %3486 = vmatmul.mubr.bf16.gmra.mrb[0].mxu0 %v3448
    %v3487 = vpop.f32.mrb[0].mxu0
    %v3488 = vadd.f32 %v3440, %v3487
    %v3489 = vpop.f32.mrb[0].mxu0
    %v3490 = vpop.f32.mrb[0].mxu0
    %v3491 = vadd.f32 %v3441, %v3490
    %v3492 = vpop.f32.mrb[0].mxu0
    %3493 = vdwg.mxu0
    %3495 = vrot.lane.b32.xlu0 %v3432, 104
    %v3496 = vpop.permute.xlu0 %3495
    %3497 = vrot.lane.b32.xlu0 %v3432, 72
    %v3498 = vpop.permute.xlu0 %3497
    %v3500 = vsel %vm272, %v3496, 0
    %v3503 = vsel %vm272, %v3498, 0
    %3505 = vmatprep.subr.bf16.mxu0 0
    %3506 = vmatpush1.bf16.xpose.msra.mxu0 %v3503
    %3507 = vmatprep.subr.bf16.mxu0 0
    %3508 = vmatpush1.bf16.xpose.msra.mxu0 0
    %3509 = vmatprep.subr.bf16.mxu0 0
    %3510 = vmatpush1.bf16.xpose.msra.mxu0 0
    %3511 = vmatprep.subr.bf16.mxu0 0
    %3512 = vmatpush1.bf16.xpose.msra.mxu0 0
    %3513 = vmatprep.subr.bf16.mxu0 0
    %3514 = vmatpush1.bf16.xpose.msra.mxu0 0
    %3515 = vmatprep.subr.bf16.mxu0 0
    %3516 = vmatpush1.bf16.xpose.msra.mxu0 0
    %3517 = vmatprep.subr.bf16.mxu0 0
    %3518 = vmatpush1.bf16.xpose.msra.mxu0 0
    %3519 = vmatprep.subr.bf16.mxu0 0
    %3520 = vmatpush1.bf16.xpose.msra.mxu0 0
    %3521 = vmatprep.subr.bf16.mxu0 0
    %3522 = vmatpush1.bf16.xpose.msra.mxu0 0
    %3523 = vmatprep.subr.bf16.mxu0 0
    %3524 = vmatpush1.bf16.xpose.msra.mxu0 0
    %3525 = vmatprep.subr.bf16.mxu0 0
    %3526 = vmatpush1.bf16.xpose.msra.mxu0 0
    %3527 = vmatprep.subr.bf16.mxu0 0
    %3528 = vmatpush1.bf16.xpose.msra.mxu0 0
    %3529 = vmatprep.subr.bf16.mxu0 0
    %3530 = vmatpush1.bf16.xpose.msra.mxu0 0
    %3531 = vmatprep.subr.bf16.mxu0 0
    %3532 = vmatpush1.bf16.xpose.msra.mxu0 0
    %3533 = vmatprep.subr.bf16.mxu0 0
    %3534 = vmatpush1.bf16.xpose.msra.mxu0 0
    %3535 = vmatprep.subr.bf16.mxu0 0
    %3536 = vmatpush1.bf16.xpose.msra.mxu0 0
    %3537 = vmatprep.mubr.bf16.mxu0 0
    %3538 = vmatmul.mubr.bf16.gmra.mrb[0].mxu0 %v3500
    %v3539 = vpop.f32.mrb[0].mxu0
    %v3540 = vadd.f32 %v3440, %v3539
    %v3541 = vpop.f32.mrb[0].mxu0
    %v3542 = vpop.f32.mrb[0].mxu0
    %v3543 = vadd.f32 %v3441, %v3542
    %v3544 = vpop.f32.mrb[0].mxu0
    %3545 = vdwg.mxu0
    %3547 = vrot.lane.b32.xlu0 %v3433, 104
    %v3548 = vpop.permute.xlu0 %3547
    %3549 = vrot.lane.b32.xlu0 %v3433, 72
    %v3550 = vpop.permute.xlu0 %3549
    %v3552 = vsel %vm272, %v3548, 0
    %v3555 = vsel %vm272, %v3550, 0
    %3557 = vmatprep.subr.bf16.mxu0 0
    %3558 = vmatpush1.bf16.xpose.msra.mxu0 %v3555
    %3559 = vmatprep.subr.bf16.mxu0 0
    %3560 = vmatpush1.bf16.xpose.msra.mxu0 0
    %3561 = vmatprep.subr.bf16.mxu0 0
    %3562 = vmatpush1.bf16.xpose.msra.mxu0 0
    %3563 = vmatprep.subr.bf16.mxu0 0
    %3564 = vmatpush1.bf16.xpose.msra.mxu0 0
    %3565 = vmatprep.subr.bf16.mxu0 0
    %3566 = vmatpush1.bf16.xpose.msra.mxu0 0
    %3567 = vmatprep.subr.bf16.mxu0 0
    %3568 = vmatpush1.bf16.xpose.msra.mxu0 0
    %3569 = vmatprep.subr.bf16.mxu0 0
    %3570 = vmatpush1.bf16.xpose.msra.mxu0 0
    %3571 = vmatprep.subr.bf16.mxu0 0
    %3572 = vmatpush1.bf16.xpose.msra.mxu0 0
    %3573 = vmatprep.subr.bf16.mxu0 0
    %3574 = vmatpush1.bf16.xpose.msra.mxu0 0
    %3575 = vmatprep.subr.bf16.mxu0 0
    %3576 = vmatpush1.bf16.xpose.msra.mxu0 0
    %3577 = vmatprep.subr.bf16.mxu0 0
    %3578 = vmatpush1.bf16.xpose.msra.mxu0 0
    %3579 = vmatprep.subr.bf16.mxu0 0
    %3580 = vmatpush1.bf16.xpose.msra.mxu0 0
    %3581 = vmatprep.subr.bf16.mxu0 0
    %3582 = vmatpush1.bf16.xpose.msra.mxu0 0
    %3583 = vmatprep.subr.bf16.mxu0 0
    %3584 = vmatpush1.bf16.xpose.msra.mxu0 0
    %3585 = vmatprep.subr.bf16.mxu0 0
    %3586 = vmatpush1.bf16.xpose.msra.mxu0 0
    %3587 = vmatprep.subr.bf16.mxu0 0
    %3588 = vmatpush1.bf16.xpose.msra.mxu0 0
    %3589 = vmatprep.mubr.bf16.mxu0 0
    %3590 = vmatmul.mubr.bf16.gmra.mrb[0].mxu0 %v3552
    %v3591 = vpop.f32.mrb[0].mxu0
    %v3592 = vadd.f32 %v3440, %v3591
    %v3593 = vpop.f32.mrb[0].mxu0
    %v3594 = vpop.f32.mrb[0].mxu0
    %v3595 = vadd.f32 %v3441, %v3594
    %v3596 = vpop.f32.mrb[0].mxu0
    %3597 = vdwg.mxu0
    %3599 = vrot.lane.b32.xlu0 %v3434, 104
    %v3600 = vpop.permute.xlu0 %3599
    %3601 = vrot.lane.b32.xlu0 %v3434, 72
    %v3602 = vpop.permute.xlu0 %3601
    %v3604 = vsel %vm272, %v3600, 0
    %v3607 = vsel %vm272, %v3602, 0
    %3609 = vmatprep.subr.bf16.mxu0 0
    %3610 = vmatpush1.bf16.xpose.msra.mxu0 %v3607
    %3611 = vmatprep.subr.bf16.mxu0 0
    %3612 = vmatpush1.bf16.xpose.msra.mxu0 0
    %3613 = vmatprep.subr.bf16.mxu0 0
    %3614 = vmatpush1.bf16.xpose.msra.mxu0 0
    %3615 = vmatprep.subr.bf16.mxu0 0
    %3616 = vmatpush1.bf16.xpose.msra.mxu0 0
    %3617 = vmatprep.subr.bf16.mxu0 0
    %3618 = vmatpush1.bf16.xpose.msra.mxu0 0
    %3619 = vmatprep.subr.bf16.mxu0 0
    %3620 = vmatpush1.bf16.xpose.msra.mxu0 0
    %3621 = vmatprep.subr.bf16.mxu0 0
    %3622 = vmatpush1.bf16.xpose.msra.mxu0 0
    %3623 = vmatprep.subr.bf16.mxu0 0
    %3624 = vmatpush1.bf16.xpose.msra.mxu0 0
    %3625 = vmatprep.subr.bf16.mxu0 0
    %3626 = vmatpush1.bf16.xpose.msra.mxu0 0
    %3627 = vmatprep.subr.bf16.mxu0 0
    %3628 = vmatpush1.bf16.xpose.msra.mxu0 0
    %3629 = vmatprep.subr.bf16.mxu0 0
    %3630 = vmatpush1.bf16.xpose.msra.mxu0 0
    %3631 = vmatprep.subr.bf16.mxu0 0
    %3632 = vmatpush1.bf16.xpose.msra.mxu0 0
    %3633 = vmatprep.subr.bf16.mxu0 0
    %3634 = vmatpush1.bf16.xpose.msra.mxu0 0
    %3635 = vmatprep.subr.bf16.mxu0 0
    %3636 = vmatpush1.bf16.xpose.msra.mxu0 0
    %3637 = vmatprep.subr.bf16.mxu0 0
    %3638 = vmatpush1.bf16.xpose.msra.mxu0 0
    %3639 = vmatprep.subr.bf16.mxu0 0
    %3640 = vmatpush1.bf16.xpose.msra.mxu0 0
    %3641 = vmatprep.mubr.bf16.mxu0 0
    %3642 = vmatmul.mubr.bf16.gmra.mrb[0].mxu0 %v3604
    %v3643 = vpop.f32.mrb[0].mxu0
    %v3644 = vadd.f32 %v3440, %v3643
    %v3645 = vpop.f32.mrb[0].mxu0
    %v3646 = vpop.f32.mrb[0].mxu0
    %v3647 = vadd.f32 %v3441, %v3646
    %v3648 = vpop.f32.mrb[0].mxu0
    %3649 = vdwg.mxu0
    %3651 = vrot.lane.b32.xlu0 %v3435, 104
    %v3652 = vpop.permute.xlu0 %3651
    %3653 = vrot.lane.b32.xlu0 %v3435, 72
    %v3654 = vpop.permute.xlu0 %3653
    %v3656 = vsel %vm272, %v3652, 0
    %v3659 = vsel %vm272, %v3654, 0
    %3661 = vmatprep.subr.bf16.mxu0 0
    %3662 = vmatpush1.bf16.xpose.msra.mxu0 %v3659
    %3663 = vmatprep.subr.bf16.mxu0 0
    %3664 = vmatpush1.bf16.xpose.msra.mxu0 0
    %3665 = vmatprep.subr.bf16.mxu0 0
    %3666 = vmatpush1.bf16.xpose.msra.mxu0 0
    %3667 = vmatprep.subr.bf16.mxu0 0
    %3668 = vmatpush1.bf16.xpose.msra.mxu0 0
    %3669 = vmatprep.subr.bf16.mxu0 0
    %3670 = vmatpush1.bf16.xpose.msra.mxu0 0
    %3671 = vmatprep.subr.bf16.mxu0 0
    %3672 = vmatpush1.bf16.xpose.msra.mxu0 0
    %3673 = vmatprep.subr.bf16.mxu0 0
    %3674 = vmatpush1.bf16.xpose.msra.mxu0 0
    %3675 = vmatprep.subr.bf16.mxu0 0
    %3676 = vmatpush1.bf16.xpose.msra.mxu0 0
    %3677 = vmatprep.subr.bf16.mxu0 0
    %3678 = vmatpush1.bf16.xpose.msra.mxu0 0
    %3679 = vmatprep.subr.bf16.mxu0 0
    %3680 = vmatpush1.bf16.xpose.msra.mxu0 0
    %3681 = vmatprep.subr.bf16.mxu0 0
    %3682 = vmatpush1.bf16.xpose.msra.mxu0 0
    %3683 = vmatprep.subr.bf16.mxu0 0
    %3684 = vmatpush1.bf16.xpose.msra.mxu0 0
    %3685 = vmatprep.subr.bf16.mxu0 0
    %3686 = vmatpush1.bf16.xpose.msra.mxu0 0
    %3687 = vmatprep.subr.bf16.mxu0 0
    %3688 = vmatpush1.bf16.xpose.msra.mxu0 0
    %3689 = vmatprep.subr.bf16.mxu0 0
    %3690 = vmatpush1.bf16.xpose.msra.mxu0 0
    %3691 = vmatprep.subr.bf16.mxu0 0
    %3692 = vmatpush1.bf16.xpose.msra.mxu0 0
    %3693 = vmatprep.mubr.bf16.mxu0 0
    %3694 = vmatmul.mubr.bf16.gmra.mrb[0].mxu0 %v3656
    %v3695 = vpop.f32.mrb[0].mxu0
    %v3696 = vadd.f32 %v3440, %v3695
    %v3697 = vpop.f32.mrb[0].mxu0
    %v3698 = vpop.f32.mrb[0].mxu0
    %v3699 = vadd.f32 %v3441, %v3698
    %v3700 = vpop.f32.mrb[0].mxu0
    %3701 = vdwg.mxu0
    %3703 = vrot.lane.b32.xlu0 %v3436, 104
    %v3704 = vpop.permute.xlu0 %3703
    %3705 = vrot.lane.b32.xlu0 %v3436, 72
    %v3706 = vpop.permute.xlu0 %3705
    %v3708 = vsel %vm272, %v3704, 0
    %v3711 = vsel %vm272, %v3706, 0
    %3713 = vmatprep.subr.bf16.mxu0 0
    %3714 = vmatpush1.bf16.xpose.msra.mxu0 %v3711
    %3715 = vmatprep.subr.bf16.mxu0 0
    %3716 = vmatpush1.bf16.xpose.msra.mxu0 0
    %3717 = vmatprep.subr.bf16.mxu0 0
    %3718 = vmatpush1.bf16.xpose.msra.mxu0 0
    %3719 = vmatprep.subr.bf16.mxu0 0
    %3720 = vmatpush1.bf16.xpose.msra.mxu0 0
    %3721 = vmatprep.subr.bf16.mxu0 0
    %3722 = vmatpush1.bf16.xpose.msra.mxu0 0
    %3723 = vmatprep.subr.bf16.mxu0 0
    %3724 = vmatpush1.bf16.xpose.msra.mxu0 0
    %3725 = vmatprep.subr.bf16.mxu0 0
    %3726 = vmatpush1.bf16.xpose.msra.mxu0 0
    %3727 = vmatprep.subr.bf16.mxu0 0
    %3728 = vmatpush1.bf16.xpose.msra.mxu0 0
    %3729 = vmatprep.subr.bf16.mxu0 0
    %3730 = vmatpush1.bf16.xpose.msra.mxu0 0
    %3731 = vmatprep.subr.bf16.mxu0 0
    %3732 = vmatpush1.bf16.xpose.msra.mxu0 0
    %3733 = vmatprep.subr.bf16.mxu0 0
    %3734 = vmatpush1.bf16.xpose.msra.mxu0 0
    %3735 = vmatprep.subr.bf16.mxu0 0
    %3736 = vmatpush1.bf16.xpose.msra.mxu0 0
    %3737 = vmatprep.subr.bf16.mxu0 0
    %3738 = vmatpush1.bf16.xpose.msra.mxu0 0
    %3739 = vmatprep.subr.bf16.mxu0 0
    %3740 = vmatpush1.bf16.xpose.msra.mxu0 0
    %3741 = vmatprep.subr.bf16.mxu0 0
    %3742 = vmatpush1.bf16.xpose.msra.mxu0 0
    %3743 = vmatprep.subr.bf16.mxu0 0
    %3744 = vmatpush1.bf16.xpose.msra.mxu0 0
    %3745 = vmatprep.mubr.bf16.mxu0 0
    %3746 = vmatmul.mubr.bf16.gmra.mrb[0].mxu0 %v3708
    %v3747 = vpop.f32.mrb[0].mxu0
    %v3748 = vadd.f32 %v3440, %v3747
    %v3749 = vpop.f32.mrb[0].mxu0
    %v3750 = vpop.f32.mrb[0].mxu0
    %v3751 = vadd.f32 %v3441, %v3750
    %v3752 = vpop.f32.mrb[0].mxu0
    %3753 = vdwg.mxu0
    %3755 = vrot.lane.b32.xlu0 %v3437, 104
    %v3756 = vpop.permute.xlu0 %3755
    %3757 = vrot.lane.b32.xlu0 %v3437, 72
    %v3758 = vpop.permute.xlu0 %3757
    %v3760 = vsel %vm272, %v3756, 0
    %v3763 = vsel %vm272, %v3758, 0
    %3765 = vmatprep.subr.bf16.mxu0 0
    %3766 = vmatpush1.bf16.xpose.msra.mxu0 %v3763
    %3767 = vmatprep.subr.bf16.mxu0 0
    %3768 = vmatpush1.bf16.xpose.msra.mxu0 0
    %3769 = vmatprep.subr.bf16.mxu0 0
    %3770 = vmatpush1.bf16.xpose.msra.mxu0 0
    %3771 = vmatprep.subr.bf16.mxu0 0
    %3772 = vmatpush1.bf16.xpose.msra.mxu0 0
    %3773 = vmatprep.subr.bf16.mxu0 0
    %3774 = vmatpush1.bf16.xpose.msra.mxu0 0
    %3775 = vmatprep.subr.bf16.mxu0 0
    %3776 = vmatpush1.bf16.xpose.msra.mxu0 0
    %3777 = vmatprep.subr.bf16.mxu0 0
    %3778 = vmatpush1.bf16.xpose.msra.mxu0 0
    %3779 = vmatprep.subr.bf16.mxu0 0
    %3780 = vmatpush1.bf16.xpose.msra.mxu0 0
    %3781 = vmatprep.subr.bf16.mxu0 0
    %3782 = vmatpush1.bf16.xpose.msra.mxu0 0
    %3783 = vmatprep.subr.bf16.mxu0 0
    %3784 = vmatpush1.bf16.xpose.msra.mxu0 0
    %3785 = vmatprep.subr.bf16.mxu0 0
    %3786 = vmatpush1.bf16.xpose.msra.mxu0 0
    %3787 = vmatprep.subr.bf16.mxu0 0
    %3788 = vmatpush1.bf16.xpose.msra.mxu0 0
    %3789 = vmatprep.subr.bf16.mxu0 0
    %3790 = vmatpush1.bf16.xpose.msra.mxu0 0
    %3791 = vmatprep.subr.bf16.mxu0 0
    %3792 = vmatpush1.bf16.xpose.msra.mxu0 0
    %3793 = vmatprep.subr.bf16.mxu0 0
    %3794 = vmatpush1.bf16.xpose.msra.mxu0 0
    %3795 = vmatprep.subr.bf16.mxu0 0
    %3796 = vmatpush1.bf16.xpose.msra.mxu0 0
    %3797 = vmatprep.mubr.bf16.mxu0 0
    %3798 = vmatmul.mubr.bf16.gmra.mrb[0].mxu0 %v3760
    %v3799 = vpop.f32.mrb[0].mxu0
    %v3800 = vadd.f32 %v3440, %v3799
    %v3801 = vpop.f32.mrb[0].mxu0
    %v3802 = vpop.f32.mrb[0].mxu0
    %v3803 = vadd.f32 %v3441, %v3802
    %v3804 = vpop.f32.mrb[0].mxu0
    %3805 = vdwg.mxu0
    %3807 = vrot.lane.b32.xlu0 %v3438, 104
    %v3808 = vpop.permute.xlu0 %3807
    %3809 = vrot.lane.b32.xlu0 %v3438, 72
    %v3810 = vpop.permute.xlu0 %3809
    %v3812 = vsel %vm272, %v3808, 0
    %v3815 = vsel %vm272, %v3810, 0
    %3817 = vmatprep.subr.bf16.mxu0 0
    %3818 = vmatpush1.bf16.xpose.msra.mxu0 %v3815
    %3819 = vmatprep.subr.bf16.mxu0 0
    %3820 = vmatpush1.bf16.xpose.msra.mxu0 0
    %3821 = vmatprep.subr.bf16.mxu0 0
    %3822 = vmatpush1.bf16.xpose.msra.mxu0 0
    %3823 = vmatprep.subr.bf16.mxu0 0
    %3824 = vmatpush1.bf16.xpose.msra.mxu0 0
    %3825 = vmatprep.subr.bf16.mxu0 0
    %3826 = vmatpush1.bf16.xpose.msra.mxu0 0
    %3827 = vmatprep.subr.bf16.mxu0 0
    %3828 = vmatpush1.bf16.xpose.msra.mxu0 0
    %3829 = vmatprep.subr.bf16.mxu0 0
    %3830 = vmatpush1.bf16.xpose.msra.mxu0 0
    %3831 = vmatprep.subr.bf16.mxu0 0
    %3832 = vmatpush1.bf16.xpose.msra.mxu0 0
    %3833 = vmatprep.subr.bf16.mxu0 0
    %3834 = vmatpush1.bf16.xpose.msra.mxu0 0
    %3835 = vmatprep.subr.bf16.mxu0 0
    %3836 = vmatpush1.bf16.xpose.msra.mxu0 0
    %3837 = vmatprep.subr.bf16.mxu0 0
    %3838 = vmatpush1.bf16.xpose.msra.mxu0 0
    %3839 = vmatprep.subr.bf16.mxu0 0
    %3840 = vmatpush1.bf16.xpose.msra.mxu0 0
    %3841 = vmatprep.subr.bf16.mxu0 0
    %3842 = vmatpush1.bf16.xpose.msra.mxu0 0
    %3843 = vmatprep.subr.bf16.mxu0 0
    %3844 = vmatpush1.bf16.xpose.msra.mxu0 0
    %3845 = vmatprep.subr.bf16.mxu0 0
    %3846 = vmatpush1.bf16.xpose.msra.mxu0 0
    %3847 = vmatprep.subr.bf16.mxu0 0
    %3848 = vmatpush1.bf16.xpose.msra.mxu0 0
    %3849 = vmatprep.mubr.bf16.mxu0 0
    %3850 = vmatmul.mubr.bf16.gmra.mrb[0].mxu0 %v3812
    %v3851 = vpop.f32.mrb[0].mxu0
    %v3852 = vadd.f32 %v3440, %v3851
    %v3853 = vpop.f32.mrb[0].mxu0
    %v3854 = vpop.f32.mrb[0].mxu0
    %v3855 = vadd.f32 %v3441, %v3854
    %v3856 = vpop.f32.mrb[0].mxu0
    %3857 = vdwg.mxu0
    %v3858 = vsel %vm670, %v3488, -inf
    %3859 = vmax.xlane.f32.xlu0 %v3858
    %v3860 = vpop.xlane.xlu0 %3859
    %v3861 = vsel %vm670, %v3491, -inf
    %3862 = vmax.xlane.f32.xlu0 %v3861
    %v3863 = vpop.xlane.xlu0 %3862
    %v3864 = vsel %vm670, %v3540, -inf
    %3865 = vmax.xlane.f32.xlu0 %v3864
    %v3866 = vpop.xlane.xlu0 %3865
    %v3867 = vsel %vm670, %v3543, -inf
    %3868 = vmax.xlane.f32.xlu0 %v3867
    %v3869 = vpop.xlane.xlu0 %3868
    %v3870 = vsel %vm670, %v3592, -inf
    %3871 = vmax.xlane.f32.xlu0 %v3870
    %v3872 = vpop.xlane.xlu0 %3871
    %v3873 = vsel %vm670, %v3595, -inf
    %3874 = vmax.xlane.f32.xlu0 %v3873
    %v3875 = vpop.xlane.xlu0 %3874
    %v3876 = vsel %vm670, %v3644, -inf
    %3877 = vmax.xlane.f32.xlu0 %v3876
    %v3878 = vpop.xlane.xlu0 %3877
    %v3879 = vsel %vm670, %v3647, -inf
    %3880 = vmax.xlane.f32.xlu0 %v3879
    %v3881 = vpop.xlane.xlu0 %3880
    %v3882 = vsel %vm670, %v3696, -inf
    %3883 = vmax.xlane.f32.xlu0 %v3882
    %v3884 = vpop.xlane.xlu0 %3883
    %v3885 = vsel %vm670, %v3699, -inf
    %3886 = vmax.xlane.f32.xlu0 %v3885
    %v3887 = vpop.xlane.xlu0 %3886
    %v3888 = vsel %vm670, %v3748, -inf
    %3889 = vmax.xlane.f32.xlu0 %v3888
    %v3890 = vpop.xlane.xlu0 %3889
    %v3891 = vsel %vm670, %v3751, -inf
    %3892 = vmax.xlane.f32.xlu0 %v3891
    %v3893 = vpop.xlane.xlu0 %3892
    %v3894 = vsel %vm670, %v3800, -inf
    %3895 = vmax.xlane.f32.xlu0 %v3894
    %v3896 = vpop.xlane.xlu0 %3895
    %v3897 = vsel %vm670, %v3803, -inf
    %3898 = vmax.xlane.f32.xlu0 %v3897
    %v3899 = vpop.xlane.xlu0 %3898
    %v3900 = vsel %vm670, %v3852, -inf
    %3901 = vmax.xlane.f32.xlu0 %v3900
    %v3902 = vpop.xlane.xlu0 %3901
    %v3903 = vsel %vm670, %v3855, -inf
    %3904 = vmax.xlane.f32.xlu0 %v3903
    %v3905 = vpop.xlane.xlu0 %3904
    %v3906 = vsub.f32 %v3488, %v3860
    %v3907 = vsub.f32 %v3491, %v3863
    %v3908 = vsub.f32 %v3540, %v3866
    %v3909 = vsub.f32 %v3543, %v3869
    %v3910 = vsub.f32 %v3592, %v3872
    %v3911 = vsub.f32 %v3595, %v3875
    %v3912 = vsub.f32 %v3644, %v3878
    %v3913 = vsub.f32 %v3647, %v3881
    %v3914 = vsub.f32 %v3696, %v3884
    %v3915 = vsub.f32 %v3699, %v3887
    %v3916 = vsub.f32 %v3748, %v3890
    %v3917 = vsub.f32 %v3751, %v3893
    %v3918 = vsub.f32 %v3800, %v3896
    %v3919 = vsub.f32 %v3803, %v3899
    %v3920 = vsub.f32 %v3852, %v3902
    %v3921 = vsub.f32 %v3855, %v3905
    %v3922 = vmul.f32 %v3906, 1.442695
    %v3923 = vpow.pop %v3922
    %v3924 = vmul.f32 %v3907, 1.442695
    %v3925 = vpow.pop %v3924
    %v3926 = vmul.f32 %v3908, 1.442695
    %v3927 = vpow.pop %v3926
    %v3928 = vmul.f32 %v3909, 1.442695
    %v3929 = vpow.pop %v3928
    %v3930 = vmul.f32 %v3910, 1.442695
    %v3931 = vpow.pop %v3930
    %v3932 = vmul.f32 %v3911, 1.442695
    %v3933 = vpow.pop %v3932
    %v3934 = vmul.f32 %v3912, 1.442695
    %v3935 = vpow.pop %v3934
    %v3936 = vmul.f32 %v3913, 1.442695
    %v3937 = vpow.pop %v3936
    %v3938 = vmul.f32 %v3914, 1.442695
    %v3939 = vpow.pop %v3938
    %v3940 = vmul.f32 %v3915, 1.442695
    %v3941 = vpow.pop %v3940
    %v3942 = vmul.f32 %v3916, 1.442695
    %v3943 = vpow.pop %v3942
    %v3944 = vmul.f32 %v3917, 1.442695
    %v3945 = vpow.pop %v3944
    %v3946 = vmul.f32 %v3918, 1.442695
    %v3947 = vpow.pop %v3946
    %v3948 = vmul.f32 %v3919, 1.442695
    %v3949 = vpow.pop %v3948
    %v3950 = vmul.f32 %v3920, 1.442695
    %v3951 = vpow.pop %v3950
    %v3952 = vmul.f32 %v3921, 1.442695
    %v3953 = vpow.pop %v3952
    %v3954 = vsel %vm670, %v3923, 0.0
    %3955 = vadd.xlane.f32.xlu0 %v3954
    %v3956 = vpop.xlane.xlu0 %3955
    %v3957 = vsel %vm670, %v3925, 0.0
    %3958 = vadd.xlane.f32.xlu0 %v3957
    %v3959 = vpop.xlane.xlu0 %3958
    %v3960 = vsel %vm670, %v3927, 0.0
    %3961 = vadd.xlane.f32.xlu0 %v3960
    %v3962 = vpop.xlane.xlu0 %3961
    %v3963 = vsel %vm670, %v3929, 0.0
    %3964 = vadd.xlane.f32.xlu0 %v3963
    %v3965 = vpop.xlane.xlu0 %3964
    %v3966 = vsel %vm670, %v3931, 0.0
    %3967 = vadd.xlane.f32.xlu0 %v3966
    %v3968 = vpop.xlane.xlu0 %3967
    %v3969 = vsel %vm670, %v3933, 0.0
    %3970 = vadd.xlane.f32.xlu0 %v3969
    %v3971 = vpop.xlane.xlu0 %3970
    %v3972 = vsel %vm670, %v3935, 0.0
    %3973 = vadd.xlane.f32.xlu0 %v3972
    %v3974 = vpop.xlane.xlu0 %3973
    %v3975 = vsel %vm670, %v3937, 0.0
    %3976 = vadd.xlane.f32.xlu0 %v3975
    %v3977 = vpop.xlane.xlu0 %3976
    %v3978 = vsel %vm670, %v3939, 0.0
    %3979 = vadd.xlane.f32.xlu0 %v3978
    %v3980 = vpop.xlane.xlu0 %3979
    %v3981 = vsel %vm670, %v3941, 0.0
    %3982 = vadd.xlane.f32.xlu0 %v3981
    %v3983 = vpop.xlane.xlu0 %3982
    %v3984 = vsel %vm670, %v3943, 0.0
    %3985 = vadd.xlane.f32.xlu0 %v3984
    %v3986 = vpop.xlane.xlu0 %3985
    %v3987 = vsel %vm670, %v3945, 0.0
    %3988 = vadd.xlane.f32.xlu0 %v3987
    %v3989 = vpop.xlane.xlu0 %3988
    %v3990 = vsel %vm670, %v3947, 0.0
    %3991 = vadd.xlane.f32.xlu0 %v3990
    %v3992 = vpop.xlane.xlu0 %3991
    %v3993 = vsel %vm670, %v3949, 0.0
    %3994 = vadd.xlane.f32.xlu0 %v3993
    %v3995 = vpop.xlane.xlu0 %3994
    %v3996 = vsel %vm670, %v3951, 0.0
    %3997 = vadd.xlane.f32.xlu0 %v3996
    %v3998 = vpop.xlane.xlu0 %3997
    %v3999 = vsel %vm670, %v3953, 0.0
    %4000 = vadd.xlane.f32.xlu0 %v3999
    %v4001 = vpop.xlane.xlu0 %4000
    %v4002 = vrcp.pop %v3956
    %v4003 = vrcp.pop %v3959
    %v4004 = vrcp.pop %v3962
    %v4005 = vrcp.pop %v3965
    %v4006 = vrcp.pop %v3968
    %v4007 = vrcp.pop %v3971
    %v4008 = vrcp.pop %v3974
    %v4009 = vrcp.pop %v3977
    %v4010 = vrcp.pop %v3980
    %v4011 = vrcp.pop %v3983
    %v4012 = vrcp.pop %v3986
    %v4013 = vrcp.pop %v3989
    %v4014 = vrcp.pop %v3992
    %v4015 = vrcp.pop %v3995
    %v4016 = vrcp.pop %v3998
    %v4017 = vrcp.pop %v4001
    %v4018 = vmul.f32 %v3923, %v4002
    %v4019 = vmul.f32 %v3925, %v4003
    %v4020 = vmul.f32 %v3927, %v4004
    %v4021 = vmul.f32 %v3929, %v4005
    %v4022 = vmul.f32 %v3931, %v4006
    %v4023 = vmul.f32 %v3933, %v4007
    %v4024 = vmul.f32 %v3935, %v4008
    %v4025 = vmul.f32 %v3937, %v4009
    %v4026 = vmul.f32 %v3939, %v4010
    %v4027 = vmul.f32 %v3941, %v4011
    %v4028 = vmul.f32 %v3943, %v4012
    %v4029 = vmul.f32 %v3945, %v4013
    %v4030 = vmul.f32 %v3947, %v4014
    %v4031 = vmul.f32 %v3949, %v4015
    %v4032 = vmul.f32 %v3951, %v4016
    %v4033 = vmul.f32 %v3953, %v4017
    %v4034 = vpack.c.bf16 %v4019, %v4018
    %v4035 = vpack.c.bf16 %v4021, %v4020
    %v4036 = vpack.c.bf16 %v4023, %v4022
    %v4037 = vpack.c.bf16 %v4025, %v4024
    %v4038 = vpack.c.bf16 %v4027, %v4026
    %v4039 = vpack.c.bf16 %v4029, %v4028
    %v4040 = vpack.c.bf16 %v4031, %v4030
    %v4041 = vpack.c.bf16 %v4033, %v4032
    %4042 = vrot.lane.b32.xlu0 %v3431, 40
    %v4043 = vpop.permute.xlu0 %4042
    %v4046 = vsel %vm670, %v4034, 0
    %4048 = vmatprep.subr.bf16.mxu0 0
    %4049 = vmatpush1.bf16.msra.mxu0 %v4043
    %4050 = vmatprep.subr.bf16.mxu0 0
    %4051 = vmatpush1.bf16.msra.mxu0 0
    %4052 = vmatprep.subr.bf16.mxu0 0
    %4053 = vmatpush1.bf16.msra.mxu0 0
    %4054 = vmatprep.subr.bf16.mxu0 0
    %4055 = vmatpush1.bf16.msra.mxu0 0
    %4056 = vmatprep.subr.bf16.mxu0 0
    %4057 = vmatpush1.bf16.msra.mxu0 0
    %4058 = vmatprep.subr.bf16.mxu0 0
    %4059 = vmatpush1.bf16.msra.mxu0 0
    %4060 = vmatprep.subr.bf16.mxu0 0
    %4061 = vmatpush1.bf16.msra.mxu0 0
    %4062 = vmatprep.subr.bf16.mxu0 0
    %4063 = vmatpush1.bf16.msra.mxu0 0
    %4064 = vmatprep.subr.bf16.mxu0 0
    %4065 = vmatpush1.bf16.msra.mxu0 0
    %4066 = vmatprep.subr.bf16.mxu0 0
    %4067 = vmatpush1.bf16.msra.mxu0 0
    %4068 = vmatprep.subr.bf16.mxu0 0
    %4069 = vmatpush1.bf16.msra.mxu0 0
    %4070 = vmatprep.subr.bf16.mxu0 0
    %4071 = vmatpush1.bf16.msra.mxu0 0
    %4072 = vmatprep.subr.bf16.mxu0 0
    %4073 = vmatpush1.bf16.msra.mxu0 0
    %4074 = vmatprep.subr.bf16.mxu0 0
    %4075 = vmatpush1.bf16.msra.mxu0 0
    %4076 = vmatprep.subr.bf16.mxu0 0
    %4077 = vmatpush1.bf16.msra.mxu0 0
    %4078 = vmatprep.subr.bf16.mxu0 0
    %4079 = vmatpush1.bf16.msra.mxu0 0
    %4080 = vmatprep.mubr.bf16.mxu0 0
    %4081 = vmatmul.mubr.bf16.gmra.mrb[0].mxu0 %v4046
    %v4082 = vpop.f32.mrb[0].mxu0
    %v4083 = vadd.f32 0.0, %v4082
    %v4084 = vpop.f32.mrb[0].mxu0
    %v4085 = vpop.f32.mrb[0].mxu0
    %v4086 = vadd.f32 0.0, %v4085
    %v4087 = vpop.f32.mrb[0].mxu0
    %4088 = vdwg.mxu0
    %4089 = vrot.lane.b32.xlu0 %v3432, 40
    %v4090 = vpop.permute.xlu0 %4089
    %v4093 = vsel %vm670, %v4035, 0
    %4095 = vmatprep.subr.bf16.mxu0 0
    %4096 = vmatpush1.bf16.msra.mxu0 %v4090
    %4097 = vmatprep.subr.bf16.mxu0 0
    %4098 = vmatpush1.bf16.msra.mxu0 0
    %4099 = vmatprep.subr.bf16.mxu0 0
    %4100 = vmatpush1.bf16.msra.mxu0 0
    %4101 = vmatprep.subr.bf16.mxu0 0
    %4102 = vmatpush1.bf16.msra.mxu0 0
    %4103 = vmatprep.subr.bf16.mxu0 0
    %4104 = vmatpush1.bf16.msra.mxu0 0
    %4105 = vmatprep.subr.bf16.mxu0 0
    %4106 = vmatpush1.bf16.msra.mxu0 0
    %4107 = vmatprep.subr.bf16.mxu0 0
    %4108 = vmatpush1.bf16.msra.mxu0 0
    %4109 = vmatprep.subr.bf16.mxu0 0
    %4110 = vmatpush1.bf16.msra.mxu0 0
    %4111 = vmatprep.subr.bf16.mxu0 0
    %4112 = vmatpush1.bf16.msra.mxu0 0
    %4113 = vmatprep.subr.bf16.mxu0 0
    %4114 = vmatpush1.bf16.msra.mxu0 0
    %4115 = vmatprep.subr.bf16.mxu0 0
    %4116 = vmatpush1.bf16.msra.mxu0 0
    %4117 = vmatprep.subr.bf16.mxu0 0
    %4118 = vmatpush1.bf16.msra.mxu0 0
    %4119 = vmatprep.subr.bf16.mxu0 0
    %4120 = vmatpush1.bf16.msra.mxu0 0
    %4121 = vmatprep.subr.bf16.mxu0 0
    %4122 = vmatpush1.bf16.msra.mxu0 0
    %4123 = vmatprep.subr.bf16.mxu0 0
    %4124 = vmatpush1.bf16.msra.mxu0 0
    %4125 = vmatprep.subr.bf16.mxu0 0
    %4126 = vmatpush1.bf16.msra.mxu0 0
    %4127 = vmatprep.mubr.bf16.mxu0 0
    %4128 = vmatmul.mubr.bf16.gmra.mrb[0].mxu0 %v4093
    %v4129 = vpop.f32.mrb[0].mxu0
    %v4130 = vadd.f32 0.0, %v4129
    %v4131 = vpop.f32.mrb[0].mxu0
    %v4132 = vpop.f32.mrb[0].mxu0
    %v4133 = vadd.f32 0.0, %v4132
    %v4134 = vpop.f32.mrb[0].mxu0
    %4135 = vdwg.mxu0
    %4136 = vrot.lane.b32.xlu0 %v3433, 40
    %v4137 = vpop.permute.xlu0 %4136
    %v4140 = vsel %vm670, %v4036, 0
    %4142 = vmatprep.subr.bf16.mxu0 0
    %4143 = vmatpush1.bf16.msra.mxu0 %v4137
    %4144 = vmatprep.subr.bf16.mxu0 0
    %4145 = vmatpush1.bf16.msra.mxu0 0
    %4146 = vmatprep.subr.bf16.mxu0 0
    %4147 = vmatpush1.bf16.msra.mxu0 0
    %4148 = vmatprep.subr.bf16.mxu0 0
    %4149 = vmatpush1.bf16.msra.mxu0 0
    %4150 = vmatprep.subr.bf16.mxu0 0
    %4151 = vmatpush1.bf16.msra.mxu0 0
    %4152 = vmatprep.subr.bf16.mxu0 0
    %4153 = vmatpush1.bf16.msra.mxu0 0
    %4154 = vmatprep.subr.bf16.mxu0 0
    %4155 = vmatpush1.bf16.msra.mxu0 0
    %4156 = vmatprep.subr.bf16.mxu0 0
    %4157 = vmatpush1.bf16.msra.mxu0 0
    %4158 = vmatprep.subr.bf16.mxu0 0
    %4159 = vmatpush1.bf16.msra.mxu0 0
    %4160 = vmatprep.subr.bf16.mxu0 0
    %4161 = vmatpush1.bf16.msra.mxu0 0
    %4162 = vmatprep.subr.bf16.mxu0 0
    %4163 = vmatpush1.bf16.msra.mxu0 0
    %4164 = vmatprep.subr.bf16.mxu0 0
    %4165 = vmatpush1.bf16.msra.mxu0 0
    %4166 = vmatprep.subr.bf16.mxu0 0
    %4167 = vmatpush1.bf16.msra.mxu0 0
    %4168 = vmatprep.subr.bf16.mxu0 0
    %4169 = vmatpush1.bf16.msra.mxu0 0
    %4170 = vmatprep.subr.bf16.mxu0 0
    %4171 = vmatpush1.bf16.msra.mxu0 0
    %4172 = vmatprep.subr.bf16.mxu0 0
    %4173 = vmatpush1.bf16.msra.mxu0 0
    %4174 = vmatprep.mubr.bf16.mxu0 0
    %4175 = vmatmul.mubr.bf16.gmra.mrb[0].mxu0 %v4140
    %v4176 = vpop.f32.mrb[0].mxu0
    %v4177 = vadd.f32 0.0, %v4176
    %v4178 = vpop.f32.mrb[0].mxu0
    %v4179 = vpop.f32.mrb[0].mxu0
    %v4180 = vadd.f32 0.0, %v4179
    %v4181 = vpop.f32.mrb[0].mxu0
    %4182 = vdwg.mxu0
    %4183 = vrot.lane.b32.xlu0 %v3434, 40
    %v4184 = vpop.permute.xlu0 %4183
    %v4187 = vsel %vm670, %v4037, 0
    %4189 = vmatprep.subr.bf16.mxu0 0
    %4190 = vmatpush1.bf16.msra.mxu0 %v4184
    %4191 = vmatprep.subr.bf16.mxu0 0
    %4192 = vmatpush1.bf16.msra.mxu0 0
    %4193 = vmatprep.subr.bf16.mxu0 0
    %4194 = vmatpush1.bf16.msra.mxu0 0
    %4195 = vmatprep.subr.bf16.mxu0 0
    %4196 = vmatpush1.bf16.msra.mxu0 0
    %4197 = vmatprep.subr.bf16.mxu0 0
    %4198 = vmatpush1.bf16.msra.mxu0 0
    %4199 = vmatprep.subr.bf16.mxu0 0
    %4200 = vmatpush1.bf16.msra.mxu0 0
    %4201 = vmatprep.subr.bf16.mxu0 0
    %4202 = vmatpush1.bf16.msra.mxu0 0
    %4203 = vmatprep.subr.bf16.mxu0 0
    %4204 = vmatpush1.bf16.msra.mxu0 0
    %4205 = vmatprep.subr.bf16.mxu0 0
    %4206 = vmatpush1.bf16.msra.mxu0 0
    %4207 = vmatprep.subr.bf16.mxu0 0
    %4208 = vmatpush1.bf16.msra.mxu0 0
    %4209 = vmatprep.subr.bf16.mxu0 0
    %4210 = vmatpush1.bf16.msra.mxu0 0
    %4211 = vmatprep.subr.bf16.mxu0 0
    %4212 = vmatpush1.bf16.msra.mxu0 0
    %4213 = vmatprep.subr.bf16.mxu0 0
    %4214 = vmatpush1.bf16.msra.mxu0 0
    %4215 = vmatprep.subr.bf16.mxu0 0
    %4216 = vmatpush1.bf16.msra.mxu0 0
    %4217 = vmatprep.subr.bf16.mxu0 0
    %4218 = vmatpush1.bf16.msra.mxu0 0
    %4219 = vmatprep.subr.bf16.mxu0 0
    %4220 = vmatpush1.bf16.msra.mxu0 0
    %4221 = vmatprep.mubr.bf16.mxu0 0
    %4222 = vmatmul.mubr.bf16.gmra.mrb[0].mxu0 %v4187
    %v4223 = vpop.f32.mrb[0].mxu0
    %v4224 = vadd.f32 0.0, %v4223
    %v4225 = vpop.f32.mrb[0].mxu0
    %v4226 = vpop.f32.mrb[0].mxu0
    %v4227 = vadd.f32 0.0, %v4226
    %v4228 = vpop.f32.mrb[0].mxu0
    %4229 = vdwg.mxu0
    %4230 = vrot.lane.b32.xlu0 %v3435, 40
    %v4231 = vpop.permute.xlu0 %4230
    %v4234 = vsel %vm670, %v4038, 0
    %4236 = vmatprep.subr.bf16.mxu0 0
    %4237 = vmatpush1.bf16.msra.mxu0 %v4231
    %4238 = vmatprep.subr.bf16.mxu0 0
    %4239 = vmatpush1.bf16.msra.mxu0 0
    %4240 = vmatprep.subr.bf16.mxu0 0
    %4241 = vmatpush1.bf16.msra.mxu0 0
    %4242 = vmatprep.subr.bf16.mxu0 0
    %4243 = vmatpush1.bf16.msra.mxu0 0
    %4244 = vmatprep.subr.bf16.mxu0 0
    %4245 = vmatpush1.bf16.msra.mxu0 0
    %4246 = vmatprep.subr.bf16.mxu0 0
    %4247 = vmatpush1.bf16.msra.mxu0 0
    %4248 = vmatprep.subr.bf16.mxu0 0
    %4249 = vmatpush1.bf16.msra.mxu0 0
    %4250 = vmatprep.subr.bf16.mxu0 0
    %4251 = vmatpush1.bf16.msra.mxu0 0
    %4252 = vmatprep.subr.bf16.mxu0 0
    %4253 = vmatpush1.bf16.msra.mxu0 0
    %4254 = vmatprep.subr.bf16.mxu0 0
    %4255 = vmatpush1.bf16.msra.mxu0 0
    %4256 = vmatprep.subr.bf16.mxu0 0
    %4257 = vmatpush1.bf16.msra.mxu0 0
    %4258 = vmatprep.subr.bf16.mxu0 0
    %4259 = vmatpush1.bf16.msra.mxu0 0
    %4260 = vmatprep.subr.bf16.mxu0 0
    %4261 = vmatpush1.bf16.msra.mxu0 0
    %4262 = vmatprep.subr.bf16.mxu0 0
    %4263 = vmatpush1.bf16.msra.mxu0 0
    %4264 = vmatprep.subr.bf16.mxu0 0
    %4265 = vmatpush1.bf16.msra.mxu0 0
    %4266 = vmatprep.subr.bf16.mxu0 0
    %4267 = vmatpush1.bf16.msra.mxu0 0
    %4268 = vmatprep.mubr.bf16.mxu0 0
    %4269 = vmatmul.mubr.bf16.gmra.mrb[0].mxu0 %v4234
    %v4270 = vpop.f32.mrb[0].mxu0
    %v4271 = vadd.f32 0.0, %v4270
    %v4272 = vpop.f32.mrb[0].mxu0
    %v4273 = vpop.f32.mrb[0].mxu0
    %v4274 = vadd.f32 0.0, %v4273
    %v4275 = vpop.f32.mrb[0].mxu0
    %4276 = vdwg.mxu0
    %4277 = vrot.lane.b32.xlu0 %v3436, 40
    %v4278 = vpop.permute.xlu0 %4277
    %v4281 = vsel %vm670, %v4039, 0
    %4283 = vmatprep.subr.bf16.mxu0 0
    %4284 = vmatpush1.bf16.msra.mxu0 %v4278
    %4285 = vmatprep.subr.bf16.mxu0 0
    %4286 = vmatpush1.bf16.msra.mxu0 0
    %4287 = vmatprep.subr.bf16.mxu0 0
    %4288 = vmatpush1.bf16.msra.mxu0 0
    %4289 = vmatprep.subr.bf16.mxu0 0
    %4290 = vmatpush1.bf16.msra.mxu0 0
    %4291 = vmatprep.subr.bf16.mxu0 0
    %4292 = vmatpush1.bf16.msra.mxu0 0
    %4293 = vmatprep.subr.bf16.mxu0 0
    %4294 = vmatpush1.bf16.msra.mxu0 0
    %4295 = vmatprep.subr.bf16.mxu0 0
    %4296 = vmatpush1.bf16.msra.mxu0 0
    %4297 = vmatprep.subr.bf16.mxu0 0
    %4298 = vmatpush1.bf16.msra.mxu0 0
    %4299 = vmatprep.subr.bf16.mxu0 0
    %4300 = vmatpush1.bf16.msra.mxu0 0
    %4301 = vmatprep.subr.bf16.mxu0 0
    %4302 = vmatpush1.bf16.msra.mxu0 0
    %4303 = vmatprep.subr.bf16.mxu0 0
    %4304 = vmatpush1.bf16.msra.mxu0 0
    %4305 = vmatprep.subr.bf16.mxu0 0
    %4306 = vmatpush1.bf16.msra.mxu0 0
    %4307 = vmatprep.subr.bf16.mxu0 0
    %4308 = vmatpush1.bf16.msra.mxu0 0
    %4309 = vmatprep.subr.bf16.mxu0 0
    %4310 = vmatpush1.bf16.msra.mxu0 0
    %4311 = vmatprep.subr.bf16.mxu0 0
    %4312 = vmatpush1.bf16.msra.mxu0 0
    %4313 = vmatprep.subr.bf16.mxu0 0
    %4314 = vmatpush1.bf16.msra.mxu0 0
    %4315 = vmatprep.mubr.bf16.mxu0 0
    %4316 = vmatmul.mubr.bf16.gmra.mrb[0].mxu0 %v4281
    %v4317 = vpop.f32.mrb[0].mxu0
    %v4318 = vadd.f32 0.0, %v4317
    %v4319 = vpop.f32.mrb[0].mxu0
    %v4320 = vpop.f32.mrb[0].mxu0
    %v4321 = vadd.f32 0.0, %v4320
    %v4322 = vpop.f32.mrb[0].mxu0
    %4323 = vdwg.mxu0
    %4324 = vrot.lane.b32.xlu0 %v3437, 40
    %v4325 = vpop.permute.xlu0 %4324
    %v4328 = vsel %vm670, %v4040, 0
    %4330 = vmatprep.subr.bf16.mxu0 0
    %4331 = vmatpush1.bf16.msra.mxu0 %v4325
    %4332 = vmatprep.subr.bf16.mxu0 0
    %4333 = vmatpush1.bf16.msra.mxu0 0
    %4334 = vmatprep.subr.bf16.mxu0 0
    %4335 = vmatpush1.bf16.msra.mxu0 0
    %4336 = vmatprep.subr.bf16.mxu0 0
    %4337 = vmatpush1.bf16.msra.mxu0 0
    %4338 = vmatprep.subr.bf16.mxu0 0
    %4339 = vmatpush1.bf16.msra.mxu0 0
    %4340 = vmatprep.subr.bf16.mxu0 0
    %4341 = vmatpush1.bf16.msra.mxu0 0
    %4342 = vmatprep.subr.bf16.mxu0 0
    %4343 = vmatpush1.bf16.msra.mxu0 0
    %4344 = vmatprep.subr.bf16.mxu0 0
    %4345 = vmatpush1.bf16.msra.mxu0 0
    %4346 = vmatprep.subr.bf16.mxu0 0
    %4347 = vmatpush1.bf16.msra.mxu0 0
    %4348 = vmatprep.subr.bf16.mxu0 0
    %4349 = vmatpush1.bf16.msra.mxu0 0
    %4350 = vmatprep.subr.bf16.mxu0 0
    %4351 = vmatpush1.bf16.msra.mxu0 0
    %4352 = vmatprep.subr.bf16.mxu0 0
    %4353 = vmatpush1.bf16.msra.mxu0 0
    %4354 = vmatprep.subr.bf16.mxu0 0
    %4355 = vmatpush1.bf16.msra.mxu0 0
    %4356 = vmatprep.subr.bf16.mxu0 0
    %4357 = vmatpush1.bf16.msra.mxu0 0
    %4358 = vmatprep.subr.bf16.mxu0 0
    %4359 = vmatpush1.bf16.msra.mxu0 0
    %4360 = vmatprep.subr.bf16.mxu0 0
    %4361 = vmatpush1.bf16.msra.mxu0 0
    %4362 = vmatprep.mubr.bf16.mxu0 0
    %4363 = vmatmul.mubr.bf16.gmra.mrb[0].mxu0 %v4328
    %v4364 = vpop.f32.mrb[0].mxu0
    %v4365 = vadd.f32 0.0, %v4364
    %v4366 = vpop.f32.mrb[0].mxu0
    %v4367 = vpop.f32.mrb[0].mxu0
    %v4368 = vadd.f32 0.0, %v4367
    %v4369 = vpop.f32.mrb[0].mxu0
    %4370 = vdwg.mxu0
    %4371 = vrot.lane.b32.xlu0 %v3438, 40
    %v4372 = vpop.permute.xlu0 %4371
    %v4375 = vsel %vm670, %v4041, 0
    %4377 = vmatprep.subr.bf16.mxu0 0
    %4378 = vmatpush1.bf16.msra.mxu0 %v4372
    %4379 = vmatprep.subr.bf16.mxu0 0
    %4380 = vmatpush1.bf16.msra.mxu0 0
    %4381 = vmatprep.subr.bf16.mxu0 0
    %4382 = vmatpush1.bf16.msra.mxu0 0
    %4383 = vmatprep.subr.bf16.mxu0 0
    %4384 = vmatpush1.bf16.msra.mxu0 0
    %4385 = vmatprep.subr.bf16.mxu0 0
    %4386 = vmatpush1.bf16.msra.mxu0 0
    %4387 = vmatprep.subr.bf16.mxu0 0
    %4388 = vmatpush1.bf16.msra.mxu0 0
    %4389 = vmatprep.subr.bf16.mxu0 0
    %4390 = vmatpush1.bf16.msra.mxu0 0
    %4391 = vmatprep.subr.bf16.mxu0 0
    %4392 = vmatpush1.bf16.msra.mxu0 0
    %4393 = vmatprep.subr.bf16.mxu0 0
    %4394 = vmatpush1.bf16.msra.mxu0 0
    %4395 = vmatprep.subr.bf16.mxu0 0
    %4396 = vmatpush1.bf16.msra.mxu0 0
    %4397 = vmatprep.subr.bf16.mxu0 0
    %4398 = vmatpush1.bf16.msra.mxu0 0
    %4399 = vmatprep.subr.bf16.mxu0 0
    %4400 = vmatpush1.bf16.msra.mxu0 0
    %4401 = vmatprep.subr.bf16.mxu0 0
    %4402 = vmatpush1.bf16.msra.mxu0 0
    %4403 = vmatprep.subr.bf16.mxu0 0
    %4404 = vmatpush1.bf16.msra.mxu0 0
    %4405 = vmatprep.subr.bf16.mxu0 0
    %4406 = vmatpush1.bf16.msra.mxu0 0
    %4407 = vmatprep.subr.bf16.mxu0 0
    %4408 = vmatpush1.bf16.msra.mxu0 0
    %4409 = vmatprep.mubr.bf16.mxu0 0
    %4410 = vmatmul.mubr.bf16.gmra.mrb[0].mxu0 %v4375
    %v4411 = vpop.f32.mrb[0].mxu0
    %v4412 = vadd.f32 0.0, %v4411
    %v4413 = vpop.f32.mrb[0].mxu0
    %v4414 = vpop.f32.mrb[0].mxu0
    %v4415 = vadd.f32 0.0, %v4414
    %v4416 = vpop.f32.mrb[0].mxu0
    %4417 = vdwg.mxu0
    %4434 = vrot.lane.b32.xlu0 %v4083, 24
    %v4435 = vpop.permute.xlu0 %4434
    %4436 = vrot.lane.b32.xlu0 %v4086, 24
    %v4437 = vpop.permute.xlu0 %4436
    %4438 = vrot.lane.b32.xlu0 %v4130, 24
    %v4439 = vpop.permute.xlu0 %4438
    %4440 = vrot.lane.b32.xlu0 %v4133, 24
    %v4441 = vpop.permute.xlu0 %4440
    %4442 = vrot.lane.b32.xlu0 %v4177, 24
    %v4443 = vpop.permute.xlu0 %4442
    %4444 = vrot.lane.b32.xlu0 %v4180, 24
    %v4445 = vpop.permute.xlu0 %4444
    %4446 = vrot.lane.b32.xlu0 %v4224, 24
    %v4447 = vpop.permute.xlu0 %4446
    %4448 = vrot.lane.b32.xlu0 %v4227, 24
    %v4449 = vpop.permute.xlu0 %4448
    %4450 = vrot.lane.b32.xlu0 %v4271, 24
    %v4451 = vpop.permute.xlu0 %4450
    %4452 = vrot.lane.b32.xlu0 %v4274, 24
    %v4453 = vpop.permute.xlu0 %4452
    %4454 = vrot.lane.b32.xlu0 %v4318, 24
    %v4455 = vpop.permute.xlu0 %4454
    %4456 = vrot.lane.b32.xlu0 %v4321, 24
    %v4457 = vpop.permute.xlu0 %4456
    %4458 = vrot.lane.b32.xlu0 %v4365, 24
    %v4459 = vpop.permute.xlu0 %4458
    %4460 = vrot.lane.b32.xlu0 %v4368, 24
    %v4461 = vpop.permute.xlu0 %4460
    %4462 = vrot.lane.b32.xlu0 %v4412, 24
    %v4463 = vpop.permute.xlu0 %4462
    %4464 = vrot.lane.b32.xlu0 %v4415, 24
    %v4465 = vpop.permute.xlu0 %4464
    %vm4482 = vcmask 261312
    %4483 = vst.msk [vmem:[#allocation3] sm:$0xff] %vm4482, %v4435
    %4484 = vst.msk [vmem:[#allocation3 + $0x8] sm:$0xff] %vm4482, %v4437
    %4485 = vst.msk [vmem:[#allocation3 + $0x10] sm:$0xff] %vm4482, %v4439
    %4486 = vst.msk [vmem:[#allocation3 + $0x18] sm:$0xff] %vm4482, %v4441
    %4487 = vst.msk [vmem:[#allocation3 + $0x20] sm:$0xff] %vm4482, %v4443
    %4488 = vst.msk [vmem:[#allocation3 + $0x28] sm:$0xff] %vm4482, %v4445
    %4489 = vst.msk [vmem:[#allocation3 + $0x30] sm:$0xff] %vm4482, %v4447
    %4490 = vst.msk [vmem:[#allocation3 + $0x38] sm:$0xff] %vm4482, %v4449
    %4491 = vst.msk [vmem:[#allocation3 + $0x40] sm:$0xff] %vm4482, %v4451
    %4492 = vst.msk [vmem:[#allocation3 + $0x48] sm:$0xff] %vm4482, %v4453
    %4493 = vst.msk [vmem:[#allocation3 + $0x50] sm:$0xff] %vm4482, %v4455
    %4494 = vst.msk [vmem:[#allocation3 + $0x58] sm:$0xff] %vm4482, %v4457
    %4495 = vst.msk [vmem:[#allocation3 + $0x60] sm:$0xff] %vm4482, %v4459
    %4496 = vst.msk [vmem:[#allocation3 + $0x68] sm:$0xff] %vm4482, %v4461
    %4497 = vst.msk [vmem:[#allocation3 + $0x70] sm:$0xff] %vm4482, %v4463
    %4498 = vst.msk [vmem:[#allocation3 + $0x78] sm:$0xff] %vm4482, %v4465
    %v4499 = vld [vmem:[#allocation3] sm:$0xff]
    %v4500 = vld [vmem:[#allocation3 + $0x8] sm:$0xff]
    %v4501 = vld [vmem:[#allocation3 + $0x10] sm:$0xff]
    %v4502 = vld [vmem:[#allocation3 + $0x18] sm:$0xff]
    %v4503 = vld [vmem:[#allocation3 + $0x20] sm:$0xff]
    %v4504 = vld [vmem:[#allocation3 + $0x28] sm:$0xff]
    %v4505 = vld [vmem:[#allocation3 + $0x30] sm:$0xff]
    %v4506 = vld [vmem:[#allocation3 + $0x38] sm:$0xff]
    %v4507 = vld [vmem:[#allocation3 + $0x40] sm:$0xff]
    %v4508 = vld [vmem:[#allocation3 + $0x48] sm:$0xff]
    %v4509 = vld [vmem:[#allocation3 + $0x50] sm:$0xff]
    %v4510 = vld [vmem:[#allocation3 + $0x58] sm:$0xff]
    %v4511 = vld [vmem:[#allocation3 + $0x60] sm:$0xff]
    %v4512 = vld [vmem:[#allocation3 + $0x68] sm:$0xff]
    %v4513 = vld [vmem:[#allocation3 + $0x70] sm:$0xff]
    %v4514 = vld [vmem:[#allocation3 + $0x78] sm:$0xff]
    %v4515 = vpack.c.bf16 %v4500, %v4499
    %v4516 = vpack.c.bf16 %v4502, %v4501
    %v4517 = vpack.c.bf16 %v4504, %v4503
    %v4518 = vpack.c.bf16 %v4506, %v4505
    %v4519 = vpack.c.bf16 %v4508, %v4507
    %v4520 = vpack.c.bf16 %v4510, %v4509
    %v4521 = vpack.c.bf16 %v4512, %v4511
    %v4522 = vpack.c.bf16 %v4514, %v4513
    %v4523 = vld [vmem:[%s3] sm:$0xf]
    %v4524 = vld [vmem:[%s3 + $0x4] sm:$0xf]
    %v4525 = vld [vmem:[%s3 + $0x8] sm:$0xf]
    %v4526 = vld [vmem:[%s3 + $0xc] sm:$0xf]
    %v4527 = vld [vmem:[%s4] sm:$0x1]
    %v4529 = vlaneseq
    %v4530 = vshrl.u32 %v4529, 7
    %v4531 = vsub.s32 0, %v4530
    %v4532 = vrot.slane %v4527, %v4531
    %v4538 = vunpack.c.l.b16 %v4523
    %v4539 = vunpack.c.l.b16 %v4524
    %v4540 = vunpack.c.l.b16 %v4525
    %v4541 = vunpack.c.l.b16 %v4526
    %v4542 = vpack.c.b16 %v4539, %v4538
    %v4543 = vpack.c.b16 %v4541, %v4540
    %v4547 = vsel %vm104, %v4515, 0
    %v4550 = vsel %vm104, %v4516, 0
    %v4553 = vsel %vm104, %v4517, 0
    %v4556 = vsel %vm104, %v4518, 0
    %v4559 = vsel %vm104, %v4519, 0
    %v4562 = vsel %vm104, %v4520, 0
    %v4565 = vsel %vm104, %v4521, 0
    %v4568 = vsel %vm104, %v4522, 0
    %4570 = vmatprep.subr.bf16.mxu0 0
    %4571 = vmatpush1.bf16.msra.mxu0 %v4542
    %4572 = vmatprep.subr.bf16.mxu0 0
    %4573 = vmatpush1.bf16.msra.mxu0 %v4543
    %4574 = vmatprep.subr.bf16.mxu0 0
    %4575 = vmatpush1.bf16.msra.mxu0 0
    %4576 = vmatprep.subr.bf16.mxu0 0
    %4577 = vmatpush1.bf16.msra.mxu0 0
    %4578 = vmatprep.subr.bf16.mxu0 0
    %4579 = vmatpush1.bf16.msra.mxu0 0
    %4580 = vmatprep.subr.bf16.mxu0 0
    %4581 = vmatpush1.bf16.msra.mxu0 0
    %4582 = vmatprep.subr.bf16.mxu0 0
    %4583 = vmatpush1.bf16.msra.mxu0 0
    %4584 = vmatprep.subr.bf16.mxu0 0
    %4585 = vmatpush1.bf16.msra.mxu0 0
    %4586 = vmatprep.subr.bf16.mxu0 0
    %4587 = vmatpush1.bf16.msra.mxu0 0
    %4588 = vmatprep.subr.bf16.mxu0 0
    %4589 = vmatpush1.bf16.msra.mxu0 0
    %4590 = vmatprep.subr.bf16.mxu0 0
    %4591 = vmatpush1.bf16.msra.mxu0 0
    %4592 = vmatprep.subr.bf16.mxu0 0
    %4593 = vmatpush1.bf16.msra.mxu0 0
    %4594 = vmatprep.subr.bf16.mxu0 0
    %4595 = vmatpush1.bf16.msra.mxu0 0
    %4596 = vmatprep.subr.bf16.mxu0 0
    %4597 = vmatpush1.bf16.msra.mxu0 0
    %4598 = vmatprep.subr.bf16.mxu0 0
    %4599 = vmatpush1.bf16.msra.mxu0 0
    %4600 = vmatprep.subr.bf16.mxu0 0
    %4601 = vmatpush1.bf16.msra.mxu0 0
    %4602 = vmatprep.mubr.bf16.mxu0 0
    %4603 = vmatmul.mubr.bf16.gmra.mrb[0].mxu0 %v4547
    %v4604 = vpop.f32.mrb[0].mxu0
    %v4605 = vadd.f32 %v4532, %v4604
    %v4606 = vpop.f32.mrb[0].mxu0
    %v4607 = vpop.f32.mrb[0].mxu0
    %v4608 = vadd.f32 %v4532, %v4607
    %v4609 = vpop.f32.mrb[0].mxu0
    %4610 = vmatprep.mubr.bf16.mxu0 0
    %4611 = vmatmul.mubr.bf16.gmra.mrb[0].mxu0 %v4550
    %v4612 = vpop.f32.mrb[0].mxu0
    %v4613 = vadd.f32 %v4532, %v4612
    %v4614 = vpop.f32.mrb[0].mxu0
    %v4615 = vpop.f32.mrb[0].mxu0
    %v4616 = vadd.f32 %v4532, %v4615
    %v4617 = vpop.f32.mrb[0].mxu0
    %4618 = vmatprep.mubr.bf16.mxu0 0
    %4619 = vmatmul.mubr.bf16.gmra.mrb[0].mxu0 %v4553
    %v4620 = vpop.f32.mrb[0].mxu0
    %v4621 = vadd.f32 %v4532, %v4620
    %v4622 = vpop.f32.mrb[0].mxu0
    %v4623 = vpop.f32.mrb[0].mxu0
    %v4624 = vadd.f32 %v4532, %v4623
    %v4625 = vpop.f32.mrb[0].mxu0
    %4626 = vmatprep.mubr.bf16.mxu0 0
    %4627 = vmatmul.mubr.bf16.gmra.mrb[0].mxu0 %v4556
    %v4628 = vpop.f32.mrb[0].mxu0
    %v4629 = vadd.f32 %v4532, %v4628
    %v4630 = vpop.f32.mrb[0].mxu0
    %v4631 = vpop.f32.mrb[0].mxu0
    %v4632 = vadd.f32 %v4532, %v4631
    %v4633 = vpop.f32.mrb[0].mxu0
    %4634 = vmatprep.mubr.bf16.mxu0 0
    %4635 = vmatmul.mubr.bf16.gmra.mrb[0].mxu0 %v4559
    %v4636 = vpop.f32.mrb[0].mxu0
    %v4637 = vadd.f32 %v4532, %v4636
    %v4638 = vpop.f32.mrb[0].mxu0
    %v4639 = vpop.f32.mrb[0].mxu0
    %v4640 = vadd.f32 %v4532, %v4639
    %v4641 = vpop.f32.mrb[0].mxu0
    %4642 = vmatprep.mubr.bf16.mxu0 0
    %4643 = vmatmul.mubr.bf16.gmra.mrb[0].mxu0 %v4562
    %v4644 = vpop.f32.mrb[0].mxu0
    %v4645 = vadd.f32 %v4532, %v4644
    %v4646 = vpop.f32.mrb[0].mxu0
    %v4647 = vpop.f32.mrb[0].mxu0
    %v4648 = vadd.f32 %v4532, %v4647
    %v4649 = vpop.f32.mrb[0].mxu0
    %4650 = vmatprep.mubr.bf16.mxu0 0
    %4651 = vmatmul.mubr.bf16.gmra.mrb[0].mxu0 %v4565
    %v4652 = vpop.f32.mrb[0].mxu0
    %v4653 = vadd.f32 %v4532, %v4652
    %v4654 = vpop.f32.mrb[0].mxu0
    %v4655 = vpop.f32.mrb[0].mxu0
    %v4656 = vadd.f32 %v4532, %v4655
    %v4657 = vpop.f32.mrb[0].mxu0
    %4658 = vmatprep.mubr.bf16.mxu0 0
    %4659 = vmatmul.mubr.bf16.gmra.mrb[0].mxu0 %v4568
    %v4660 = vpop.f32.mrb[0].mxu0
    %v4661 = vadd.f32 %v4532, %v4660
    %v4662 = vpop.f32.mrb[0].mxu0
    %v4663 = vpop.f32.mrb[0].mxu0
    %v4664 = vadd.f32 %v4532, %v4663
    %v4665 = vpop.f32.mrb[0].mxu0
    %4666 = vdwg.mxu0
    %4667 = vst [vmem:[#allocation4] sm:$0xff] %v4605
    %4668 = vst [vmem:[#allocation4 + $0x8] sm:$0xff] %v4608
    %4669 = vst [vmem:[#allocation4 + $0x10] sm:$0xff] %v4613
    %4670 = vst [vmem:[#allocation4 + $0x18] sm:$0xff] %v4616
    %4671 = vst [vmem:[#allocation4 + $0x20] sm:$0xff] %v4621
    %4672 = vst [vmem:[#allocation4 + $0x28] sm:$0xff] %v4624
    %4673 = vst [vmem:[#allocation4 + $0x30] sm:$0xff] %v4629
    %4674 = vst [vmem:[#allocation4 + $0x38] sm:$0xff] %v4632
    %4675 = vst [vmem:[#allocation4 + $0x40] sm:$0xff] %v4637
    %4676 = vst [vmem:[#allocation4 + $0x48] sm:$0xff] %v4640
    %4677 = vst [vmem:[#allocation4 + $0x50] sm:$0xff] %v4645
    %4678 = vst [vmem:[#allocation4 + $0x58] sm:$0xff] %v4648
    %4679 = vst [vmem:[#allocation4 + $0x60] sm:$0xff] %v4653
    %4680 = vst [vmem:[#allocation4 + $0x68] sm:$0xff] %v4656
    %4681 = vst [vmem:[#allocation4 + $0x70] sm:$0xff] %v4661
    %4682 = vst [vmem:[#allocation4 + $0x78] sm:$0xff] %v4664
    // Predicated region
    $region26: #{tpu_custom_call.1} parent=1 // pred_check
      _
    $region27: #{tpu_custom_call.1} parent=1 // pred_check_branch
      %4684 = sbr.rel (0) target = $region29
    $region28: #{tpu_custom_call.1} parent=1 // pred_region
      %s4686 = ssub.s32 2048, 2048
      %4687 = vsyncadd [#allocation5], %s4686
      %s4688 = sshll.u32 [#allocation4], 4
      %s4689 = int_to_ptr.vmem [resolvable:$true] %s4688
      %4694 = dma.vmem_to_hbm [thread:$0]  %s4689, 2048, %s6, [#allocation5], 128, 128, 8
    $region29: #{tpu_custom_call.1} parent=1 // pred_fallthru
      _
    // Predicated region
    $region30: #{tpu_custom_call.1} parent=1 // pred_check
      _
    $region31: #{tpu_custom_call.1} parent=1 // pred_check_branch
      %4696 = sbr.rel (0) target = $region33
    $region32: #{tpu_custom_call.1} parent=1 // pred_region
      %4697 = dma.done [#allocation5], 2048
    $region33: #{tpu_custom_call.1} parent=1 // pred_fallthru
      _
    %4698 = vsyncpa [#allocation5], 1

</llo_original>
